<compile_context>
chip_gen: v7x
topology: tpu7x:2x2x1
jax: 0.10.0
libtpu: 0.0.40
codegen_flags: <defaults>
</compile_context>

<pallas_src>
import jax
import jax.numpy as jnp
from jax import lax
from jax.experimental import pallas as pl
from jax.experimental.pallas import tpu as pltpu


# ----------------------------------------------------------------------------
# In-kernel helpers
# ----------------------------------------------------------------------------
def _lstm_gates(gates, c_prev, g_mask, H):
    """Lane-dense LSTM gate math.

    gates:  (B, 4H) fp32 pre-activations, PyTorch gate order i, f, g, o.
    c_prev: (B, H)  fp32 cell state.
    g_mask: (B, 4H) bool, True on the `g` (tanh) quarter of the lanes.
    """
    # Apply both nonlinearities on the full 128/256-lane tile, select with the lane mask.
    act = jnp.where(g_mask, jnp.tanh(gates), jax.nn.sigmoid(gates))
    i_g = act[:, 0 * H:1 * H]
    f_g = act[:, 1 * H:2 * H]
    g_g = act[:, 2 * H:3 * H]
    o_g = act[:, 3 * H:4 * H]
    c_new = f_g * c_prev + i_g * g_g
    h_new = o_g * jnp.tanh(c_new)
    return h_new, c_new


# ----------------------------------------------------------------------------
# Fused Pallas kernel
# ----------------------------------------------------------------------------
def _lstm_encoder_kernel(
    x_ref,                       # (T*B, E)   bf16, time-major flattened input
    w0_ref, wh0_ref, b0_ref,     # layer 0:  (E, 4H) bf16, (H, 4H) bf16, (1, 4H) f32
    w1_ref, wh1_ref, b1_ref,     # layer 1:  (H, 4H) bf16, (H, 4H) bf16, (1, 4H) f32
    wd_ref, whd_ref, bd_ref,     # disc LSTM:(H, 4Hd) bf16, (Hd, 4Hd) bf16, (1, 4Hd) f32
    wfc_ref, bfc_ref,            # FC:       (Hd, O) f32, (1, O) f32
    out_ref,                     # (T, B, H) f32  layer-1 hidden sequence (time-major)
    y1_ref,                      # (B, O)    f32  log-probabilities
):
    f32 = jnp.float32
    bf16 = jnp.bfloat16
    T, B, H = out_ref.shape
    Hd = whd_ref.shape[0]

    # Load all weights once (hoisted out of the unrolled time loop).
    w0 = w0_ref[...]
    wh0 = wh0_ref[...]
    b0 = b0_ref[...]
    w1 = w1_ref[...]
    wh1 = wh1_ref[...]
    b1 = b1_ref[...]
    wd = wd_ref[...]
    whd = whd_ref[...]
    bd = bd_ref[...]

    # Hoisted layer-0 input projection: one big MXU matmul + one bias add.
    gx0 = jnp.dot(x_ref[...], w0, preferred_element_type=f32) + b0     # (T*B, 4H) f32

    # Lane masks for the tanh ('g') quarter, hoisted out of the loop.
    lane_h = lax.broadcasted_iota(jnp.int32, (B, 4 * H), 1)
    gmask_h = jnp.logical_and(lane_h >= 2 * H, lane_h < 3 * H)
    lane_d = lax.broadcasted_iota(jnp.int32, (B, 4 * Hd), 1)
    gmask_d = jnp.logical_and(lane_d >= 2 * Hd, lane_d < 3 * Hd)

    # Recurrence state (fp32).
    h0 = jnp.zeros((B, H), f32)
    c0 = jnp.zeros((B, H), f32)
    h1 = jnp.zeros((B, H), f32)
    c1 = jnp.zeros((B, H), f32)
    hd = jnp.zeros((B, Hd), f32)
    cd = jnp.zeros((B, Hd), f32)

    # Fully unrolled time loop (T static & small): the per-step critical path is only
    # one (B,H)@(H,4H) bf16 dot + elementwise per layer.
    for t in range(T):
        # ---- encoder layer 0 ----
        g0 = gx0[t * B:(t + 1) * B, :] + jnp.dot(
            h0.astype(bf16), wh0, preferred_element_type=f32)
        h0, c0 = _lstm_gates(g0, c0, gmask_h, H)

        # ---- encoder layer 1 ----
        g1 = (jnp.dot(h0.astype(bf16), w1, preferred_element_type=f32) + b1
              + jnp.dot(h1.astype(bf16), wh1, preferred_element_type=f32))
        h1, c1 = _lstm_gates(g1, c1, gmask_h, H)
        out_ref[t] = h1

        # ---- discriminator LSTM (only final state is kept) ----
        gd = (jnp.dot(h1.astype(bf16), wd, preferred_element_type=f32) + bd
              + jnp.dot(hd.astype(bf16), whd, preferred_element_type=f32))
        hd, cd = _lstm_gates(gd, cd, gmask_d, Hd)

    # ---- FC + stable log_softmax on the final discriminator state ----
    logits = jnp.dot(hd, wfc_ref[...], preferred_element_type=f32) + bfc_ref[...]   # (B, O)
    m = jnp.max(logits, axis=-1, keepdims=True)
    z = logits - m
    lse = jnp.log(jnp.sum(jnp.exp(z), axis=-1, keepdims=True))
    y1_ref[...] = z - lse


# ----------------------------------------------------------------------------
# Parameter construction (deterministic, PyTorch-style uniform init)
# ----------------------------------------------------------------------------
def _uniform(key, shape, bound):
    return jax.random.uniform(
        key, shape, dtype=jnp.float32, minval=-bound, maxval=bound
    )


def _make_lstm_layer_params(key, in_dim, hid_dim):
    """Returns (w_ih_t[bf16], w_hh_t[bf16], b[f32]) with PyTorch LSTM shapes/init."""
    k = 1.0 / jnp.sqrt(jnp.float32(hid_dim))
    k0, k1, k2, k3 = jax.random.split(key, 4)
    w_ih = _uniform(k0, (4 * hid_dim, in_dim), k)   # PyTorch weight_ih_l*
    w_hh = _uniform(k1, (4 * hid_dim, hid_dim), k)  # PyTorch weight_hh_l*
    b_ih = _uniform(k2, (4 * hid_dim,), k)
    b_hh = _uniform(k3, (4 * hid_dim,), k)
    return (
        jnp.transpose(w_ih).astype(jnp.bfloat16),        # (in_dim, 4H)  bf16 for MXU
        jnp.transpose(w_hh).astype(jnp.bfloat16),        # (H, 4H)       bf16 for MXU
        (b_ih + b_hh).reshape(1, 4 * hid_dim),           # (1, 4H)       f32
    )


def make_lstm_encoder_params(key, emb_dim, hid_dim, output_dim, disc_hid=64):
    keys = jax.random.split(key, 5)
    kf = 1.0 / jnp.sqrt(jnp.float32(disc_hid))
    fc_w = _uniform(keys[3], (output_dim, disc_hid), kf)   # PyTorch Linear weight
    fc_b = _uniform(keys[4], (output_dim,), kf)
    return {
        "enc_l0": _make_lstm_layer_params(keys[0], emb_dim, hid_dim),
        "enc_l1": _make_lstm_layer_params(keys[1], hid_dim, hid_dim),
        "disc_lstm": _make_lstm_layer_params(keys[2], hid_dim, disc_hid),
        "fc_w_t": jnp.transpose(fc_w),                     # (disc_hid, output_dim) f32
        "fc_b": fc_b.reshape(1, output_dim),               # (1, output_dim)        f32
    }


# ----------------------------------------------------------------------------
# Forward pass (mirrors LSTMEncoder.forward) — single fused pallas_call
# ----------------------------------------------------------------------------
@jax.jit
def lstm_encoder_forward(params, x_btd, alpha=0.1):
    """x_btd: (B, T, emb_dim) batch-first, like nn.LSTM(batch_first=True).

    Returns:
      output: (B, T, hid_dim)   full hidden-state sequence of the 2-layer LSTM
      y1:     (B, output_dim)   discriminator log-probabilities
    """
    del alpha  # unused by the reference forward (gradient-reversal coeff, no-op here)

    B, T, E = x_btd.shape
    H = params["enc_l0"][1].shape[0]        # (H, 4H)
    Hd = params["disc_lstm"][1].shape[0]    # (Hd, 4Hd)
    O = params["fc_b"].shape[-1]

    # Pad batch to a multiple of 8 sublanes so all (B, ·) tiles are unmasked.
    B_pad = max(8, ((B + 7) // 8) * 8)
    x_p = jnp.pad(x_btd, ((0, B_pad - B), (0, 0), (0, 0)))

    # Time-major, flattened (T*B_pad, E), bf16 for the hoisted MXU projection.
    x_tb = jnp.transpose(x_p, (1, 0, 2)).reshape(T * B_pad, E).astype(jnp.bfloat16)

    w0, wh0, b0 = params["enc_l0"]
    w1, wh1, b1 = params["enc_l1"]
    wd, whd, bd = params["disc_lstm"]

    vmem = pl.BlockSpec(memory_space=pltpu.MemorySpace.VMEM)

    out_seq, y1 = pl.pallas_call(
        _lstm_encoder_kernel,
        out_shape=(
            jax.ShapeDtypeStruct((T, B_pad, H), jnp.float32),
            jax.ShapeDtypeStruct((B_pad, O), jnp.float32),
        ),
        in_specs=[vmem] * 12,
        out_specs=(vmem, vmem),
    )(x_tb, w0, wh0, b0, w1, wh1, b1, wd, whd, bd, params["fc_w_t"], params["fc_b"])

    output = jnp.transpose(out_seq[:, :B, :], (1, 0, 2))   # (B, T, H) batch-first
    return output, y1[:B]


# ----------------------------------------------------------------------------
# Main
# ----------------------------------------------------------------------------
if __name__ == "__main__":
    EMB_DIM = 32
    HID_DIM = 32
    OUTPUT_DIM = 2
    B, T = 4, 8

    root = jax.random.PRNGKey(0)
    k_params, k_x = jax.random.split(root)

    params = make_lstm_encoder_params(k_params, EMB_DIM, HID_DIM, OUTPUT_DIM)
    x = jax.random.normal(k_x, (B, T, EMB_DIM), dtype=jnp.float32)

    output, y1 = lstm_encoder_forward(params, x)
    jax.block_until_ready((output, y1))

    assert output.shape == (B, T, HID_DIM), output.shape
    assert y1.shape == (B, OUTPUT_DIM), y1.shape
    assert bool(jnp.all(jnp.isfinite(output))) and bool(jnp.all(jnp.isfinite(y1)))
    print("KERNEL_OK")
</pallas_src>

<mosaic_0001>
module attributes {stable_mosaic.version = 11 : i64} {
  func.func @_lstm_encoder_kernel(%arg0: memref<64x32xbf16, #tpu.memory_space<vmem>>, %arg1: memref<32x128xbf16, #tpu.memory_space<vmem>>, %arg2: memref<32x128xbf16, #tpu.memory_space<vmem>>, %arg3: memref<1x128xf32, #tpu.memory_space<vmem>>, %arg4: memref<32x128xbf16, #tpu.memory_space<vmem>>, %arg5: memref<32x128xbf16, #tpu.memory_space<vmem>>, %arg6: memref<1x128xf32, #tpu.memory_space<vmem>>, %arg7: memref<32x256xbf16, #tpu.memory_space<vmem>>, %arg8: memref<64x256xbf16, #tpu.memory_space<vmem>>, %arg9: memref<1x256xf32, #tpu.memory_space<vmem>>, %arg10: memref<64x2xf32, #tpu.memory_space<vmem>>, %arg11: memref<1x2xf32, #tpu.memory_space<vmem>>, %arg12: memref<8x8x32xf32, #tpu.memory_space<vmem>>, %arg13: memref<8x2xf32, #tpu.memory_space<vmem>>) attributes {dimension_semantics = [], scalar_prefetch = 0 : i64, scratch_operands = 0 : i64, tpu.core_type = #tpu.core_type<tc>} {
    %c0 = arith.constant 0 : index
    %c0_0 = arith.constant 0 : index
    %0 = vector.load %arg1[%c0, %c0_0] : memref<32x128xbf16, #tpu.memory_space<vmem>>, vector<32x128xbf16>
    %c0_1 = arith.constant 0 : index
    %c0_2 = arith.constant 0 : index
    %1 = vector.load %arg2[%c0_1, %c0_2] : memref<32x128xbf16, #tpu.memory_space<vmem>>, vector<32x128xbf16>
    %c0_3 = arith.constant 0 : index
    %c0_4 = arith.constant 0 : index
    %2 = vector.load %arg3[%c0_3, %c0_4] : memref<1x128xf32, #tpu.memory_space<vmem>>, vector<1x128xf32>
    %c0_5 = arith.constant 0 : index
    %c0_6 = arith.constant 0 : index
    %3 = vector.load %arg4[%c0_5, %c0_6] : memref<32x128xbf16, #tpu.memory_space<vmem>>, vector<32x128xbf16>
    %c0_7 = arith.constant 0 : index
    %c0_8 = arith.constant 0 : index
    %4 = vector.load %arg5[%c0_7, %c0_8] : memref<32x128xbf16, #tpu.memory_space<vmem>>, vector<32x128xbf16>
    %c0_9 = arith.constant 0 : index
    %c0_10 = arith.constant 0 : index
    %5 = vector.load %arg6[%c0_9, %c0_10] : memref<1x128xf32, #tpu.memory_space<vmem>>, vector<1x128xf32>
    %c0_11 = arith.constant 0 : index
    %c0_12 = arith.constant 0 : index
    %6 = vector.load %arg7[%c0_11, %c0_12] : memref<32x256xbf16, #tpu.memory_space<vmem>>, vector<32x256xbf16>
    %c0_13 = arith.constant 0 : index
    %c0_14 = arith.constant 0 : index
    %7 = vector.load %arg8[%c0_13, %c0_14] : memref<64x256xbf16, #tpu.memory_space<vmem>>, vector<64x256xbf16>
    %c0_15 = arith.constant 0 : index
    %c0_16 = arith.constant 0 : index
    %8 = vector.load %arg9[%c0_15, %c0_16] : memref<1x256xf32, #tpu.memory_space<vmem>>, vector<1x256xf32>
    %c0_17 = arith.constant 0 : index
    %c0_18 = arith.constant 0 : index
    %9 = vector.load %arg0[%c0_17, %c0_18] : memref<64x32xbf16, #tpu.memory_space<vmem>>, vector<64x32xbf16>
    %cst = arith.constant dense<0.000000e+00> : vector<64x128xf32>
    %10 = tpu.matmul %9, %0, %cst {dimension_numbers = #tpu.dot_dimension_numbers<[1], [0], [0], [1], [0, 0, 1, 1], [], []>} : vector<64x32xbf16>, vector<32x128xbf16>, vector<64x128xf32> -> vector<64x128xf32>
    %11 = vector.broadcast %2 : vector<1x128xf32> to vector<64x128xf32>
    %12 = arith.addf %10, %11 : vector<64x128xf32>
    %13 = tpu.iota {dimensions = array<i32: 1>} : vector<8x128xi32>
    %c64_i32 = arith.constant 64 : i32
    %14 = vector.broadcast %c64_i32 : i32 to vector<8x128xi32>
    %15 = arith.cmpi sge, %13, %14 : vector<8x128xi32>
    %c96_i32 = arith.constant 96 : i32
    %16 = vector.broadcast %c96_i32 : i32 to vector<8x128xi32>
    %17 = arith.cmpi slt, %13, %16 : vector<8x128xi32>
    %18 = arith.andi %15, %17 : vector<8x128xi1>
    %19 = tpu.iota {dimensions = array<i32: 1>} : vector<8x256xi32>
    %c128_i32 = arith.constant 128 : i32
    %20 = vector.broadcast %c128_i32 : i32 to vector<8x256xi32>
    %21 = arith.cmpi sge, %19, %20 : vector<8x256xi32>
    %c192_i32 = arith.constant 192 : i32
    %22 = vector.broadcast %c192_i32 : i32 to vector<8x256xi32>
    %23 = arith.cmpi slt, %19, %22 : vector<8x256xi32>
    %24 = arith.andi %21, %23 : vector<8x256xi1>
    %cst_19 = arith.constant 0.000000e+00 : f32
    %25 = vector.broadcast %cst_19 : f32 to vector<8x32xf32>
    %cst_20 = arith.constant 0.000000e+00 : f32
    %26 = vector.broadcast %cst_20 : f32 to vector<8x32xf32>
    %cst_21 = arith.constant 0.000000e+00 : f32
    %27 = vector.broadcast %cst_21 : f32 to vector<8x32xf32>
    %cst_22 = arith.constant 0.000000e+00 : f32
    %28 = vector.broadcast %cst_22 : f32 to vector<8x32xf32>
    %cst_23 = arith.constant 0.000000e+00 : f32
    %29 = vector.broadcast %cst_23 : f32 to vector<8x64xf32>
    %cst_24 = arith.constant 0.000000e+00 : f32
    %30 = vector.broadcast %cst_24 : f32 to vector<8x64xf32>
    %31 = vector.extract_strided_slice %12 {offsets = [0, 0], sizes = [8, 128], strides = [1, 1]} : vector<64x128xf32> to vector<8x128xf32>
    %32 = arith.truncf %25 : vector<8x32xf32> to vector<8x32xbf16>
    %cst_25 = arith.constant dense<0.000000e+00> : vector<8x128xf32>
    %33 = tpu.matmul %32, %1, %cst_25 {dimension_numbers = #tpu.dot_dimension_numbers<[1], [0], [0], [1], [0, 0, 1, 1], [], []>} : vector<8x32xbf16>, vector<32x128xbf16>, vector<8x128xf32> -> vector<8x128xf32>
    %34 = arith.addf %31, %33 : vector<8x128xf32>
    %35 = math.tanh %34 : vector<8x128xf32>
    %36 = arith.negf %34 : vector<8x128xf32>
    %37 = math.exp %36 : vector<8x128xf32>
    %cst_26 = arith.constant 1.000000e+00 : f32
    %38 = vector.broadcast %cst_26 : f32 to vector<8x128xf32>
    %39 = arith.addf %38, %37 : vector<8x128xf32>
    %40 = arith.divf %38, %39 : vector<8x128xf32>
    %41 = arith.select %18, %35, %40 : vector<8x128xi1>, vector<8x128xf32>
    %42 = vector.extract_strided_slice %41 {offsets = [0, 0], sizes = [8, 32], strides = [1, 1]} : vector<8x128xf32> to vector<8x32xf32>
    %43 = vector.extract_strided_slice %41 {offsets = [0, 32], sizes = [8, 32], strides = [1, 1]} : vector<8x128xf32> to vector<8x32xf32>
    %44 = vector.extract_strided_slice %41 {offsets = [0, 64], sizes = [8, 32], strides = [1, 1]} : vector<8x128xf32> to vector<8x32xf32>
    %45 = vector.extract_strided_slice %41 {offsets = [0, 96], sizes = [8, 32], strides = [1, 1]} : vector<8x128xf32> to vector<8x32xf32>
    %46 = arith.mulf %43, %26 : vector<8x32xf32>
    %47 = arith.mulf %42, %44 : vector<8x32xf32>
    %48 = arith.addf %46, %47 : vector<8x32xf32>
    %49 = math.tanh %48 : vector<8x32xf32>
    %50 = arith.mulf %45, %49 : vector<8x32xf32>
    %51 = arith.truncf %50 : vector<8x32xf32> to vector<8x32xbf16>
    %cst_27 = arith.constant dense<0.000000e+00> : vector<8x128xf32>
    %52 = tpu.matmul %51, %3, %cst_27 {dimension_numbers = #tpu.dot_dimension_numbers<[1], [0], [0], [1], [0, 0, 1, 1], [], []>} : vector<8x32xbf16>, vector<32x128xbf16>, vector<8x128xf32> -> vector<8x128xf32>
    %53 = vector.broadcast %5 : vector<1x128xf32> to vector<8x128xf32>
    %54 = arith.addf %52, %53 : vector<8x128xf32>
    %55 = arith.truncf %27 : vector<8x32xf32> to vector<8x32xbf16>
    %cst_28 = arith.constant dense<0.000000e+00> : vector<8x128xf32>
    %56 = tpu.matmul %55, %4, %cst_28 {dimension_numbers = #tpu.dot_dimension_numbers<[1], [0], [0], [1], [0, 0, 1, 1], [], []>} : vector<8x32xbf16>, vector<32x128xbf16>, vector<8x128xf32> -> vector<8x128xf32>
    %57 = arith.addf %54, %56 : vector<8x128xf32>
    %58 = math.tanh %57 : vector<8x128xf32>
    %59 = arith.negf %57 : vector<8x128xf32>
    %60 = math.exp %59 : vector<8x128xf32>
    %cst_29 = arith.constant 1.000000e+00 : f32
    %61 = vector.broadcast %cst_29 : f32 to vector<8x128xf32>
    %62 = arith.addf %61, %60 : vector<8x128xf32>
    %63 = arith.divf %61, %62 : vector<8x128xf32>
    %64 = arith.select %18, %58, %63 : vector<8x128xi1>, vector<8x128xf32>
    %65 = vector.extract_strided_slice %64 {offsets = [0, 0], sizes = [8, 32], strides = [1, 1]} : vector<8x128xf32> to vector<8x32xf32>
    %66 = vector.extract_strided_slice %64 {offsets = [0, 32], sizes = [8, 32], strides = [1, 1]} : vector<8x128xf32> to vector<8x32xf32>
    %67 = vector.extract_strided_slice %64 {offsets = [0, 64], sizes = [8, 32], strides = [1, 1]} : vector<8x128xf32> to vector<8x32xf32>
    %68 = vector.extract_strided_slice %64 {offsets = [0, 96], sizes = [8, 32], strides = [1, 1]} : vector<8x128xf32> to vector<8x32xf32>
    %69 = arith.mulf %66, %28 : vector<8x32xf32>
    %70 = arith.mulf %65, %67 : vector<8x32xf32>
    %71 = arith.addf %69, %70 : vector<8x32xf32>
    %72 = math.tanh %71 : vector<8x32xf32>
    %73 = arith.mulf %68, %72 : vector<8x32xf32>
    %c0_30 = arith.constant 0 : index
    %c0_31 = arith.constant 0 : index
    %c0_32 = arith.constant 0 : index
    %74 = vector.load %arg12[%c0_30, %c0_31, %c0_32] : memref<8x8x32xf32, #tpu.memory_space<vmem>>, vector<1x8x32xf32>
    %75 = vector.shape_cast %74 : vector<1x8x32xf32> to vector<8x32xf32>
    %76 = vector.shape_cast %73 : vector<8x32xf32> to vector<1x8x32xf32>
    tpu.vector_store %arg12[%c0_30, %c0_31, %c0_32], %76 {strides = array<i32>} : memref<8x8x32xf32, #tpu.memory_space<vmem>>, vector<1x8x32xf32>,
    %77 = arith.truncf %73 : vector<8x32xf32> to vector<8x32xbf16>
    %cst_33 = arith.constant dense<0.000000e+00> : vector<8x256xf32>
    %78 = tpu.matmul %77, %6, %cst_33 {dimension_numbers = #tpu.dot_dimension_numbers<[1], [0], [0], [1], [0, 0, 1, 1], [], []>} : vector<8x32xbf16>, vector<32x256xbf16>, vector<8x256xf32> -> vector<8x256xf32>
    %79 = vector.broadcast %8 : vector<1x256xf32> to vector<8x256xf32>
    %80 = arith.addf %78, %79 : vector<8x256xf32>
    %81 = arith.truncf %29 : vector<8x64xf32> to vector<8x64xbf16>
    %cst_34 = arith.constant dense<0.000000e+00> : vector<8x256xf32>
    %82 = tpu.matmul %81, %7, %cst_34 {dimension_numbers = #tpu.dot_dimension_numbers<[1], [0], [0], [1], [0, 0, 1, 1], [], []>} : vector<8x64xbf16>, vector<64x256xbf16>, vector<8x256xf32> -> vector<8x256xf32>
    %83 = arith.addf %80, %82 : vector<8x256xf32>
    %84 = math.tanh %83 : vector<8x256xf32>
    %85 = arith.negf %83 : vector<8x256xf32>
    %86 = math.exp %85 : vector<8x256xf32>
    %cst_35 = arith.constant 1.000000e+00 : f32
    %87 = vector.broadcast %cst_35 : f32 to vector<8x256xf32>
    %88 = arith.addf %87, %86 : vector<8x256xf32>
    %89 = arith.divf %87, %88 : vector<8x256xf32>
    %90 = arith.select %24, %84, %89 : vector<8x256xi1>, vector<8x256xf32>
    %91 = vector.extract_strided_slice %90 {offsets = [0, 0], sizes = [8, 64], strides = [1, 1]} : vector<8x256xf32> to vector<8x64xf32>
    %92 = vector.extract_strided_slice %90 {offsets = [0, 64], sizes = [8, 64], strides = [1, 1]} : vector<8x256xf32> to vector<8x64xf32>
    %93 = vector.extract_strided_slice %90 {offsets = [0, 128], sizes = [8, 64], strides = [1, 1]} : vector<8x256xf32> to vector<8x64xf32>
    %94 = vector.extract_strided_slice %90 {offsets = [0, 192], sizes = [8, 64], strides = [1, 1]} : vector<8x256xf32> to vector<8x64xf32>
    %95 = arith.mulf %92, %30 : vector<8x64xf32>
    %96 = arith.mulf %91, %93 : vector<8x64xf32>
    %97 = arith.addf %95, %96 : vector<8x64xf32>
    %98 = math.tanh %97 : vector<8x64xf32>
    %99 = arith.mulf %94, %98 : vector<8x64xf32>
    %100 = vector.extract_strided_slice %12 {offsets = [8, 0], sizes = [8, 128], strides = [1, 1]} : vector<64x128xf32> to vector<8x128xf32>
    %101 = arith.truncf %50 : vector<8x32xf32> to vector<8x32xbf16>
    %cst_36 = arith.constant dense<0.000000e+00> : vector<8x128xf32>
    %102 = tpu.matmul %101, %1, %cst_36 {dimension_numbers = #tpu.dot_dimension_numbers<[1], [0], [0], [1], [0, 0, 1, 1], [], []>} : vector<8x32xbf16>, vector<32x128xbf16>, vector<8x128xf32> -> vector<8x128xf32>
    %103 = arith.addf %100, %102 : vector<8x128xf32>
    %104 = math.tanh %103 : vector<8x128xf32>
    %105 = arith.negf %103 : vector<8x128xf32>
    %106 = math.exp %105 : vector<8x128xf32>
    %cst_37 = arith.constant 1.000000e+00 : f32
    %107 = vector.broadcast %cst_37 : f32 to vector<8x128xf32>
    %108 = arith.addf %107, %106 : vector<8x128xf32>
    %109 = arith.divf %107, %108 : vector<8x128xf32>
    %110 = arith.select %18, %104, %109 : vector<8x128xi1>, vector<8x128xf32>
    %111 = vector.extract_strided_slice %110 {offsets = [0, 0], sizes = [8, 32], strides = [1, 1]} : vector<8x128xf32> to vector<8x32xf32>
    %112 = vector.extract_strided_slice %110 {offsets = [0, 32], sizes = [8, 32], strides = [1, 1]} : vector<8x128xf32> to vector<8x32xf32>
    %113 = vector.extract_strided_slice %110 {offsets = [0, 64], sizes = [8, 32], strides = [1, 1]} : vector<8x128xf32> to vector<8x32xf32>
    %114 = vector.extract_strided_slice %110 {offsets = [0, 96], sizes = [8, 32], strides = [1, 1]} : vector<8x128xf32> to vector<8x32xf32>
    %115 = arith.mulf %112, %48 : vector<8x32xf32>
    %116 = arith.mulf %111, %113 : vector<8x32xf32>
    %117 = arith.addf %115, %116 : vector<8x32xf32>
    %118 = math.tanh %117 : vector<8x32xf32>
    %119 = arith.mulf %114, %118 : vector<8x32xf32>
    %120 = arith.truncf %119 : vector<8x32xf32> to vector<8x32xbf16>
    %cst_38 = arith.constant dense<0.000000e+00> : vector<8x128xf32>
    %121 = tpu.matmul %120, %3, %cst_38 {dimension_numbers = #tpu.dot_dimension_numbers<[1], [0], [0], [1], [0, 0, 1, 1], [], []>} : vector<8x32xbf16>, vector<32x128xbf16>, vector<8x128xf32> -> vector<8x128xf32>
    %122 = vector.broadcast %5 : vector<1x128xf32> to vector<8x128xf32>
    %123 = arith.addf %121, %122 : vector<8x128xf32>
    %124 = arith.truncf %73 : vector<8x32xf32> to vector<8x32xbf16>
    %cst_39 = arith.constant dense<0.000000e+00> : vector<8x128xf32>
    %125 = tpu.matmul %124, %4, %cst_39 {dimension_numbers = #tpu.dot_dimension_numbers<[1], [0], [0], [1], [0, 0, 1, 1], [], []>} : vector<8x32xbf16>, vector<32x128xbf16>, vector<8x128xf32> -> vector<8x128xf32>
    %126 = arith.addf %123, %125 : vector<8x128xf32>
    %127 = math.tanh %126 : vector<8x128xf32>
    %128 = arith.negf %126 : vector<8x128xf32>
    %129 = math.exp %128 : vector<8x128xf32>
    %cst_40 = arith.constant 1.000000e+00 : f32
    %130 = vector.broadcast %cst_40 : f32 to vector<8x128xf32>
    %131 = arith.addf %130, %129 : vector<8x128xf32>
    %132 = arith.divf %130, %131 : vector<8x128xf32>
    %133 = arith.select %18, %127, %132 : vector<8x128xi1>, vector<8x128xf32>
    %134 = vector.extract_strided_slice %133 {offsets = [0, 0], sizes = [8, 32], strides = [1, 1]} : vector<8x128xf32> to vector<8x32xf32>
    %135 = vector.extract_strided_slice %133 {offsets = [0, 32], sizes = [8, 32], strides = [1, 1]} : vector<8x128xf32> to vector<8x32xf32>
    %136 = vector.extract_strided_slice %133 {offsets = [0, 64], sizes = [8, 32], strides = [1, 1]} : vector<8x128xf32> to vector<8x32xf32>
    %137 = vector.extract_strided_slice %133 {offsets = [0, 96], sizes = [8, 32], strides = [1, 1]} : vector<8x128xf32> to vector<8x32xf32>
    %138 = arith.mulf %135, %71 : vector<8x32xf32>
    %139 = arith.mulf %134, %136 : vector<8x32xf32>
    %140 = arith.addf %138, %139 : vector<8x32xf32>
    %141 = math.tanh %140 : vector<8x32xf32>
    %142 = arith.mulf %137, %141 : vector<8x32xf32>
    %c1 = arith.constant 1 : index
    %c0_41 = arith.constant 0 : index
    %c0_42 = arith.constant 0 : index
    %143 = vector.load %arg12[%c1, %c0_41, %c0_42] : memref<8x8x32xf32, #tpu.memory_space<vmem>>, vector<1x8x32xf32>
    %144 = vector.shape_cast %143 : vector<1x8x32xf32> to vector<8x32xf32>
    %145 = vector.shape_cast %142 : vector<8x32xf32> to vector<1x8x32xf32>
    tpu.vector_store %arg12[%c1, %c0_41, %c0_42], %145 {strides = array<i32>} : memref<8x8x32xf32, #tpu.memory_space<vmem>>, vector<1x8x32xf32>,
    %146 = arith.truncf %142 : vector<8x32xf32> to vector<8x32xbf16>
    %cst_43 = arith.constant dense<0.000000e+00> : vector<8x256xf32>
    %147 = tpu.matmul %146, %6, %cst_43 {dimension_numbers = #tpu.dot_dimension_numbers<[1], [0], [0], [1], [0, 0, 1, 1], [], []>} : vector<8x32xbf16>, vector<32x256xbf16>, vector<8x256xf32> -> vector<8x256xf32>
    %148 = vector.broadcast %8 : vector<1x256xf32> to vector<8x256xf32>
    %149 = arith.addf %147, %148 : vector<8x256xf32>
    %150 = arith.truncf %99 : vector<8x64xf32> to vector<8x64xbf16>
    %cst_44 = arith.constant dense<0.000000e+00> : vector<8x256xf32>
    %151 = tpu.matmul %150, %7, %cst_44 {dimension_numbers = #tpu.dot_dimension_numbers<[1], [0], [0], [1], [0, 0, 1, 1], [], []>} : vector<8x64xbf16>, vector<64x256xbf16>, vector<8x256xf32> -> vector<8x256xf32>
    %152 = arith.addf %149, %151 : vector<8x256xf32>
    %153 = math.tanh %152 : vector<8x256xf32>
    %154 = arith.negf %152 : vector<8x256xf32>
    %155 = math.exp %154 : vector<8x256xf32>
    %cst_45 = arith.constant 1.000000e+00 : f32
    %156 = vector.broadcast %cst_45 : f32 to vector<8x256xf32>
    %157 = arith.addf %156, %155 : vector<8x256xf32>
    %158 = arith.divf %156, %157 : vector<8x256xf32>
    %159 = arith.select %24, %153, %158 : vector<8x256xi1>, vector<8x256xf32>
    %160 = vector.extract_strided_slice %159 {offsets = [0, 0], sizes = [8, 64], strides = [1, 1]} : vector<8x256xf32> to vector<8x64xf32>
    %161 = vector.extract_strided_slice %159 {offsets = [0, 64], sizes = [8, 64], strides = [1, 1]} : vector<8x256xf32> to vector<8x64xf32>
    %162 = vector.extract_strided_slice %159 {offsets = [0, 128], sizes = [8, 64], strides = [1, 1]} : vector<8x256xf32> to vector<8x64xf32>
    %163 = vector.extract_strided_slice %159 {offsets = [0, 192], sizes = [8, 64], strides = [1, 1]} : vector<8x256xf32> to vector<8x64xf32>
    %164 = arith.mulf %161, %97 : vector<8x64xf32>
    %165 = arith.mulf %160, %162 : vector<8x64xf32>
    %166 = arith.addf %164, %165 : vector<8x64xf32>
    %167 = math.tanh %166 : vector<8x64xf32>
    %168 = arith.mulf %163, %167 : vector<8x64xf32>
    %169 = vector.extract_strided_slice %12 {offsets = [16, 0], sizes = [8, 128], strides = [1, 1]} : vector<64x128xf32> to vector<8x128xf32>
    %170 = arith.truncf %119 : vector<8x32xf32> to vector<8x32xbf16>
    %cst_46 = arith.constant dense<0.000000e+00> : vector<8x128xf32>
    %171 = tpu.matmul %170, %1, %cst_46 {dimension_numbers = #tpu.dot_dimension_numbers<[1], [0], [0], [1], [0, 0, 1, 1], [], []>} : vector<8x32xbf16>, vector<32x128xbf16>, vector<8x128xf32> -> vector<8x128xf32>
    %172 = arith.addf %169, %171 : vector<8x128xf32>
    %173 = math.tanh %172 : vector<8x128xf32>
    %174 = arith.negf %172 : vector<8x128xf32>
    %175 = math.exp %174 : vector<8x128xf32>
    %cst_47 = arith.constant 1.000000e+00 : f32
    %176 = vector.broadcast %cst_47 : f32 to vector<8x128xf32>
    %177 = arith.addf %176, %175 : vector<8x128xf32>
    %178 = arith.divf %176, %177 : vector<8x128xf32>
    %179 = arith.select %18, %173, %178 : vector<8x128xi1>, vector<8x128xf32>
    %180 = vector.extract_strided_slice %179 {offsets = [0, 0], sizes = [8, 32], strides = [1, 1]} : vector<8x128xf32> to vector<8x32xf32>
    %181 = vector.extract_strided_slice %179 {offsets = [0, 32], sizes = [8, 32], strides = [1, 1]} : vector<8x128xf32> to vector<8x32xf32>
    %182 = vector.extract_strided_slice %179 {offsets = [0, 64], sizes = [8, 32], strides = [1, 1]} : vector<8x128xf32> to vector<8x32xf32>
    %183 = vector.extract_strided_slice %179 {offsets = [0, 96], sizes = [8, 32], strides = [1, 1]} : vector<8x128xf32> to vector<8x32xf32>
    %184 = arith.mulf %181, %117 : vector<8x32xf32>
    %185 = arith.mulf %180, %182 : vector<8x32xf32>
    %186 = arith.addf %184, %185 : vector<8x32xf32>
    %187 = math.tanh %186 : vector<8x32xf32>
    %188 = arith.mulf %183, %187 : vector<8x32xf32>
    %189 = arith.truncf %188 : vector<8x32xf32> to vector<8x32xbf16>
    %cst_48 = arith.constant dense<0.000000e+00> : vector<8x128xf32>
    %190 = tpu.matmul %189, %3, %cst_48 {dimension_numbers = #tpu.dot_dimension_numbers<[1], [0], [0], [1], [0, 0, 1, 1], [], []>} : vector<8x32xbf16>, vector<32x128xbf16>, vector<8x128xf32> -> vector<8x128xf32>
    %191 = vector.broadcast %5 : vector<1x128xf32> to vector<8x128xf32>
    %192 = arith.addf %190, %191 : vector<8x128xf32>
    %193 = arith.truncf %142 : vector<8x32xf32> to vector<8x32xbf16>
    %cst_49 = arith.constant dense<0.000000e+00> : vector<8x128xf32>
    %194 = tpu.matmul %193, %4, %cst_49 {dimension_numbers = #tpu.dot_dimension_numbers<[1], [0], [0], [1], [0, 0, 1, 1], [], []>} : vector<8x32xbf16>, vector<32x128xbf16>, vector<8x128xf32> -> vector<8x128xf32>
    %195 = arith.addf %192, %194 : vector<8x128xf32>
    %196 = math.tanh %195 : vector<8x128xf32>
    %197 = arith.negf %195 : vector<8x128xf32>
    %198 = math.exp %197 : vector<8x128xf32>
    %cst_50 = arith.constant 1.000000e+00 : f32
    %199 = vector.broadcast %cst_50 : f32 to vector<8x128xf32>
    %200 = arith.addf %199, %198 : vector<8x128xf32>
    %201 = arith.divf %199, %200 : vector<8x128xf32>
    %202 = arith.select %18, %196, %201 : vector<8x128xi1>, vector<8x128xf32>
    %203 = vector.extract_strided_slice %202 {offsets = [0, 0], sizes = [8, 32], strides = [1, 1]} : vector<8x128xf32> to vector<8x32xf32>
    %204 = vector.extract_strided_slice %202 {offsets = [0, 32], sizes = [8, 32], strides = [1, 1]} : vector<8x128xf32> to vector<8x32xf32>
    %205 = vector.extract_strided_slice %202 {offsets = [0, 64], sizes = [8, 32], strides = [1, 1]} : vector<8x128xf32> to vector<8x32xf32>
    %206 = vector.extract_strided_slice %202 {offsets = [0, 96], sizes = [8, 32], strides = [1, 1]} : vector<8x128xf32> to vector<8x32xf32>
    %207 = arith.mulf %204, %140 : vector<8x32xf32>
    %208 = arith.mulf %203, %205 : vector<8x32xf32>
    %209 = arith.addf %207, %208 : vector<8x32xf32>
    %210 = math.tanh %209 : vector<8x32xf32>
    %211 = arith.mulf %206, %210 : vector<8x32xf32>
    %c2 = arith.constant 2 : index
    %c0_51 = arith.constant 0 : index
    %c0_52 = arith.constant 0 : index
    %212 = vector.load %arg12[%c2, %c0_51, %c0_52] : memref<8x8x32xf32, #tpu.memory_space<vmem>>, vector<1x8x32xf32>
    %213 = vector.shape_cast %212 : vector<1x8x32xf32> to vector<8x32xf32>
    %214 = vector.shape_cast %211 : vector<8x32xf32> to vector<1x8x32xf32>
    tpu.vector_store %arg12[%c2, %c0_51, %c0_52], %214 {strides = array<i32>} : memref<8x8x32xf32, #tpu.memory_space<vmem>>, vector<1x8x32xf32>,
    %215 = arith.truncf %211 : vector<8x32xf32> to vector<8x32xbf16>
    %cst_53 = arith.constant dense<0.000000e+00> : vector<8x256xf32>
    %216 = tpu.matmul %215, %6, %cst_53 {dimension_numbers = #tpu.dot_dimension_numbers<[1], [0], [0], [1], [0, 0, 1, 1], [], []>} : vector<8x32xbf16>, vector<32x256xbf16>, vector<8x256xf32> -> vector<8x256xf32>
    %217 = vector.broadcast %8 : vector<1x256xf32> to vector<8x256xf32>
    %218 = arith.addf %216, %217 : vector<8x256xf32>
    %219 = arith.truncf %168 : vector<8x64xf32> to vector<8x64xbf16>
    %cst_54 = arith.constant dense<0.000000e+00> : vector<8x256xf32>
    %220 = tpu.matmul %219, %7, %cst_54 {dimension_numbers = #tpu.dot_dimension_numbers<[1], [0], [0], [1], [0, 0, 1, 1], [], []>} : vector<8x64xbf16>, vector<64x256xbf16>, vector<8x256xf32> -> vector<8x256xf32>
    %221 = arith.addf %218, %220 : vector<8x256xf32>
    %222 = math.tanh %221 : vector<8x256xf32>
    %223 = arith.negf %221 : vector<8x256xf32>
    %224 = math.exp %223 : vector<8x256xf32>
    %cst_55 = arith.constant 1.000000e+00 : f32
    %225 = vector.broadcast %cst_55 : f32 to vector<8x256xf32>
    %226 = arith.addf %225, %224 : vector<8x256xf32>
    %227 = arith.divf %225, %226 : vector<8x256xf32>
    %228 = arith.select %24, %222, %227 : vector<8x256xi1>, vector<8x256xf32>
    %229 = vector.extract_strided_slice %228 {offsets = [0, 0], sizes = [8, 64], strides = [1, 1]} : vector<8x256xf32> to vector<8x64xf32>
    %230 = vector.extract_strided_slice %228 {offsets = [0, 64], sizes = [8, 64], strides = [1, 1]} : vector<8x256xf32> to vector<8x64xf32>
    %231 = vector.extract_strided_slice %228 {offsets = [0, 128], sizes = [8, 64], strides = [1, 1]} : vector<8x256xf32> to vector<8x64xf32>
    %232 = vector.extract_strided_slice %228 {offsets = [0, 192], sizes = [8, 64], strides = [1, 1]} : vector<8x256xf32> to vector<8x64xf32>
    %233 = arith.mulf %230, %166 : vector<8x64xf32>
    %234 = arith.mulf %229, %231 : vector<8x64xf32>
    %235 = arith.addf %233, %234 : vector<8x64xf32>
    %236 = math.tanh %235 : vector<8x64xf32>
    %237 = arith.mulf %232, %236 : vector<8x64xf32>
    %238 = vector.extract_strided_slice %12 {offsets = [24, 0], sizes = [8, 128], strides = [1, 1]} : vector<64x128xf32> to vector<8x128xf32>
    %239 = arith.truncf %188 : vector<8x32xf32> to vector<8x32xbf16>
    %cst_56 = arith.constant dense<0.000000e+00> : vector<8x128xf32>
    %240 = tpu.matmul %239, %1, %cst_56 {dimension_numbers = #tpu.dot_dimension_numbers<[1], [0], [0], [1], [0, 0, 1, 1], [], []>} : vector<8x32xbf16>, vector<32x128xbf16>, vector<8x128xf32> -> vector<8x128xf32>
    %241 = arith.addf %238, %240 : vector<8x128xf32>
    %242 = math.tanh %241 : vector<8x128xf32>
    %243 = arith.negf %241 : vector<8x128xf32>
    %244 = math.exp %243 : vector<8x128xf32>
    %cst_57 = arith.constant 1.000000e+00 : f32
    %245 = vector.broadcast %cst_57 : f32 to vector<8x128xf32>
    %246 = arith.addf %245, %244 : vector<8x128xf32>
    %247 = arith.divf %245, %246 : vector<8x128xf32>
    %248 = arith.select %18, %242, %247 : vector<8x128xi1>, vector<8x128xf32>
    %249 = vector.extract_strided_slice %248 {offsets = [0, 0], sizes = [8, 32], strides = [1, 1]} : vector<8x128xf32> to vector<8x32xf32>
    %250 = vector.extract_strided_slice %248 {offsets = [0, 32], sizes = [8, 32], strides = [1, 1]} : vector<8x128xf32> to vector<8x32xf32>
    %251 = vector.extract_strided_slice %248 {offsets = [0, 64], sizes = [8, 32], strides = [1, 1]} : vector<8x128xf32> to vector<8x32xf32>
    %252 = vector.extract_strided_slice %248 {offsets = [0, 96], sizes = [8, 32], strides = [1, 1]} : vector<8x128xf32> to vector<8x32xf32>
    %253 = arith.mulf %250, %186 : vector<8x32xf32>
    %254 = arith.mulf %249, %251 : vector<8x32xf32>
    %255 = arith.addf %253, %254 : vector<8x32xf32>
    %256 = math.tanh %255 : vector<8x32xf32>
    %257 = arith.mulf %252, %256 : vector<8x32xf32>
    %258 = arith.truncf %257 : vector<8x32xf32> to vector<8x32xbf16>
    %cst_58 = arith.constant dense<0.000000e+00> : vector<8x128xf32>
    %259 = tpu.matmul %258, %3, %cst_58 {dimension_numbers = #tpu.dot_dimension_numbers<[1], [0], [0], [1], [0, 0, 1, 1], [], []>} : vector<8x32xbf16>, vector<32x128xbf16>, vector<8x128xf32> -> vector<8x128xf32>
    %260 = vector.broadcast %5 : vector<1x128xf32> to vector<8x128xf32>
    %261 = arith.addf %259, %260 : vector<8x128xf32>
    %262 = arith.truncf %211 : vector<8x32xf32> to vector<8x32xbf16>
    %cst_59 = arith.constant dense<0.000000e+00> : vector<8x128xf32>
    %263 = tpu.matmul %262, %4, %cst_59 {dimension_numbers = #tpu.dot_dimension_numbers<[1], [0], [0], [1], [0, 0, 1, 1], [], []>} : vector<8x32xbf16>, vector<32x128xbf16>, vector<8x128xf32> -> vector<8x128xf32>
    %264 = arith.addf %261, %263 : vector<8x128xf32>
    %265 = math.tanh %264 : vector<8x128xf32>
    %266 = arith.negf %264 : vector<8x128xf32>
    %267 = math.exp %266 : vector<8x128xf32>
    %cst_60 = arith.constant 1.000000e+00 : f32
    %268 = vector.broadcast %cst_60 : f32 to vector<8x128xf32>
    %269 = arith.addf %268, %267 : vector<8x128xf32>
    %270 = arith.divf %268, %269 : vector<8x128xf32>
    %271 = arith.select %18, %265, %270 : vector<8x128xi1>, vector<8x128xf32>
    %272 = vector.extract_strided_slice %271 {offsets = [0, 0], sizes = [8, 32], strides = [1, 1]} : vector<8x128xf32> to vector<8x32xf32>
    %273 = vector.extract_strided_slice %271 {offsets = [0, 32], sizes = [8, 32], strides = [1, 1]} : vector<8x128xf32> to vector<8x32xf32>
    %274 = vector.extract_strided_slice %271 {offsets = [0, 64], sizes = [8, 32], strides = [1, 1]} : vector<8x128xf32> to vector<8x32xf32>
    %275 = vector.extract_strided_slice %271 {offsets = [0, 96], sizes = [8, 32], strides = [1, 1]} : vector<8x128xf32> to vector<8x32xf32>
    %276 = arith.mulf %273, %209 : vector<8x32xf32>
    %277 = arith.mulf %272, %274 : vector<8x32xf32>
    %278 = arith.addf %276, %277 : vector<8x32xf32>
    %279 = math.tanh %278 : vector<8x32xf32>
    %280 = arith.mulf %275, %279 : vector<8x32xf32>
    %c3 = arith.constant 3 : index
    %c0_61 = arith.constant 0 : index
    %c0_62 = arith.constant 0 : index
    %281 = vector.load %arg12[%c3, %c0_61, %c0_62] : memref<8x8x32xf32, #tpu.memory_space<vmem>>, vector<1x8x32xf32>
    %282 = vector.shape_cast %281 : vector<1x8x32xf32> to vector<8x32xf32>
    %283 = vector.shape_cast %280 : vector<8x32xf32> to vector<1x8x32xf32>
    tpu.vector_store %arg12[%c3, %c0_61, %c0_62], %283 {strides = array<i32>} : memref<8x8x32xf32, #tpu.memory_space<vmem>>, vector<1x8x32xf32>,
    %284 = arith.truncf %280 : vector<8x32xf32> to vector<8x32xbf16>
    %cst_63 = arith.constant dense<0.000000e+00> : vector<8x256xf32>
    %285 = tpu.matmul %284, %6, %cst_63 {dimension_numbers = #tpu.dot_dimension_numbers<[1], [0], [0], [1], [0, 0, 1, 1], [], []>} : vector<8x32xbf16>, vector<32x256xbf16>, vector<8x256xf32> -> vector<8x256xf32>
    %286 = vector.broadcast %8 : vector<1x256xf32> to vector<8x256xf32>
    %287 = arith.addf %285, %286 : vector<8x256xf32>
    %288 = arith.truncf %237 : vector<8x64xf32> to vector<8x64xbf16>
    %cst_64 = arith.constant dense<0.000000e+00> : vector<8x256xf32>
    %289 = tpu.matmul %288, %7, %cst_64 {dimension_numbers = #tpu.dot_dimension_numbers<[1], [0], [0], [1], [0, 0, 1, 1], [], []>} : vector<8x64xbf16>, vector<64x256xbf16>, vector<8x256xf32> -> vector<8x256xf32>
    %290 = arith.addf %287, %289 : vector<8x256xf32>
    %291 = math.tanh %290 : vector<8x256xf32>
    %292 = arith.negf %290 : vector<8x256xf32>
    %293 = math.exp %292 : vector<8x256xf32>
    %cst_65 = arith.constant 1.000000e+00 : f32
    %294 = vector.broadcast %cst_65 : f32 to vector<8x256xf32>
    %295 = arith.addf %294, %293 : vector<8x256xf32>
    %296 = arith.divf %294, %295 : vector<8x256xf32>
    %297 = arith.select %24, %291, %296 : vector<8x256xi1>, vector<8x256xf32>
    %298 = vector.extract_strided_slice %297 {offsets = [0, 0], sizes = [8, 64], strides = [1, 1]} : vector<8x256xf32> to vector<8x64xf32>
    %299 = vector.extract_strided_slice %297 {offsets = [0, 64], sizes = [8, 64], strides = [1, 1]} : vector<8x256xf32> to vector<8x64xf32>
    %300 = vector.extract_strided_slice %297 {offsets = [0, 128], sizes = [8, 64], strides = [1, 1]} : vector<8x256xf32> to vector<8x64xf32>
    %301 = vector.extract_strided_slice %297 {offsets = [0, 192], sizes = [8, 64], strides = [1, 1]} : vector<8x256xf32> to vector<8x64xf32>
    %302 = arith.mulf %299, %235 : vector<8x64xf32>
    %303 = arith.mulf %298, %300 : vector<8x64xf32>
    %304 = arith.addf %302, %303 : vector<8x64xf32>
    %305 = math.tanh %304 : vector<8x64xf32>
    %306 = arith.mulf %301, %305 : vector<8x64xf32>
    %307 = vector.extract_strided_slice %12 {offsets = [32, 0], sizes = [8, 128], strides = [1, 1]} : vector<64x128xf32> to vector<8x128xf32>
    %308 = arith.truncf %257 : vector<8x32xf32> to vector<8x32xbf16>
    %cst_66 = arith.constant dense<0.000000e+00> : vector<8x128xf32>
    %309 = tpu.matmul %308, %1, %cst_66 {dimension_numbers = #tpu.dot_dimension_numbers<[1], [0], [0], [1], [0, 0, 1, 1], [], []>} : vector<8x32xbf16>, vector<32x128xbf16>, vector<8x128xf32> -> vector<8x128xf32>
    %310 = arith.addf %307, %309 : vector<8x128xf32>
    %311 = math.tanh %310 : vector<8x128xf32>
    %312 = arith.negf %310 : vector<8x128xf32>
    %313 = math.exp %312 : vector<8x128xf32>
    %cst_67 = arith.constant 1.000000e+00 : f32
    %314 = vector.broadcast %cst_67 : f32 to vector<8x128xf32>
    %315 = arith.addf %314, %313 : vector<8x128xf32>
    %316 = arith.divf %314, %315 : vector<8x128xf32>
    %317 = arith.select %18, %311, %316 : vector<8x128xi1>, vector<8x128xf32>
    %318 = vector.extract_strided_slice %317 {offsets = [0, 0], sizes = [8, 32], strides = [1, 1]} : vector<8x128xf32> to vector<8x32xf32>
    %319 = vector.extract_strided_slice %317 {offsets = [0, 32], sizes = [8, 32], strides = [1, 1]} : vector<8x128xf32> to vector<8x32xf32>
    %320 = vector.extract_strided_slice %317 {offsets = [0, 64], sizes = [8, 32], strides = [1, 1]} : vector<8x128xf32> to vector<8x32xf32>
    %321 = vector.extract_strided_slice %317 {offsets = [0, 96], sizes = [8, 32], strides = [1, 1]} : vector<8x128xf32> to vector<8x32xf32>
    %322 = arith.mulf %319, %255 : vector<8x32xf32>
    %323 = arith.mulf %318, %320 : vector<8x32xf32>
    %324 = arith.addf %322, %323 : vector<8x32xf32>
    %325 = math.tanh %324 : vector<8x32xf32>
    %326 = arith.mulf %321, %325 : vector<8x32xf32>
    %327 = arith.truncf %326 : vector<8x32xf32> to vector<8x32xbf16>
    %cst_68 = arith.constant dense<0.000000e+00> : vector<8x128xf32>
    %328 = tpu.matmul %327, %3, %cst_68 {dimension_numbers = #tpu.dot_dimension_numbers<[1], [0], [0], [1], [0, 0, 1, 1], [], []>} : vector<8x32xbf16>, vector<32x128xbf16>, vector<8x128xf32> -> vector<8x128xf32>
    %329 = vector.broadcast %5 : vector<1x128xf32> to vector<8x128xf32>
    %330 = arith.addf %328, %329 : vector<8x128xf32>
    %331 = arith.truncf %280 : vector<8x32xf32> to vector<8x32xbf16>
    %cst_69 = arith.constant dense<0.000000e+00> : vector<8x128xf32>
    %332 = tpu.matmul %331, %4, %cst_69 {dimension_numbers = #tpu.dot_dimension_numbers<[1], [0], [0], [1], [0, 0, 1, 1], [], []>} : vector<8x32xbf16>, vector<32x128xbf16>, vector<8x128xf32> -> vector<8x128xf32>
    %333 = arith.addf %330, %332 : vector<8x128xf32>
    %334 = math.tanh %333 : vector<8x128xf32>
    %335 = arith.negf %333 : vector<8x128xf32>
    %336 = math.exp %335 : vector<8x128xf32>
    %cst_70 = arith.constant 1.000000e+00 : f32
    %337 = vector.broadcast %cst_70 : f32 to vector<8x128xf32>
    %338 = arith.addf %337, %336 : vector<8x128xf32>
    %339 = arith.divf %337, %338 : vector<8x128xf32>
    %340 = arith.select %18, %334, %339 : vector<8x128xi1>, vector<8x128xf32>
    %341 = vector.extract_strided_slice %340 {offsets = [0, 0], sizes = [8, 32], strides = [1, 1]} : vector<8x128xf32> to vector<8x32xf32>
    %342 = vector.extract_strided_slice %340 {offsets = [0, 32], sizes = [8, 32], strides = [1, 1]} : vector<8x128xf32> to vector<8x32xf32>
    %343 = vector.extract_strided_slice %340 {offsets = [0, 64], sizes = [8, 32], strides = [1, 1]} : vector<8x128xf32> to vector<8x32xf32>
    %344 = vector.extract_strided_slice %340 {offsets = [0, 96], sizes = [8, 32], strides = [1, 1]} : vector<8x128xf32> to vector<8x32xf32>
    %345 = arith.mulf %342, %278 : vector<8x32xf32>
    %346 = arith.mulf %341, %343 : vector<8x32xf32>
    %347 = arith.addf %345, %346 : vector<8x32xf32>
    %348 = math.tanh %347 : vector<8x32xf32>
    %349 = arith.mulf %344, %348 : vector<8x32xf32>
    %c4 = arith.constant 4 : index
    %c0_71 = arith.constant 0 : index
    %c0_72 = arith.constant 0 : index
    %350 = vector.load %arg12[%c4, %c0_71, %c0_72] : memref<8x8x32xf32, #tpu.memory_space<vmem>>, vector<1x8x32xf32>
    %351 = vector.shape_cast %350 : vector<1x8x32xf32> to vector<8x32xf32>
    %352 = vector.shape_cast %349 : vector<8x32xf32> to vector<1x8x32xf32>
    tpu.vector_store %arg12[%c4, %c0_71, %c0_72], %352 {strides = array<i32>} : memref<8x8x32xf32, #tpu.memory_space<vmem>>, vector<1x8x32xf32>,
    %353 = arith.truncf %349 : vector<8x32xf32> to vector<8x32xbf16>
    %cst_73 = arith.constant dense<0.000000e+00> : vector<8x256xf32>
    %354 = tpu.matmul %353, %6, %cst_73 {dimension_numbers = #tpu.dot_dimension_numbers<[1], [0], [0], [1], [0, 0, 1, 1], [], []>} : vector<8x32xbf16>, vector<32x256xbf16>, vector<8x256xf32> -> vector<8x256xf32>
    %355 = vector.broadcast %8 : vector<1x256xf32> to vector<8x256xf32>
    %356 = arith.addf %354, %355 : vector<8x256xf32>
    %357 = arith.truncf %306 : vector<8x64xf32> to vector<8x64xbf16>
    %cst_74 = arith.constant dense<0.000000e+00> : vector<8x256xf32>
    %358 = tpu.matmul %357, %7, %cst_74 {dimension_numbers = #tpu.dot_dimension_numbers<[1], [0], [0], [1], [0, 0, 1, 1], [], []>} : vector<8x64xbf16>, vector<64x256xbf16>, vector<8x256xf32> -> vector<8x256xf32>
    %359 = arith.addf %356, %358 : vector<8x256xf32>
    %360 = math.tanh %359 : vector<8x256xf32>
    %361 = arith.negf %359 : vector<8x256xf32>
    %362 = math.exp %361 : vector<8x256xf32>
    %cst_75 = arith.constant 1.000000e+00 : f32
    %363 = vector.broadcast %cst_75 : f32 to vector<8x256xf32>
    %364 = arith.addf %363, %362 : vector<8x256xf32>
    %365 = arith.divf %363, %364 : vector<8x256xf32>
    %366 = arith.select %24, %360, %365 : vector<8x256xi1>, vector<8x256xf32>
    %367 = vector.extract_strided_slice %366 {offsets = [0, 0], sizes = [8, 64], strides = [1, 1]} : vector<8x256xf32> to vector<8x64xf32>
    %368 = vector.extract_strided_slice %366 {offsets = [0, 64], sizes = [8, 64], strides = [1, 1]} : vector<8x256xf32> to vector<8x64xf32>
    %369 = vector.extract_strided_slice %366 {offsets = [0, 128], sizes = [8, 64], strides = [1, 1]} : vector<8x256xf32> to vector<8x64xf32>
    %370 = vector.extract_strided_slice %366 {offsets = [0, 192], sizes = [8, 64], strides = [1, 1]} : vector<8x256xf32> to vector<8x64xf32>
    %371 = arith.mulf %368, %304 : vector<8x64xf32>
    %372 = arith.mulf %367, %369 : vector<8x64xf32>
    %373 = arith.addf %371, %372 : vector<8x64xf32>
    %374 = math.tanh %373 : vector<8x64xf32>
    %375 = arith.mulf %370, %374 : vector<8x64xf32>
    %376 = vector.extract_strided_slice %12 {offsets = [40, 0], sizes = [8, 128], strides = [1, 1]} : vector<64x128xf32> to vector<8x128xf32>
    %377 = arith.truncf %326 : vector<8x32xf32> to vector<8x32xbf16>
    %cst_76 = arith.constant dense<0.000000e+00> : vector<8x128xf32>
    %378 = tpu.matmul %377, %1, %cst_76 {dimension_numbers = #tpu.dot_dimension_numbers<[1], [0], [0], [1], [0, 0, 1, 1], [], []>} : vector<8x32xbf16>, vector<32x128xbf16>, vector<8x128xf32> -> vector<8x128xf32>
    %379 = arith.addf %376, %378 : vector<8x128xf32>
    %380 = math.tanh %379 : vector<8x128xf32>
    %381 = arith.negf %379 : vector<8x128xf32>
    %382 = math.exp %381 : vector<8x128xf32>
    %cst_77 = arith.constant 1.000000e+00 : f32
    %383 = vector.broadcast %cst_77 : f32 to vector<8x128xf32>
    %384 = arith.addf %383, %382 : vector<8x128xf32>
    %385 = arith.divf %383, %384 : vector<8x128xf32>
    %386 = arith.select %18, %380, %385 : vector<8x128xi1>, vector<8x128xf32>
    %387 = vector.extract_strided_slice %386 {offsets = [0, 0], sizes = [8, 32], strides = [1, 1]} : vector<8x128xf32> to vector<8x32xf32>
    %388 = vector.extract_strided_slice %386 {offsets = [0, 32], sizes = [8, 32], strides = [1, 1]} : vector<8x128xf32> to vector<8x32xf32>
    %389 = vector.extract_strided_slice %386 {offsets = [0, 64], sizes = [8, 32], strides = [1, 1]} : vector<8x128xf32> to vector<8x32xf32>
    %390 = vector.extract_strided_slice %386 {offsets = [0, 96], sizes = [8, 32], strides = [1, 1]} : vector<8x128xf32> to vector<8x32xf32>
    %391 = arith.mulf %388, %324 : vector<8x32xf32>
    %392 = arith.mulf %387, %389 : vector<8x32xf32>
    %393 = arith.addf %391, %392 : vector<8x32xf32>
    %394 = math.tanh %393 : vector<8x32xf32>
    %395 = arith.mulf %390, %394 : vector<8x32xf32>
    %396 = arith.truncf %395 : vector<8x32xf32> to vector<8x32xbf16>
    %cst_78 = arith.constant dense<0.000000e+00> : vector<8x128xf32>
    %397 = tpu.matmul %396, %3, %cst_78 {dimension_numbers = #tpu.dot_dimension_numbers<[1], [0], [0], [1], [0, 0, 1, 1], [], []>} : vector<8x32xbf16>, vector<32x128xbf16>, vector<8x128xf32> -> vector<8x128xf32>
    %398 = vector.broadcast %5 : vector<1x128xf32> to vector<8x128xf32>
    %399 = arith.addf %397, %398 : vector<8x128xf32>
    %400 = arith.truncf %349 : vector<8x32xf32> to vector<8x32xbf16>
    %cst_79 = arith.constant dense<0.000000e+00> : vector<8x128xf32>
    %401 = tpu.matmul %400, %4, %cst_79 {dimension_numbers = #tpu.dot_dimension_numbers<[1], [0], [0], [1], [0, 0, 1, 1], [], []>} : vector<8x32xbf16>, vector<32x128xbf16>, vector<8x128xf32> -> vector<8x128xf32>
    %402 = arith.addf %399, %401 : vector<8x128xf32>
    %403 = math.tanh %402 : vector<8x128xf32>
    %404 = arith.negf %402 : vector<8x128xf32>
    %405 = math.exp %404 : vector<8x128xf32>
    %cst_80 = arith.constant 1.000000e+00 : f32
    %406 = vector.broadcast %cst_80 : f32 to vector<8x128xf32>
    %407 = arith.addf %406, %405 : vector<8x128xf32>
    %408 = arith.divf %406, %407 : vector<8x128xf32>
    %409 = arith.select %18, %403, %408 : vector<8x128xi1>, vector<8x128xf32>
    %410 = vector.extract_strided_slice %409 {offsets = [0, 0], sizes = [8, 32], strides = [1, 1]} : vector<8x128xf32> to vector<8x32xf32>
    %411 = vector.extract_strided_slice %409 {offsets = [0, 32], sizes = [8, 32], strides = [1, 1]} : vector<8x128xf32> to vector<8x32xf32>
    %412 = vector.extract_strided_slice %409 {offsets = [0, 64], sizes = [8, 32], strides = [1, 1]} : vector<8x128xf32> to vector<8x32xf32>
    %413 = vector.extract_strided_slice %409 {offsets = [0, 96], sizes = [8, 32], strides = [1, 1]} : vector<8x128xf32> to vector<8x32xf32>
    %414 = arith.mulf %411, %347 : vector<8x32xf32>
    %415 = arith.mulf %410, %412 : vector<8x32xf32>
    %416 = arith.addf %414, %415 : vector<8x32xf32>
    %417 = math.tanh %416 : vector<8x32xf32>
    %418 = arith.mulf %413, %417 : vector<8x32xf32>
    %c5 = arith.constant 5 : index
    %c0_81 = arith.constant 0 : index
    %c0_82 = arith.constant 0 : index
    %419 = vector.load %arg12[%c5, %c0_81, %c0_82] : memref<8x8x32xf32, #tpu.memory_space<vmem>>, vector<1x8x32xf32>
    %420 = vector.shape_cast %419 : vector<1x8x32xf32> to vector<8x32xf32>
    %421 = vector.shape_cast %418 : vector<8x32xf32> to vector<1x8x32xf32>
    tpu.vector_store %arg12[%c5, %c0_81, %c0_82], %421 {strides = array<i32>} : memref<8x8x32xf32, #tpu.memory_space<vmem>>, vector<1x8x32xf32>,
    %422 = arith.truncf %418 : vector<8x32xf32> to vector<8x32xbf16>
    %cst_83 = arith.constant dense<0.000000e+00> : vector<8x256xf32>
    %423 = tpu.matmul %422, %6, %cst_83 {dimension_numbers = #tpu.dot_dimension_numbers<[1], [0], [0], [1], [0, 0, 1, 1], [], []>} : vector<8x32xbf16>, vector<32x256xbf16>, vector<8x256xf32> -> vector<8x256xf32>
    %424 = vector.broadcast %8 : vector<1x256xf32> to vector<8x256xf32>
    %425 = arith.addf %423, %424 : vector<8x256xf32>
    %426 = arith.truncf %375 : vector<8x64xf32> to vector<8x64xbf16>
    %cst_84 = arith.constant dense<0.000000e+00> : vector<8x256xf32>
    %427 = tpu.matmul %426, %7, %cst_84 {dimension_numbers = #tpu.dot_dimension_numbers<[1], [0], [0], [1], [0, 0, 1, 1], [], []>} : vector<8x64xbf16>, vector<64x256xbf16>, vector<8x256xf32> -> vector<8x256xf32>
    %428 = arith.addf %425, %427 : vector<8x256xf32>
    %429 = math.tanh %428 : vector<8x256xf32>
    %430 = arith.negf %428 : vector<8x256xf32>
    %431 = math.exp %430 : vector<8x256xf32>
    %cst_85 = arith.constant 1.000000e+00 : f32
    %432 = vector.broadcast %cst_85 : f32 to vector<8x256xf32>
    %433 = arith.addf %432, %431 : vector<8x256xf32>
    %434 = arith.divf %432, %433 : vector<8x256xf32>
    %435 = arith.select %24, %429, %434 : vector<8x256xi1>, vector<8x256xf32>
    %436 = vector.extract_strided_slice %435 {offsets = [0, 0], sizes = [8, 64], strides = [1, 1]} : vector<8x256xf32> to vector<8x64xf32>
    %437 = vector.extract_strided_slice %435 {offsets = [0, 64], sizes = [8, 64], strides = [1, 1]} : vector<8x256xf32> to vector<8x64xf32>
    %438 = vector.extract_strided_slice %435 {offsets = [0, 128], sizes = [8, 64], strides = [1, 1]} : vector<8x256xf32> to vector<8x64xf32>
    %439 = vector.extract_strided_slice %435 {offsets = [0, 192], sizes = [8, 64], strides = [1, 1]} : vector<8x256xf32> to vector<8x64xf32>
    %440 = arith.mulf %437, %373 : vector<8x64xf32>
    %441 = arith.mulf %436, %438 : vector<8x64xf32>
    %442 = arith.addf %440, %441 : vector<8x64xf32>
    %443 = math.tanh %442 : vector<8x64xf32>
    %444 = arith.mulf %439, %443 : vector<8x64xf32>
    %445 = vector.extract_strided_slice %12 {offsets = [48, 0], sizes = [8, 128], strides = [1, 1]} : vector<64x128xf32> to vector<8x128xf32>
    %446 = arith.truncf %395 : vector<8x32xf32> to vector<8x32xbf16>
    %cst_86 = arith.constant dense<0.000000e+00> : vector<8x128xf32>
    %447 = tpu.matmul %446, %1, %cst_86 {dimension_numbers = #tpu.dot_dimension_numbers<[1], [0], [0], [1], [0, 0, 1, 1], [], []>} : vector<8x32xbf16>, vector<32x128xbf16>, vector<8x128xf32> -> vector<8x128xf32>
    %448 = arith.addf %445, %447 : vector<8x128xf32>
    %449 = math.tanh %448 : vector<8x128xf32>
    %450 = arith.negf %448 : vector<8x128xf32>
    %451 = math.exp %450 : vector<8x128xf32>
    %cst_87 = arith.constant 1.000000e+00 : f32
    %452 = vector.broadcast %cst_87 : f32 to vector<8x128xf32>
    %453 = arith.addf %452, %451 : vector<8x128xf32>
    %454 = arith.divf %452, %453 : vector<8x128xf32>
    %455 = arith.select %18, %449, %454 : vector<8x128xi1>, vector<8x128xf32>
    %456 = vector.extract_strided_slice %455 {offsets = [0, 0], sizes = [8, 32], strides = [1, 1]} : vector<8x128xf32> to vector<8x32xf32>
    %457 = vector.extract_strided_slice %455 {offsets = [0, 32], sizes = [8, 32], strides = [1, 1]} : vector<8x128xf32> to vector<8x32xf32>
    %458 = vector.extract_strided_slice %455 {offsets = [0, 64], sizes = [8, 32], strides = [1, 1]} : vector<8x128xf32> to vector<8x32xf32>
    %459 = vector.extract_strided_slice %455 {offsets = [0, 96], sizes = [8, 32], strides = [1, 1]} : vector<8x128xf32> to vector<8x32xf32>
    %460 = arith.mulf %457, %393 : vector<8x32xf32>
    %461 = arith.mulf %456, %458 : vector<8x32xf32>
    %462 = arith.addf %460, %461 : vector<8x32xf32>
    %463 = math.tanh %462 : vector<8x32xf32>
    %464 = arith.mulf %459, %463 : vector<8x32xf32>
    %465 = arith.truncf %464 : vector<8x32xf32> to vector<8x32xbf16>
    %cst_88 = arith.constant dense<0.000000e+00> : vector<8x128xf32>
    %466 = tpu.matmul %465, %3, %cst_88 {dimension_numbers = #tpu.dot_dimension_numbers<[1], [0], [0], [1], [0, 0, 1, 1], [], []>} : vector<8x32xbf16>, vector<32x128xbf16>, vector<8x128xf32> -> vector<8x128xf32>
    %467 = vector.broadcast %5 : vector<1x128xf32> to vector<8x128xf32>
    %468 = arith.addf %466, %467 : vector<8x128xf32>
    %469 = arith.truncf %418 : vector<8x32xf32> to vector<8x32xbf16>
    %cst_89 = arith.constant dense<0.000000e+00> : vector<8x128xf32>
    %470 = tpu.matmul %469, %4, %cst_89 {dimension_numbers = #tpu.dot_dimension_numbers<[1], [0], [0], [1], [0, 0, 1, 1], [], []>} : vector<8x32xbf16>, vector<32x128xbf16>, vector<8x128xf32> -> vector<8x128xf32>
    %471 = arith.addf %468, %470 : vector<8x128xf32>
    %472 = math.tanh %471 : vector<8x128xf32>
    %473 = arith.negf %471 : vector<8x128xf32>
    %474 = math.exp %473 : vector<8x128xf32>
    %cst_90 = arith.constant 1.000000e+00 : f32
    %475 = vector.broadcast %cst_90 : f32 to vector<8x128xf32>
    %476 = arith.addf %475, %474 : vector<8x128xf32>
    %477 = arith.divf %475, %476 : vector<8x128xf32>
    %478 = arith.select %18, %472, %477 : vector<8x128xi1>, vector<8x128xf32>
    %479 = vector.extract_strided_slice %478 {offsets = [0, 0], sizes = [8, 32], strides = [1, 1]} : vector<8x128xf32> to vector<8x32xf32>
    %480 = vector.extract_strided_slice %478 {offsets = [0, 32], sizes = [8, 32], strides = [1, 1]} : vector<8x128xf32> to vector<8x32xf32>
    %481 = vector.extract_strided_slice %478 {offsets = [0, 64], sizes = [8, 32], strides = [1, 1]} : vector<8x128xf32> to vector<8x32xf32>
    %482 = vector.extract_strided_slice %478 {offsets = [0, 96], sizes = [8, 32], strides = [1, 1]} : vector<8x128xf32> to vector<8x32xf32>
    %483 = arith.mulf %480, %416 : vector<8x32xf32>
    %484 = arith.mulf %479, %481 : vector<8x32xf32>
    %485 = arith.addf %483, %484 : vector<8x32xf32>
    %486 = math.tanh %485 : vector<8x32xf32>
    %487 = arith.mulf %482, %486 : vector<8x32xf32>
    %c6 = arith.constant 6 : index
    %c0_91 = arith.constant 0 : index
    %c0_92 = arith.constant 0 : index
    %488 = vector.load %arg12[%c6, %c0_91, %c0_92] : memref<8x8x32xf32, #tpu.memory_space<vmem>>, vector<1x8x32xf32>
    %489 = vector.shape_cast %488 : vector<1x8x32xf32> to vector<8x32xf32>
    %490 = vector.shape_cast %487 : vector<8x32xf32> to vector<1x8x32xf32>
    tpu.vector_store %arg12[%c6, %c0_91, %c0_92], %490 {strides = array<i32>} : memref<8x8x32xf32, #tpu.memory_space<vmem>>, vector<1x8x32xf32>,
    %491 = arith.truncf %487 : vector<8x32xf32> to vector<8x32xbf16>
    %cst_93 = arith.constant dense<0.000000e+00> : vector<8x256xf32>
    %492 = tpu.matmul %491, %6, %cst_93 {dimension_numbers = #tpu.dot_dimension_numbers<[1], [0], [0], [1], [0, 0, 1, 1], [], []>} : vector<8x32xbf16>, vector<32x256xbf16>, vector<8x256xf32> -> vector<8x256xf32>
    %493 = vector.broadcast %8 : vector<1x256xf32> to vector<8x256xf32>
    %494 = arith.addf %492, %493 : vector<8x256xf32>
    %495 = arith.truncf %444 : vector<8x64xf32> to vector<8x64xbf16>
    %cst_94 = arith.constant dense<0.000000e+00> : vector<8x256xf32>
    %496 = tpu.matmul %495, %7, %cst_94 {dimension_numbers = #tpu.dot_dimension_numbers<[1], [0], [0], [1], [0, 0, 1, 1], [], []>} : vector<8x64xbf16>, vector<64x256xbf16>, vector<8x256xf32> -> vector<8x256xf32>
    %497 = arith.addf %494, %496 : vector<8x256xf32>
    %498 = math.tanh %497 : vector<8x256xf32>
    %499 = arith.negf %497 : vector<8x256xf32>
    %500 = math.exp %499 : vector<8x256xf32>
    %cst_95 = arith.constant 1.000000e+00 : f32
    %501 = vector.broadcast %cst_95 : f32 to vector<8x256xf32>
    %502 = arith.addf %501, %500 : vector<8x256xf32>
    %503 = arith.divf %501, %502 : vector<8x256xf32>
    %504 = arith.select %24, %498, %503 : vector<8x256xi1>, vector<8x256xf32>
    %505 = vector.extract_strided_slice %504 {offsets = [0, 0], sizes = [8, 64], strides = [1, 1]} : vector<8x256xf32> to vector<8x64xf32>
    %506 = vector.extract_strided_slice %504 {offsets = [0, 64], sizes = [8, 64], strides = [1, 1]} : vector<8x256xf32> to vector<8x64xf32>
    %507 = vector.extract_strided_slice %504 {offsets = [0, 128], sizes = [8, 64], strides = [1, 1]} : vector<8x256xf32> to vector<8x64xf32>
    %508 = vector.extract_strided_slice %504 {offsets = [0, 192], sizes = [8, 64], strides = [1, 1]} : vector<8x256xf32> to vector<8x64xf32>
    %509 = arith.mulf %506, %442 : vector<8x64xf32>
    %510 = arith.mulf %505, %507 : vector<8x64xf32>
    %511 = arith.addf %509, %510 : vector<8x64xf32>
    %512 = math.tanh %511 : vector<8x64xf32>
    %513 = arith.mulf %508, %512 : vector<8x64xf32>
    %514 = vector.extract_strided_slice %12 {offsets = [56, 0], sizes = [8, 128], strides = [1, 1]} : vector<64x128xf32> to vector<8x128xf32>
    %515 = arith.truncf %464 : vector<8x32xf32> to vector<8x32xbf16>
    %cst_96 = arith.constant dense<0.000000e+00> : vector<8x128xf32>
    %516 = tpu.matmul %515, %1, %cst_96 {dimension_numbers = #tpu.dot_dimension_numbers<[1], [0], [0], [1], [0, 0, 1, 1], [], []>} : vector<8x32xbf16>, vector<32x128xbf16>, vector<8x128xf32> -> vector<8x128xf32>
    %517 = arith.addf %514, %516 : vector<8x128xf32>
    %518 = math.tanh %517 : vector<8x128xf32>
    %519 = arith.negf %517 : vector<8x128xf32>
    %520 = math.exp %519 : vector<8x128xf32>
    %cst_97 = arith.constant 1.000000e+00 : f32
    %521 = vector.broadcast %cst_97 : f32 to vector<8x128xf32>
    %522 = arith.addf %521, %520 : vector<8x128xf32>
    %523 = arith.divf %521, %522 : vector<8x128xf32>
    %524 = arith.select %18, %518, %523 : vector<8x128xi1>, vector<8x128xf32>
    %525 = vector.extract_strided_slice %524 {offsets = [0, 0], sizes = [8, 32], strides = [1, 1]} : vector<8x128xf32> to vector<8x32xf32>
    %526 = vector.extract_strided_slice %524 {offsets = [0, 32], sizes = [8, 32], strides = [1, 1]} : vector<8x128xf32> to vector<8x32xf32>
    %527 = vector.extract_strided_slice %524 {offsets = [0, 64], sizes = [8, 32], strides = [1, 1]} : vector<8x128xf32> to vector<8x32xf32>
    %528 = vector.extract_strided_slice %524 {offsets = [0, 96], sizes = [8, 32], strides = [1, 1]} : vector<8x128xf32> to vector<8x32xf32>
    %529 = arith.mulf %526, %462 : vector<8x32xf32>
    %530 = arith.mulf %525, %527 : vector<8x32xf32>
    %531 = arith.addf %529, %530 : vector<8x32xf32>
    %532 = math.tanh %531 : vector<8x32xf32>
    %533 = arith.mulf %528, %532 : vector<8x32xf32>
    %534 = arith.truncf %533 : vector<8x32xf32> to vector<8x32xbf16>
    %cst_98 = arith.constant dense<0.000000e+00> : vector<8x128xf32>
    %535 = tpu.matmul %534, %3, %cst_98 {dimension_numbers = #tpu.dot_dimension_numbers<[1], [0], [0], [1], [0, 0, 1, 1], [], []>} : vector<8x32xbf16>, vector<32x128xbf16>, vector<8x128xf32> -> vector<8x128xf32>
    %536 = vector.broadcast %5 : vector<1x128xf32> to vector<8x128xf32>
    %537 = arith.addf %535, %536 : vector<8x128xf32>
    %538 = arith.truncf %487 : vector<8x32xf32> to vector<8x32xbf16>
    %cst_99 = arith.constant dense<0.000000e+00> : vector<8x128xf32>
    %539 = tpu.matmul %538, %4, %cst_99 {dimension_numbers = #tpu.dot_dimension_numbers<[1], [0], [0], [1], [0, 0, 1, 1], [], []>} : vector<8x32xbf16>, vector<32x128xbf16>, vector<8x128xf32> -> vector<8x128xf32>
    %540 = arith.addf %537, %539 : vector<8x128xf32>
    %541 = math.tanh %540 : vector<8x128xf32>
    %542 = arith.negf %540 : vector<8x128xf32>
    %543 = math.exp %542 : vector<8x128xf32>
    %cst_100 = arith.constant 1.000000e+00 : f32
    %544 = vector.broadcast %cst_100 : f32 to vector<8x128xf32>
    %545 = arith.addf %544, %543 : vector<8x128xf32>
    %546 = arith.divf %544, %545 : vector<8x128xf32>
    %547 = arith.select %18, %541, %546 : vector<8x128xi1>, vector<8x128xf32>
    %548 = vector.extract_strided_slice %547 {offsets = [0, 0], sizes = [8, 32], strides = [1, 1]} : vector<8x128xf32> to vector<8x32xf32>
    %549 = vector.extract_strided_slice %547 {offsets = [0, 32], sizes = [8, 32], strides = [1, 1]} : vector<8x128xf32> to vector<8x32xf32>
    %550 = vector.extract_strided_slice %547 {offsets = [0, 64], sizes = [8, 32], strides = [1, 1]} : vector<8x128xf32> to vector<8x32xf32>
    %551 = vector.extract_strided_slice %547 {offsets = [0, 96], sizes = [8, 32], strides = [1, 1]} : vector<8x128xf32> to vector<8x32xf32>
    %552 = arith.mulf %549, %485 : vector<8x32xf32>
    %553 = arith.mulf %548, %550 : vector<8x32xf32>
    %554 = arith.addf %552, %553 : vector<8x32xf32>
    %555 = math.tanh %554 : vector<8x32xf32>
    %556 = arith.mulf %551, %555 : vector<8x32xf32>
    %c7 = arith.constant 7 : index
    %c0_101 = arith.constant 0 : index
    %c0_102 = arith.constant 0 : index
    %557 = vector.load %arg12[%c7, %c0_101, %c0_102] : memref<8x8x32xf32, #tpu.memory_space<vmem>>, vector<1x8x32xf32>
    %558 = vector.shape_cast %557 : vector<1x8x32xf32> to vector<8x32xf32>
    %559 = vector.shape_cast %556 : vector<8x32xf32> to vector<1x8x32xf32>
    tpu.vector_store %arg12[%c7, %c0_101, %c0_102], %559 {strides = array<i32>} : memref<8x8x32xf32, #tpu.memory_space<vmem>>, vector<1x8x32xf32>,
    %560 = arith.truncf %556 : vector<8x32xf32> to vector<8x32xbf16>
    %cst_103 = arith.constant dense<0.000000e+00> : vector<8x256xf32>
    %561 = tpu.matmul %560, %6, %cst_103 {dimension_numbers = #tpu.dot_dimension_numbers<[1], [0], [0], [1], [0, 0, 1, 1], [], []>} : vector<8x32xbf16>, vector<32x256xbf16>, vector<8x256xf32> -> vector<8x256xf32>
    %562 = vector.broadcast %8 : vector<1x256xf32> to vector<8x256xf32>
    %563 = arith.addf %561, %562 : vector<8x256xf32>
    %564 = arith.truncf %513 : vector<8x64xf32> to vector<8x64xbf16>
    %cst_104 = arith.constant dense<0.000000e+00> : vector<8x256xf32>
    %565 = tpu.matmul %564, %7, %cst_104 {dimension_numbers = #tpu.dot_dimension_numbers<[1], [0], [0], [1], [0, 0, 1, 1], [], []>} : vector<8x64xbf16>, vector<64x256xbf16>, vector<8x256xf32> -> vector<8x256xf32>
    %566 = arith.addf %563, %565 : vector<8x256xf32>
    %567 = math.tanh %566 : vector<8x256xf32>
    %568 = arith.negf %566 : vector<8x256xf32>
    %569 = math.exp %568 : vector<8x256xf32>
    %cst_105 = arith.constant 1.000000e+00 : f32
    %570 = vector.broadcast %cst_105 : f32 to vector<8x256xf32>
    %571 = arith.addf %570, %569 : vector<8x256xf32>
    %572 = arith.divf %570, %571 : vector<8x256xf32>
    %573 = arith.select %24, %567, %572 : vector<8x256xi1>, vector<8x256xf32>
    %574 = vector.extract_strided_slice %573 {offsets = [0, 0], sizes = [8, 64], strides = [1, 1]} : vector<8x256xf32> to vector<8x64xf32>
    %575 = vector.extract_strided_slice %573 {offsets = [0, 64], sizes = [8, 64], strides = [1, 1]} : vector<8x256xf32> to vector<8x64xf32>
    %576 = vector.extract_strided_slice %573 {offsets = [0, 128], sizes = [8, 64], strides = [1, 1]} : vector<8x256xf32> to vector<8x64xf32>
    %577 = vector.extract_strided_slice %573 {offsets = [0, 192], sizes = [8, 64], strides = [1, 1]} : vector<8x256xf32> to vector<8x64xf32>
    %578 = arith.mulf %575, %511 : vector<8x64xf32>
    %579 = arith.mulf %574, %576 : vector<8x64xf32>
    %580 = arith.addf %578, %579 : vector<8x64xf32>
    %581 = math.tanh %580 : vector<8x64xf32>
    %582 = arith.mulf %577, %581 : vector<8x64xf32>
    %c0_106 = arith.constant 0 : index
    %c0_107 = arith.constant 0 : index
    %583 = vector.load %arg10[%c0_106, %c0_107] : memref<64x2xf32, #tpu.memory_space<vmem>>, vector<64x2xf32>
    %cst_108 = arith.constant dense<0.000000e+00> : vector<8x2xf32>
    %584 = tpu.matmul %582, %583, %cst_108 {dimension_numbers = #tpu.dot_dimension_numbers<[1], [0], [0], [1], [0, 0, 1, 1], [], []>} : vector<8x64xf32>, vector<64x2xf32>, vector<8x2xf32> -> vector<8x2xf32>
    %c0_109 = arith.constant 0 : index
    %c0_110 = arith.constant 0 : index
    %585 = vector.load %arg11[%c0_109, %c0_110] : memref<1x2xf32, #tpu.memory_space<vmem>>, vector<1x2xf32>
    %586 = vector.broadcast %585 : vector<1x2xf32> to vector<8x2xf32>
    %587 = arith.addf %584, %586 : vector<8x2xf32>
    %cst_111 = arith.constant dense<0xFF800000> : vector<8xf32>
    %588 = vector.multi_reduction <maximumf>, %587, %cst_111 [1] : vector<8x2xf32> to vector<8xf32>
    %589 = vector.shape_cast %588 : vector<8xf32> to vector<8x1xf32>
    %590 = vector.broadcast %589 : vector<8x1xf32> to vector<8x2xf32>
    %591 = arith.subf %587, %590 : vector<8x2xf32>
    %592 = math.exp %591 : vector<8x2xf32>
    %cst_112 = arith.constant dense<0.000000e+00> : vector<8xf32>
    %593 = vector.multi_reduction <add>, %592, %cst_112 [1] : vector<8x2xf32> to vector<8xf32>
    %594 = vector.shape_cast %593 : vector<8xf32> to vector<8x1xf32>
    %595 = math.log %594 : vector<8x1xf32>
    %596 = vector.broadcast %595 : vector<8x1xf32> to vector<8x2xf32>
    %597 = arith.subf %591, %596 : vector<8x2xf32>
    %c0_113 = arith.constant 0 : index
    %c0_114 = arith.constant 0 : index
    %598 = vector.load %arg13[%c0_113, %c0_114] : memref<8x2xf32, #tpu.memory_space<vmem>>, vector<8x2xf32>
    tpu.vector_store %arg13[%c0_113, %c0_114], %597 {strides = array<i32>} : memref<8x2xf32, #tpu.memory_space<vmem>>, vector<8x2xf32>,
    return
  }
}

</mosaic_0001>

<llo_original>
// kernel: lstm_encoder_forward.1
$region0: #{lstm_encoder_forward.1}
  #allocation0 [shape = 'u32[]', space=smem, size = 0x4, offset = 0x4, fixed_abs, tag = 'smem constant byte address 0x4 - core index']
  #allocation1 [shape = 'u32[144,128]{1,0:T(1,128)}', space=vmem, size = 0x12000, scoped, tag = 'internal scratch']
  %s0 = inlined_call_operand.vmem [shape: bf16[64,32], index: 0, kind: input, shape index: {}]
  %s1 = inlined_call_operand.vmem [shape: bf16[32,128], index: 1, kind: input, shape index: {}]
  %s2 = inlined_call_operand.vmem [shape: bf16[32,128], index: 2, kind: input, shape index: {}]
  %s3 = inlined_call_operand.vmem [shape: f32[1,128], index: 3, kind: input, shape index: {}]
  %s4 = inlined_call_operand.vmem [shape: bf16[32,128], index: 4, kind: input, shape index: {}]
  %s5 = inlined_call_operand.vmem [shape: bf16[32,128], index: 5, kind: input, shape index: {}]
  %s6 = inlined_call_operand.vmem [shape: f32[1,128], index: 6, kind: input, shape index: {}]
  %s7 = inlined_call_operand.vmem [shape: bf16[32,256], index: 7, kind: input, shape index: {}]
  %s8 = inlined_call_operand.vmem [shape: bf16[64,256], index: 8, kind: input, shape index: {}]
  %s9 = inlined_call_operand.vmem [shape: f32[1,256], index: 9, kind: input, shape index: {}]
  %s10 = inlined_call_operand.vmem [shape: f32[64,2], index: 10, kind: input, shape index: {}]
  %s11 = inlined_call_operand.vmem [shape: f32[1,2], index: 11, kind: input, shape index: {}]
  %s12 = inlined_call_operand.vmem [shape: f32[8,8,32], index: 12, kind: output, shape index: {0}]
  %s13 = inlined_call_operand.vmem [shape: f32[8,2], index: 13, kind: output, shape index: {1}]
  %14 = xla_tuple %s12, %s13
  %s15 = sld [smem:[#allocation0]]
  $region66: #{lstm_encoder_forward.1} parent=0
    _
  %s17 = ssub.s32 1, %s15
  %s18 = scalar_select 0, %s17, %s15
  // Predicated region
  $region2: #{lstm_encoder_forward.1} parent=0 // pred_check
    _
  $region3: #{lstm_encoder_forward.1} parent=0 // pred_check_branch
    %20 = sbr.rel (0) target = $region5
  $region4: #{lstm_encoder_forward.1} parent=0 // pred_region
    _
  $region5: #{lstm_encoder_forward.1} parent=0 // pred_fallthru
    _
  // Predicated region
  $region6: #{lstm_encoder_forward.1} parent=0 // pred_check
    _
  $region7: #{lstm_encoder_forward.1} parent=0 // pred_check_branch
    %22 = sbr.rel (0) target = $region9
  $region8: #{lstm_encoder_forward.1} parent=0 // pred_region
    _
  $region9: #{lstm_encoder_forward.1} parent=0 // pred_fallthru
    _
  // Predicated region
  $region10: #{lstm_encoder_forward.1} parent=0 // pred_check
    _
  $region11: #{lstm_encoder_forward.1} parent=0 // pred_check_branch
    %24 = sbr.rel (0) target = $region13
  $region12: #{lstm_encoder_forward.1} parent=0 // pred_region
    _
  $region13: #{lstm_encoder_forward.1} parent=0 // pred_fallthru
    _
  // Predicated region
  $region14: #{lstm_encoder_forward.1} parent=0 // pred_check
    _
  $region15: #{lstm_encoder_forward.1} parent=0 // pred_check_branch
    %26 = sbr.rel (0) target = $region17
  $region16: #{lstm_encoder_forward.1} parent=0 // pred_region
    _
  $region17: #{lstm_encoder_forward.1} parent=0 // pred_fallthru
    _
  // Predicated region
  $region18: #{lstm_encoder_forward.1} parent=0 // pred_check
    _
  $region19: #{lstm_encoder_forward.1} parent=0 // pred_check_branch
    %28 = sbr.rel (0) target = $region21
  $region20: #{lstm_encoder_forward.1} parent=0 // pred_region
    _
  $region21: #{lstm_encoder_forward.1} parent=0 // pred_fallthru
    _
  // Predicated region
  $region22: #{lstm_encoder_forward.1} parent=0 // pred_check
    _
  $region23: #{lstm_encoder_forward.1} parent=0 // pred_check_branch
    %30 = sbr.rel (0) target = $region25
  $region24: #{lstm_encoder_forward.1} parent=0 // pred_region
    _
  $region25: #{lstm_encoder_forward.1} parent=0 // pred_fallthru
    _
  // Predicated region
  $region26: #{lstm_encoder_forward.1} parent=0 // pred_check
    _
  $region27: #{lstm_encoder_forward.1} parent=0 // pred_check_branch
    %32 = sbr.rel (0) target = $region29
  $region28: #{lstm_encoder_forward.1} parent=0 // pred_region
    _
  $region29: #{lstm_encoder_forward.1} parent=0 // pred_fallthru
    _
  // Predicated region
  $region30: #{lstm_encoder_forward.1} parent=0 // pred_check
    _
  $region31: #{lstm_encoder_forward.1} parent=0 // pred_check_branch
    %34 = sbr.rel (0) target = $region33
  $region32: #{lstm_encoder_forward.1} parent=0 // pred_region
    _
  $region33: #{lstm_encoder_forward.1} parent=0 // pred_fallthru
    _
  // Predicated region
  $region34: #{lstm_encoder_forward.1} parent=0 // pred_check
    _
  $region35: #{lstm_encoder_forward.1} parent=0 // pred_check_branch
    %36 = sbr.rel (0) target = $region37
  $region36: #{lstm_encoder_forward.1} parent=0 // pred_region
    _
  $region37: #{lstm_encoder_forward.1} parent=0 // pred_fallthru
    _
  // Predicated region
  $region38: #{lstm_encoder_forward.1} parent=0 // pred_check
    _
  $region39: #{lstm_encoder_forward.1} parent=0 // pred_check_branch
    %38 = sbr.rel (0) target = $region41
  $region40: #{lstm_encoder_forward.1} parent=0 // pred_region
    _
  $region41: #{lstm_encoder_forward.1} parent=0 // pred_fallthru
    _
  // Predicated region
  $region42: #{lstm_encoder_forward.1} parent=0 // pred_check
    _
  $region43: #{lstm_encoder_forward.1} parent=0 // pred_check_branch
    %40 = sbr.rel (0) target = $region45
  $region44: #{lstm_encoder_forward.1} parent=0 // pred_region
    _
  $region45: #{lstm_encoder_forward.1} parent=0 // pred_fallthru
    _
  // Predicated region
  $region46: #{lstm_encoder_forward.1} parent=0 // pred_check
    _
  $region47: #{lstm_encoder_forward.1} parent=0 // pred_check_branch
    %42 = sbr.rel (0) target = $region49
  $region48: #{lstm_encoder_forward.1} parent=0 // pred_region
    _
  $region49: #{lstm_encoder_forward.1} parent=0 // pred_fallthru
    _
  %v44 = vld [vmem:[%s1] sm:$0xf]
  %v45 = vld [vmem:[%s1 + $0x4] sm:$0xf]
  %v46 = vld [vmem:[%s1 + $0x8] sm:$0xf]
  %v47 = vld [vmem:[%s1 + $0xc] sm:$0xf]
  %v48 = vld [vmem:[%s2] sm:$0xf]
  %v49 = vld [vmem:[%s2 + $0x4] sm:$0xf]
  %v50 = vld [vmem:[%s2 + $0x8] sm:$0xf]
  %v51 = vld [vmem:[%s2 + $0xc] sm:$0xf]
  %v52 = vld [vmem:[%s3] sm:$0x1]
  %v53 = vld [vmem:[%s4] sm:$0xf]
  %v54 = vld [vmem:[%s4 + $0x4] sm:$0xf]
  %v55 = vld [vmem:[%s4 + $0x8] sm:$0xf]
  %v56 = vld [vmem:[%s4 + $0xc] sm:$0xf]
  %v57 = vld [vmem:[%s5] sm:$0xf]
  %v58 = vld [vmem:[%s5 + $0x4] sm:$0xf]
  %v59 = vld [vmem:[%s5 + $0x8] sm:$0xf]
  %v60 = vld [vmem:[%s5 + $0xc] sm:$0xf]
  %v61 = vld [vmem:[%s6] sm:$0x1]
  %v62 = vld [vmem:[%s7] sm:$0xff]
  %v63 = vld [vmem:[%s7 + $0x8] sm:$0xff]
  %v64 = vld [vmem:[%s7 + $0x10] sm:$0xff]
  %v65 = vld [vmem:[%s7 + $0x18] sm:$0xff]
  %v66 = vld [vmem:[%s8] sm:$0xff]
  %v67 = vld [vmem:[%s8 + $0x8] sm:$0xff]
  %v68 = vld [vmem:[%s8 + $0x10] sm:$0xff]
  %v69 = vld [vmem:[%s8 + $0x18] sm:$0xff]
  %v70 = vld [vmem:[%s8 + $0x20] sm:$0xff]
  %v71 = vld [vmem:[%s8 + $0x28] sm:$0xff]
  %v72 = vld [vmem:[%s8 + $0x30] sm:$0xff]
  %v73 = vld [vmem:[%s8 + $0x38] sm:$0xff]
  %v74 = vld [vmem:[%s9] sm:$0x3]
  %v75 = vld [vmem:[%s0] sm:$0xf]
  %v76 = vld [vmem:[%s0 + $0x4] sm:$0xf]
  %v77 = vld [vmem:[%s0 + $0x8] sm:$0xf]
  %v78 = vld [vmem:[%s0 + $0xc] sm:$0xf]
  %v79 = vld [vmem:[%s0 + $0x10] sm:$0xf]
  %v80 = vld [vmem:[%s0 + $0x14] sm:$0xf]
  %v81 = vld [vmem:[%s0 + $0x18] sm:$0xf]
  %v82 = vld [vmem:[%s0 + $0x1c] sm:$0xf]
  %v84 = vlaneseq
  %v85 = vshrl.u32 %v84, 7
  %v86 = vsub.s32 0, %v85
  %v87 = vrot.slane %v52, %v86
  %v97 = vunpack.c.l.b16 %v75
  %v98 = vunpack.c.l.b16 %v76
  %v99 = vunpack.c.l.b16 %v77
  %v100 = vunpack.c.l.b16 %v78
  %v101 = vunpack.c.l.b16 %v79
  %v102 = vunpack.c.l.b16 %v80
  %v103 = vunpack.c.l.b16 %v81
  %v104 = vunpack.c.l.b16 %v82
  %v105 = vpack.c.b16 %v98, %v97
  %v106 = vpack.c.b16 %v100, %v99
  %v107 = vpack.c.b16 %v102, %v101
  %v108 = vpack.c.b16 %v104, %v103
  %v113 = vunpack.c.l.b16 %v44
  %v114 = vunpack.c.l.b16 %v45
  %v115 = vunpack.c.l.b16 %v46
  %v116 = vunpack.c.l.b16 %v47
  %v117 = vpack.c.b16 %v114, %v113
  %v118 = vpack.c.b16 %v116, %v115
  %vm121 = vcmask 261120
  %v123 = vsel %vm121, %v105, 0
  %v126 = vsel %vm121, %v106, 0
  %v129 = vsel %vm121, %v107, 0
  %v132 = vsel %vm121, %v108, 0
  %134 = vmatprep.subr.bf16.mxu0 0
  %135 = vmatpush1.bf16.msra.mxu0 %v117
  %136 = vmatprep.subr.bf16.mxu0 0
  %137 = vmatpush1.bf16.msra.mxu0 %v118
  %138 = vmatprep.subr.bf16.mxu0 0
  %139 = vmatpush1.bf16.msra.mxu0 0
  %140 = vmatprep.subr.bf16.mxu0 0
  %141 = vmatpush1.bf16.msra.mxu0 0
  %142 = vmatprep.subr.bf16.mxu0 0
  %143 = vmatpush1.bf16.msra.mxu0 0
  %144 = vmatprep.subr.bf16.mxu0 0
  %145 = vmatpush1.bf16.msra.mxu0 0
  %146 = vmatprep.subr.bf16.mxu0 0
  %147 = vmatpush1.bf16.msra.mxu0 0
  %148 = vmatprep.subr.bf16.mxu0 0
  %149 = vmatpush1.bf16.msra.mxu0 0
  %150 = vmatprep.subr.bf16.mxu0 0
  %151 = vmatpush1.bf16.msra.mxu0 0
  %152 = vmatprep.subr.bf16.mxu0 0
  %153 = vmatpush1.bf16.msra.mxu0 0
  %154 = vmatprep.subr.bf16.mxu0 0
  %155 = vmatpush1.bf16.msra.mxu0 0
  %156 = vmatprep.subr.bf16.mxu0 0
  %157 = vmatpush1.bf16.msra.mxu0 0
  %158 = vmatprep.subr.bf16.mxu0 0
  %159 = vmatpush1.bf16.msra.mxu0 0
  %160 = vmatprep.subr.bf16.mxu0 0
  %161 = vmatpush1.bf16.msra.mxu0 0
  %162 = vmatprep.subr.bf16.mxu0 0
  %163 = vmatpush1.bf16.msra.mxu0 0
  %164 = vmatprep.subr.bf16.mxu0 0
  %165 = vmatpush1.bf16.msra.mxu0 0
  %166 = vmatprep.mubr.bf16.mxu0 0
  %167 = vmatmul.mubr.bf16.gmra.mrb[0].mxu0 %v123
  %v168 = vpop.f32.mrb[0].mxu0
  %v169 = vadd.f32 %v87, %v168
  %v170 = vpop.f32.mrb[0].mxu0
  %v171 = vpop.f32.mrb[0].mxu0
  %v172 = vadd.f32 %v87, %v171
  %v173 = vpop.f32.mrb[0].mxu0
  %174 = vmatprep.mubr.bf16.mxu0 0
  %175 = vmatmul.mubr.bf16.gmra.mrb[0].mxu0 %v126
  %v176 = vpop.f32.mrb[0].mxu0
  %v177 = vadd.f32 %v87, %v176
  %v178 = vpop.f32.mrb[0].mxu0
  %v179 = vpop.f32.mrb[0].mxu0
  %v180 = vadd.f32 %v87, %v179
  %v181 = vpop.f32.mrb[0].mxu0
  %182 = vmatprep.mubr.bf16.mxu0 0
  %183 = vmatmul.mubr.bf16.gmra.mrb[0].mxu0 %v129
  %v184 = vpop.f32.mrb[0].mxu0
  %v185 = vadd.f32 %v87, %v184
  %v186 = vpop.f32.mrb[0].mxu0
  %v187 = vpop.f32.mrb[0].mxu0
  %v188 = vadd.f32 %v87, %v187
  %v189 = vpop.f32.mrb[0].mxu0
  %190 = vmatprep.mubr.bf16.mxu0 0
  %191 = vmatmul.mubr.bf16.gmra.mrb[0].mxu0 %v132
  %v192 = vpop.f32.mrb[0].mxu0
  %v193 = vadd.f32 %v87, %v192
  %v194 = vpop.f32.mrb[0].mxu0
  %v195 = vpop.f32.mrb[0].mxu0
  %v196 = vadd.f32 %v87, %v195
  %v197 = vpop.f32.mrb[0].mxu0
  %198 = vdwg.mxu0
  %v199 = vlaneseq
  %v200 = vand.u32 %v199, 127
  %vm201 = vcmp.ge.s32.totalorder %v200, 64
  %vm202 = vcmp.lt.s32.totalorder %v200, 96
  %vm203 = vmand %vm201, %vm202
  %v204 = vadd.s32 %v200, 128
  %vm205 = vcmp.ge.s32.totalorder %v200, 128
  %vm206 = vcmp.ge.s32.totalorder %v204, 128
  %vm207 = vcmp.lt.s32.totalorder %v200, 192
  %vm208 = vcmp.lt.s32.totalorder %v204, 192
  %vm209 = vmand %vm205, %vm207
  %vm210 = vmand %vm206, %vm208
  %v215 = vunpack.c.l.b16 %v48
  %v216 = vunpack.c.l.b16 %v49
  %v217 = vunpack.c.l.b16 %v50
  %v218 = vunpack.c.l.b16 %v51
  %v219 = vpack.c.b16 %v216, %v215
  %v220 = vpack.c.b16 %v218, %v217
  %v224 = vsel %vm121, 0, 0
  %226 = vmatprep.subr.bf16.mxu0 0
  %227 = vmatpush1.bf16.msra.mxu0 %v219
  %228 = vmatprep.subr.bf16.mxu0 0
  %229 = vmatpush1.bf16.msra.mxu0 %v220
  %230 = vmatprep.subr.bf16.mxu0 0
  %231 = vmatpush1.bf16.msra.mxu0 0
  %232 = vmatprep.subr.bf16.mxu0 0
  %233 = vmatpush1.bf16.msra.mxu0 0
  %234 = vmatprep.subr.bf16.mxu0 0
  %235 = vmatpush1.bf16.msra.mxu0 0
  %236 = vmatprep.subr.bf16.mxu0 0
  %237 = vmatpush1.bf16.msra.mxu0 0
  %238 = vmatprep.subr.bf16.mxu0 0
  %239 = vmatpush1.bf16.msra.mxu0 0
  %240 = vmatprep.subr.bf16.mxu0 0
  %241 = vmatpush1.bf16.msra.mxu0 0
  %242 = vmatprep.subr.bf16.mxu0 0
  %243 = vmatpush1.bf16.msra.mxu0 0
  %244 = vmatprep.subr.bf16.mxu0 0
  %245 = vmatpush1.bf16.msra.mxu0 0
  %246 = vmatprep.subr.bf16.mxu0 0
  %247 = vmatpush1.bf16.msra.mxu0 0
  %248 = vmatprep.subr.bf16.mxu0 0
  %249 = vmatpush1.bf16.msra.mxu0 0
  %250 = vmatprep.subr.bf16.mxu0 0
  %251 = vmatpush1.bf16.msra.mxu0 0
  %252 = vmatprep.subr.bf16.mxu0 0
  %253 = vmatpush1.bf16.msra.mxu0 0
  %254 = vmatprep.subr.bf16.mxu0 0
  %255 = vmatpush1.bf16.msra.mxu0 0
  %256 = vmatprep.subr.bf16.mxu0 0
  %257 = vmatpush1.bf16.msra.mxu0 0
  %258 = vmatprep.mubr.bf16.mxu0 0
  %259 = vmatmul.mubr.bf16.gmra.mrb[0].mxu0 %v224
  %v260 = vpop.f32.mrb[0].mxu0
  %v261 = vadd.f32 0.0, %v260
  %v262 = vpop.f32.mrb[0].mxu0
  %v263 = vpop.f32.mrb[0].mxu0
  %v264 = vpop.f32.mrb[0].mxu0
  %265 = vdwg.mxu0
  %v266 = vadd.f32 %v169, %v261
  %v267 = vtanh.pop %v266
  %v268 = vxor.u32 %v266, 2147483648
  %v269 = vmul.f32 %v268, 1.442695
  %v270 = vpow.pop %v269
  %v271 = vadd.f32 %v270, 1.0
  %v272 = vrcp.pop %v271
  %v273 = vmul.f32 1.0, %v272
  %v274 = vsel %vm203, %v267, %v273
  %v275 = vmul.f32 %v274, 0.0
  %277 = vrot.lane.b32.xlu0 %v274, 64
  %v278 = vpop.permute.xlu0 %277
  %v280 = vmul.f32 %v274, %v278
  %282 = vrot.lane.b32.xlu0 %v280, 32
  %v283 = vpop.permute.xlu0 %282
  %v285 = vadd.f32 %v275, %v283
  %v286 = vtanh.pop %v285
  %288 = vrot.lane.b32.xlu0 %v286, 64
  %v289 = vpop.permute.xlu0 %288
  %v291 = vmul.f32 %v274, %v289
  %v292 = vpack.c.bf16 %v291, %v291
  %v294 = vlaneseq
  %v295 = vshrl.u32 %v294, 7
  %v296 = vsub.s32 0, %v295
  %v297 = vrot.slane %v61, %v296
  %300 = vrot.lane.b32.xlu0 %v292, 32
  %v301 = vpop.permute.xlu0 %300
  %v306 = vunpack.c.l.b16 %v53
  %v307 = vunpack.c.l.b16 %v54
  %v308 = vunpack.c.l.b16 %v55
  %v309 = vunpack.c.l.b16 %v56
  %v310 = vpack.c.b16 %v307, %v306
  %v311 = vpack.c.b16 %v309, %v308
  %v315 = vsel %vm121, %v301, 0
  %317 = vmatprep.subr.bf16.mxu0 0
  %318 = vmatpush1.bf16.msra.mxu0 %v310
  %319 = vmatprep.subr.bf16.mxu0 0
  %320 = vmatpush1.bf16.msra.mxu0 %v311
  %321 = vmatprep.subr.bf16.mxu0 0
  %322 = vmatpush1.bf16.msra.mxu0 0
  %323 = vmatprep.subr.bf16.mxu0 0
  %324 = vmatpush1.bf16.msra.mxu0 0
  %325 = vmatprep.subr.bf16.mxu0 0
  %326 = vmatpush1.bf16.msra.mxu0 0
  %327 = vmatprep.subr.bf16.mxu0 0
  %328 = vmatpush1.bf16.msra.mxu0 0
  %329 = vmatprep.subr.bf16.mxu0 0
  %330 = vmatpush1.bf16.msra.mxu0 0
  %331 = vmatprep.subr.bf16.mxu0 0
  %332 = vmatpush1.bf16.msra.mxu0 0
  %333 = vmatprep.subr.bf16.mxu0 0
  %334 = vmatpush1.bf16.msra.mxu0 0
  %335 = vmatprep.subr.bf16.mxu0 0
  %336 = vmatpush1.bf16.msra.mxu0 0
  %337 = vmatprep.subr.bf16.mxu0 0
  %338 = vmatpush1.bf16.msra.mxu0 0
  %339 = vmatprep.subr.bf16.mxu0 0
  %340 = vmatpush1.bf16.msra.mxu0 0
  %341 = vmatprep.subr.bf16.mxu0 0
  %342 = vmatpush1.bf16.msra.mxu0 0
  %343 = vmatprep.subr.bf16.mxu0 0
  %344 = vmatpush1.bf16.msra.mxu0 0
  %345 = vmatprep.subr.bf16.mxu0 0
  %346 = vmatpush1.bf16.msra.mxu0 0
  %347 = vmatprep.subr.bf16.mxu0 0
  %348 = vmatpush1.bf16.msra.mxu0 0
  %349 = vmatprep.mubr.bf16.mxu0 0
  %350 = vmatmul.mubr.bf16.gmra.mrb[0].mxu0 %v315
  %v351 = vpop.f32.mrb[0].mxu0
  %v352 = vadd.f32 %v297, %v351
  %v353 = vpop.f32.mrb[0].mxu0
  %v354 = vpop.f32.mrb[0].mxu0
  %v355 = vpop.f32.mrb[0].mxu0
  %356 = vdwg.mxu0
  %v361 = vunpack.c.l.b16 %v57
  %v362 = vunpack.c.l.b16 %v58
  %v363 = vunpack.c.l.b16 %v59
  %v364 = vunpack.c.l.b16 %v60
  %v365 = vpack.c.b16 %v362, %v361
  %v366 = vpack.c.b16 %v364, %v363
  %369 = vmatprep.subr.bf16.mxu0 0
  %370 = vmatpush1.bf16.msra.mxu0 %v365
  %371 = vmatprep.subr.bf16.mxu0 0
  %372 = vmatpush1.bf16.msra.mxu0 %v366
  %373 = vmatprep.subr.bf16.mxu0 0
  %374 = vmatpush1.bf16.msra.mxu0 0
  %375 = vmatprep.subr.bf16.mxu0 0
  %376 = vmatpush1.bf16.msra.mxu0 0
  %377 = vmatprep.subr.bf16.mxu0 0
  %378 = vmatpush1.bf16.msra.mxu0 0
  %379 = vmatprep.subr.bf16.mxu0 0
  %380 = vmatpush1.bf16.msra.mxu0 0
  %381 = vmatprep.subr.bf16.mxu0 0
  %382 = vmatpush1.bf16.msra.mxu0 0
  %383 = vmatprep.subr.bf16.mxu0 0
  %384 = vmatpush1.bf16.msra.mxu0 0
  %385 = vmatprep.subr.bf16.mxu0 0
  %386 = vmatpush1.bf16.msra.mxu0 0
  %387 = vmatprep.subr.bf16.mxu0 0
  %388 = vmatpush1.bf16.msra.mxu0 0
  %389 = vmatprep.subr.bf16.mxu0 0
  %390 = vmatpush1.bf16.msra.mxu0 0
  %391 = vmatprep.subr.bf16.mxu0 0
  %392 = vmatpush1.bf16.msra.mxu0 0
  %393 = vmatprep.subr.bf16.mxu0 0
  %394 = vmatpush1.bf16.msra.mxu0 0
  %395 = vmatprep.subr.bf16.mxu0 0
  %396 = vmatpush1.bf16.msra.mxu0 0
  %397 = vmatprep.subr.bf16.mxu0 0
  %398 = vmatpush1.bf16.msra.mxu0 0
  %399 = vmatprep.subr.bf16.mxu0 0
  %400 = vmatpush1.bf16.msra.mxu0 0
  %401 = vmatprep.mubr.bf16.mxu0 0
  %402 = vmatmul.mubr.bf16.gmra.mrb[0].mxu0 %v224
  %v403 = vpop.f32.mrb[0].mxu0
  %v404 = vadd.f32 0.0, %v403
  %v405 = vpop.f32.mrb[0].mxu0
  %v406 = vpop.f32.mrb[0].mxu0
  %v407 = vpop.f32.mrb[0].mxu0
  %408 = vdwg.mxu0
  %v409 = vadd.f32 %v352, %v404
  %v410 = vtanh.pop %v409
  %v411 = vxor.u32 %v409, 2147483648
  %v412 = vmul.f32 %v411, 1.442695
  %v413 = vpow.pop %v412
  %v414 = vadd.f32 %v413, 1.0
  %v415 = vrcp.pop %v414
  %v416 = vmul.f32 1.0, %v415
  %v417 = vsel %vm203, %v410, %v416
  %v418 = vmul.f32 %v417, 0.0
  %420 = vrot.lane.b32.xlu0 %v417, 64
  %v421 = vpop.permute.xlu0 %420
  %v423 = vmul.f32 %v417, %v421
  %425 = vrot.lane.b32.xlu0 %v423, 32
  %v426 = vpop.permute.xlu0 %425
  %v428 = vadd.f32 %v418, %v426
  %v429 = vtanh.pop %v428
  %431 = vrot.lane.b32.xlu0 %v429, 64
  %v432 = vpop.permute.xlu0 %431
  %v434 = vmul.f32 %v417, %v432
  %436 = vrot.lane.b32.xlu0 %v434, 32
  %v437 = vpop.permute.xlu0 %436
  %439 = vst.msk [vmem:[%s12] sm:$0xff] %vm121, %v437
  %v440 = vpack.c.bf16 %v434, %v434
  %v442 = vlaneseq
  %v443 = vshrl.u32 %v442, 7
  %v444 = vsub.s32 0, %v443
  %v445 = vrot.slane %v74, %v444
  %v446 = vlaneseq
  %v447 = vshrl.u32 %v446, 7
  %v448 = vsub.s32 1, %v447
  %v449 = vrot.slane %v74, %v448
  %453 = vrot.lane.b32.xlu0 %v440, 32
  %v454 = vpop.permute.xlu0 %453
  %v459 = vunpack.c.l.b16 %v62
  %v460 = vunpack.c.h.b16 %v62
  %v461 = vunpack.c.l.b16 %v63
  %v462 = vunpack.c.h.b16 %v63
  %v463 = vunpack.c.l.b16 %v64
  %v464 = vunpack.c.h.b16 %v64
  %v465 = vunpack.c.l.b16 %v65
  %v466 = vunpack.c.h.b16 %v65
  %v467 = vpack.c.b16 %v461, %v459
  %v468 = vpack.c.b16 %v462, %v460
  %v469 = vpack.c.b16 %v465, %v463
  %v470 = vpack.c.b16 %v466, %v464
  %v476 = vsel %vm121, %v454, 0
  %478 = vmatprep.subr.bf16.mxu0 %v468
  %479 = vmatpush1.bf16.msra.mxu0 %v467
  %480 = vmatprep.subr.bf16.mxu0 %v470
  %481 = vmatpush1.bf16.msra.mxu0 %v469
  %482 = vmatprep.subr.bf16.mxu0 0
  %483 = vmatpush1.bf16.msra.mxu0 0
  %484 = vmatprep.subr.bf16.mxu0 0
  %485 = vmatpush1.bf16.msra.mxu0 0
  %486 = vmatprep.subr.bf16.mxu0 0
  %487 = vmatpush1.bf16.msra.mxu0 0
  %488 = vmatprep.subr.bf16.mxu0 0
  %489 = vmatpush1.bf16.msra.mxu0 0
  %490 = vmatprep.subr.bf16.mxu0 0
  %491 = vmatpush1.bf16.msra.mxu0 0
  %492 = vmatprep.subr.bf16.mxu0 0
  %493 = vmatpush1.bf16.msra.mxu0 0
  %494 = vmatprep.subr.bf16.mxu0 0
  %495 = vmatpush1.bf16.msra.mxu0 0
  %496 = vmatprep.subr.bf16.mxu0 0
  %497 = vmatpush1.bf16.msra.mxu0 0
  %498 = vmatprep.subr.bf16.mxu0 0
  %499 = vmatpush1.bf16.msra.mxu0 0
  %500 = vmatprep.subr.bf16.mxu0 0
  %501 = vmatpush1.bf16.msra.mxu0 0
  %502 = vmatprep.subr.bf16.mxu0 0
  %503 = vmatpush1.bf16.msra.mxu0 0
  %504 = vmatprep.subr.bf16.mxu0 0
  %505 = vmatpush1.bf16.msra.mxu0 0
  %506 = vmatprep.subr.bf16.mxu0 0
  %507 = vmatpush1.bf16.msra.mxu0 0
  %508 = vmatprep.subr.bf16.mxu0 0
  %509 = vmatpush1.bf16.msra.mxu0 0
  %510 = vmatprep.mubr.bf16.mxu0 0
  %511 = vmatmul.mubr.bf16.gmra.mrb[0].mxu0 %v476
  %v512 = vpop.f32.mrb[0].mxu0
  %v513 = vadd.f32 %v445, %v512
  %v514 = vpop.f32.mrb[0].mxu0
  %v515 = vadd.f32 %v449, %v514
  %v516 = vpop.f32.mrb[0].mxu0
  %v517 = vpop.f32.mrb[0].mxu0
  %518 = vdwg.mxu0
  %v527 = vunpack.c.l.b16 %v66
  %v528 = vunpack.c.h.b16 %v66
  %v529 = vunpack.c.l.b16 %v67
  %v530 = vunpack.c.h.b16 %v67
  %v531 = vunpack.c.l.b16 %v68
  %v532 = vunpack.c.h.b16 %v68
  %v533 = vunpack.c.l.b16 %v69
  %v534 = vunpack.c.h.b16 %v69
  %v535 = vunpack.c.l.b16 %v70
  %v536 = vunpack.c.h.b16 %v70
  %v537 = vunpack.c.l.b16 %v71
  %v538 = vunpack.c.h.b16 %v71
  %v539 = vunpack.c.l.b16 %v72
  %v540 = vunpack.c.h.b16 %v72
  %v541 = vunpack.c.l.b16 %v73
  %v542 = vunpack.c.h.b16 %v73
  %v543 = vpack.c.b16 %v529, %v527
  %v544 = vpack.c.b16 %v530, %v528
  %v545 = vpack.c.b16 %v533, %v531
  %v546 = vpack.c.b16 %v534, %v532
  %v547 = vpack.c.b16 %v537, %v535
  %v548 = vpack.c.b16 %v538, %v536
  %v549 = vpack.c.b16 %v541, %v539
  %v550 = vpack.c.b16 %v542, %v540
  %vm559 = vcmask 523264
  %v560 = vsel %vm559, 0, 0
  %562 = vmatprep.subr.bf16.mxu0 %v544
  %563 = vmatpush1.bf16.msra.mxu0 %v543
  %564 = vmatprep.subr.bf16.mxu0 %v546
  %565 = vmatpush1.bf16.msra.mxu0 %v545
  %566 = vmatprep.subr.bf16.mxu0 %v548
  %567 = vmatpush1.bf16.msra.mxu0 %v547
  %568 = vmatprep.subr.bf16.mxu0 %v550
  %569 = vmatpush1.bf16.msra.mxu0 %v549
  %570 = vmatprep.subr.bf16.mxu0 0
  %571 = vmatpush1.bf16.msra.mxu0 0
  %572 = vmatprep.subr.bf16.mxu0 0
  %573 = vmatpush1.bf16.msra.mxu0 0
  %574 = vmatprep.subr.bf16.mxu0 0
  %575 = vmatpush1.bf16.msra.mxu0 0
  %576 = vmatprep.subr.bf16.mxu0 0
  %577 = vmatpush1.bf16.msra.mxu0 0
  %578 = vmatprep.subr.bf16.mxu0 0
  %579 = vmatpush1.bf16.msra.mxu0 0
  %580 = vmatprep.subr.bf16.mxu0 0
  %581 = vmatpush1.bf16.msra.mxu0 0
  %582 = vmatprep.subr.bf16.mxu0 0
  %583 = vmatpush1.bf16.msra.mxu0 0
  %584 = vmatprep.subr.bf16.mxu0 0
  %585 = vmatpush1.bf16.msra.mxu0 0
  %586 = vmatprep.subr.bf16.mxu0 0
  %587 = vmatpush1.bf16.msra.mxu0 0
  %588 = vmatprep.subr.bf16.mxu0 0
  %589 = vmatpush1.bf16.msra.mxu0 0
  %590 = vmatprep.subr.bf16.mxu0 0
  %591 = vmatpush1.bf16.msra.mxu0 0
  %592 = vmatprep.subr.bf16.mxu0 0
  %593 = vmatpush1.bf16.msra.mxu0 0
  %594 = vmatprep.mubr.bf16.mxu0 0
  %595 = vmatmul.mubr.bf16.gmra.mrb[0].mxu0 %v560
  %v596 = vpop.f32.mrb[0].mxu0
  %v597 = vadd.f32 0.0, %v596
  %v598 = vpop.f32.mrb[0].mxu0
  %v599 = vadd.f32 0.0, %v598
  %v600 = vpop.f32.mrb[0].mxu0
  %v601 = vpop.f32.mrb[0].mxu0
  %602 = vdwg.mxu0
  %v603 = vadd.f32 %v513, %v597
  %v604 = vadd.f32 %v515, %v599
  %v605 = vtanh.pop %v603
  %v606 = vtanh.pop %v604
  %v607 = vxor.u32 %v603, 2147483648
  %v608 = vxor.u32 %v604, 2147483648
  %v609 = vmul.f32 %v607, 1.442695
  %v610 = vpow.pop %v609
  %v611 = vmul.f32 %v608, 1.442695
  %v612 = vpow.pop %v611
  %v613 = vadd.f32 %v610, 1.0
  %v614 = vadd.f32 %v612, 1.0
  %v615 = vrcp.pop %v613
  %v616 = vmul.f32 1.0, %v615
  %v617 = vrcp.pop %v614
  %v618 = vmul.f32 1.0, %v617
  %v619 = vsel %vm209, %v605, %v616
  %v620 = vsel %vm210, %v606, %v618
  %v621 = vmul.f32 %v619, 0.0
  %v622 = vmul.f32 %v619, %v620
  %624 = vrot.lane.b32.xlu0 %v622, 64
  %v625 = vpop.permute.xlu0 %624
  %v627 = vadd.f32 %v621, %v625
  %v628 = vtanh.pop %v627
  %v629 = vmul.f32 %v620, %v628
  %630 = vmatprep.subr.bf16.mxu0 0
  %631 = vmatpush1.bf16.msra.mxu0 %v219
  %632 = vmatprep.subr.bf16.mxu0 0
  %633 = vmatpush1.bf16.msra.mxu0 %v220
  %634 = vmatprep.subr.bf16.mxu0 0
  %635 = vmatpush1.bf16.msra.mxu0 0
  %636 = vmatprep.subr.bf16.mxu0 0
  %637 = vmatpush1.bf16.msra.mxu0 0
  %638 = vmatprep.subr.bf16.mxu0 0
  %639 = vmatpush1.bf16.msra.mxu0 0
  %640 = vmatprep.subr.bf16.mxu0 0
  %641 = vmatpush1.bf16.msra.mxu0 0
  %642 = vmatprep.subr.bf16.mxu0 0
  %643 = vmatpush1.bf16.msra.mxu0 0
  %644 = vmatprep.subr.bf16.mxu0 0
  %645 = vmatpush1.bf16.msra.mxu0 0
  %646 = vmatprep.subr.bf16.mxu0 0
  %647 = vmatpush1.bf16.msra.mxu0 0
  %648 = vmatprep.subr.bf16.mxu0 0
  %649 = vmatpush1.bf16.msra.mxu0 0
  %650 = vmatprep.subr.bf16.mxu0 0
  %651 = vmatpush1.bf16.msra.mxu0 0
  %652 = vmatprep.subr.bf16.mxu0 0
  %653 = vmatpush1.bf16.msra.mxu0 0
  %654 = vmatprep.subr.bf16.mxu0 0
  %655 = vmatpush1.bf16.msra.mxu0 0
  %656 = vmatprep.subr.bf16.mxu0 0
  %657 = vmatpush1.bf16.msra.mxu0 0
  %658 = vmatprep.subr.bf16.mxu0 0
  %659 = vmatpush1.bf16.msra.mxu0 0
  %660 = vmatprep.subr.bf16.mxu0 0
  %661 = vmatpush1.bf16.msra.mxu0 0
  %662 = vmatprep.mubr.bf16.mxu0 0
  %663 = vmatmul.mubr.bf16.gmra.mrb[0].mxu0 %v315
  %v664 = vpop.f32.mrb[0].mxu0
  %v665 = vadd.f32 0.0, %v664
  %v666 = vpop.f32.mrb[0].mxu0
  %v667 = vpop.f32.mrb[0].mxu0
  %v668 = vpop.f32.mrb[0].mxu0
  %669 = vdwg.mxu0
  %v670 = vadd.f32 %v172, %v665
  %v671 = vtanh.pop %v670
  %v672 = vxor.u32 %v670, 2147483648
  %v673 = vmul.f32 %v672, 1.442695
  %v674 = vpow.pop %v673
  %v675 = vadd.f32 %v674, 1.0
  %v676 = vrcp.pop %v675
  %v677 = vmul.f32 1.0, %v676
  %v678 = vsel %vm203, %v671, %v677
  %v679 = vmul.f32 %v678, %v285
  %681 = vrot.lane.b32.xlu0 %v678, 64
  %v682 = vpop.permute.xlu0 %681
  %v684 = vmul.f32 %v678, %v682
  %686 = vrot.lane.b32.xlu0 %v684, 32
  %v687 = vpop.permute.xlu0 %686
  %v689 = vadd.f32 %v679, %v687
  %v690 = vtanh.pop %v689
  %692 = vrot.lane.b32.xlu0 %v690, 64
  %v693 = vpop.permute.xlu0 %692
  %v695 = vmul.f32 %v678, %v693
  %v696 = vpack.c.bf16 %v695, %v695
  %698 = vrot.lane.b32.xlu0 %v696, 32
  %v699 = vpop.permute.xlu0 %698
  %v701 = vsel %vm121, %v699, 0
  %703 = vmatprep.subr.bf16.mxu0 0
  %704 = vmatpush1.bf16.msra.mxu0 %v310
  %705 = vmatprep.subr.bf16.mxu0 0
  %706 = vmatpush1.bf16.msra.mxu0 %v311
  %707 = vmatprep.subr.bf16.mxu0 0
  %708 = vmatpush1.bf16.msra.mxu0 0
  %709 = vmatprep.subr.bf16.mxu0 0
  %710 = vmatpush1.bf16.msra.mxu0 0
  %711 = vmatprep.subr.bf16.mxu0 0
  %712 = vmatpush1.bf16.msra.mxu0 0
  %713 = vmatprep.subr.bf16.mxu0 0
  %714 = vmatpush1.bf16.msra.mxu0 0
  %715 = vmatprep.subr.bf16.mxu0 0
  %716 = vmatpush1.bf16.msra.mxu0 0
  %717 = vmatprep.subr.bf16.mxu0 0
  %718 = vmatpush1.bf16.msra.mxu0 0
  %719 = vmatprep.subr.bf16.mxu0 0
  %720 = vmatpush1.bf16.msra.mxu0 0
  %721 = vmatprep.subr.bf16.mxu0 0
  %722 = vmatpush1.bf16.msra.mxu0 0
  %723 = vmatprep.subr.bf16.mxu0 0
  %724 = vmatpush1.bf16.msra.mxu0 0
  %725 = vmatprep.subr.bf16.mxu0 0
  %726 = vmatpush1.bf16.msra.mxu0 0
  %727 = vmatprep.subr.bf16.mxu0 0
  %728 = vmatpush1.bf16.msra.mxu0 0
  %729 = vmatprep.subr.bf16.mxu0 0
  %730 = vmatpush1.bf16.msra.mxu0 0
  %731 = vmatprep.subr.bf16.mxu0 0
  %732 = vmatpush1.bf16.msra.mxu0 0
  %733 = vmatprep.subr.bf16.mxu0 0
  %734 = vmatpush1.bf16.msra.mxu0 0
  %735 = vmatprep.mubr.bf16.mxu0 0
  %736 = vmatmul.mubr.bf16.gmra.mrb[0].mxu0 %v701
  %v737 = vpop.f32.mrb[0].mxu0
  %v738 = vadd.f32 %v297, %v737
  %v739 = vpop.f32.mrb[0].mxu0
  %v740 = vpop.f32.mrb[0].mxu0
  %v741 = vpop.f32.mrb[0].mxu0
  %742 = vdwg.mxu0
  %743 = vmatprep.subr.bf16.mxu0 0
  %744 = vmatpush1.bf16.msra.mxu0 %v365
  %745 = vmatprep.subr.bf16.mxu0 0
  %746 = vmatpush1.bf16.msra.mxu0 %v366
  %747 = vmatprep.subr.bf16.mxu0 0
  %748 = vmatpush1.bf16.msra.mxu0 0
  %749 = vmatprep.subr.bf16.mxu0 0
  %750 = vmatpush1.bf16.msra.mxu0 0
  %751 = vmatprep.subr.bf16.mxu0 0
  %752 = vmatpush1.bf16.msra.mxu0 0
  %753 = vmatprep.subr.bf16.mxu0 0
  %754 = vmatpush1.bf16.msra.mxu0 0
  %755 = vmatprep.subr.bf16.mxu0 0
  %756 = vmatpush1.bf16.msra.mxu0 0
  %757 = vmatprep.subr.bf16.mxu0 0
  %758 = vmatpush1.bf16.msra.mxu0 0
  %759 = vmatprep.subr.bf16.mxu0 0
  %760 = vmatpush1.bf16.msra.mxu0 0
  %761 = vmatprep.subr.bf16.mxu0 0
  %762 = vmatpush1.bf16.msra.mxu0 0
  %763 = vmatprep.subr.bf16.mxu0 0
  %764 = vmatpush1.bf16.msra.mxu0 0
  %765 = vmatprep.subr.bf16.mxu0 0
  %766 = vmatpush1.bf16.msra.mxu0 0
  %767 = vmatprep.subr.bf16.mxu0 0
  %768 = vmatpush1.bf16.msra.mxu0 0
  %769 = vmatprep.subr.bf16.mxu0 0
  %770 = vmatpush1.bf16.msra.mxu0 0
  %771 = vmatprep.subr.bf16.mxu0 0
  %772 = vmatpush1.bf16.msra.mxu0 0
  %773 = vmatprep.subr.bf16.mxu0 0
  %774 = vmatpush1.bf16.msra.mxu0 0
  %775 = vmatprep.mubr.bf16.mxu0 0
  %776 = vmatmul.mubr.bf16.gmra.mrb[0].mxu0 %v476
  %v777 = vpop.f32.mrb[0].mxu0
  %v778 = vadd.f32 0.0, %v777
  %v779 = vpop.f32.mrb[0].mxu0
  %v780 = vpop.f32.mrb[0].mxu0
  %v781 = vpop.f32.mrb[0].mxu0
  %782 = vdwg.mxu0
  %v783 = vadd.f32 %v738, %v778
  %v784 = vtanh.pop %v783
  %v785 = vxor.u32 %v783, 2147483648
  %v786 = vmul.f32 %v785, 1.442695
  %v787 = vpow.pop %v786
  %v788 = vadd.f32 %v787, 1.0
  %v789 = vrcp.pop %v788
  %v790 = vmul.f32 1.0, %v789
  %v791 = vsel %vm203, %v784, %v790
  %v792 = vmul.f32 %v791, %v428
  %794 = vrot.lane.b32.xlu0 %v791, 64
  %v795 = vpop.permute.xlu0 %794
  %v797 = vmul.f32 %v791, %v795
  %799 = vrot.lane.b32.xlu0 %v797, 32
  %v800 = vpop.permute.xlu0 %799
  %v802 = vadd.f32 %v792, %v800
  %v803 = vtanh.pop %v802
  %805 = vrot.lane.b32.xlu0 %v803, 64
  %v806 = vpop.permute.xlu0 %805
  %v808 = vmul.f32 %v791, %v806
  %810 = vrot.lane.b32.xlu0 %v808, 32
  %v811 = vpop.permute.xlu0 %810
  %s813 = scalar_lea.vmem %s12, 8
  %814 = vst.msk [vmem:[%s813] sm:$0xff] %vm121, %v811
  %v815 = vpack.c.bf16 %v808, %v808
  %817 = vrot.lane.b32.xlu0 %v815, 32
  %v818 = vpop.permute.xlu0 %817
  %v820 = vsel %vm121, %v818, 0
  %822 = vmatprep.subr.bf16.mxu0 %v468
  %823 = vmatpush1.bf16.msra.mxu0 %v467
  %824 = vmatprep.subr.bf16.mxu0 %v470
  %825 = vmatpush1.bf16.msra.mxu0 %v469
  %826 = vmatprep.subr.bf16.mxu0 0
  %827 = vmatpush1.bf16.msra.mxu0 0
  %828 = vmatprep.subr.bf16.mxu0 0
  %829 = vmatpush1.bf16.msra.mxu0 0
  %830 = vmatprep.subr.bf16.mxu0 0
  %831 = vmatpush1.bf16.msra.mxu0 0
  %832 = vmatprep.subr.bf16.mxu0 0
  %833 = vmatpush1.bf16.msra.mxu0 0
  %834 = vmatprep.subr.bf16.mxu0 0
  %835 = vmatpush1.bf16.msra.mxu0 0
  %836 = vmatprep.subr.bf16.mxu0 0
  %837 = vmatpush1.bf16.msra.mxu0 0
  %838 = vmatprep.subr.bf16.mxu0 0
  %839 = vmatpush1.bf16.msra.mxu0 0
  %840 = vmatprep.subr.bf16.mxu0 0
  %841 = vmatpush1.bf16.msra.mxu0 0
  %842 = vmatprep.subr.bf16.mxu0 0
  %843 = vmatpush1.bf16.msra.mxu0 0
  %844 = vmatprep.subr.bf16.mxu0 0
  %845 = vmatpush1.bf16.msra.mxu0 0
  %846 = vmatprep.subr.bf16.mxu0 0
  %847 = vmatpush1.bf16.msra.mxu0 0
  %848 = vmatprep.subr.bf16.mxu0 0
  %849 = vmatpush1.bf16.msra.mxu0 0
  %850 = vmatprep.subr.bf16.mxu0 0
  %851 = vmatpush1.bf16.msra.mxu0 0
  %852 = vmatprep.subr.bf16.mxu0 0
  %853 = vmatpush1.bf16.msra.mxu0 0
  %854 = vmatprep.mubr.bf16.mxu0 0
  %855 = vmatmul.mubr.bf16.gmra.mrb[0].mxu0 %v820
  %v856 = vpop.f32.mrb[0].mxu0
  %v857 = vadd.f32 %v445, %v856
  %v858 = vpop.f32.mrb[0].mxu0
  %v859 = vadd.f32 %v449, %v858
  %v860 = vpop.f32.mrb[0].mxu0
  %v861 = vpop.f32.mrb[0].mxu0
  %862 = vdwg.mxu0
  %v863 = vpack.c.bf16 %v629, %v629
  %865 = vrot.lane.b32.xlu0 %v863, 64
  %v866 = vpop.permute.xlu0 %865
  %v868 = vsel %vm559, %v866, 0
  %870 = vmatprep.subr.bf16.mxu0 %v544
  %871 = vmatpush1.bf16.msra.mxu0 %v543
  %872 = vmatprep.subr.bf16.mxu0 %v546
  %873 = vmatpush1.bf16.msra.mxu0 %v545
  %874 = vmatprep.subr.bf16.mxu0 %v548
  %875 = vmatpush1.bf16.msra.mxu0 %v547
  %876 = vmatprep.subr.bf16.mxu0 %v550
  %877 = vmatpush1.bf16.msra.mxu0 %v549
  %878 = vmatprep.subr.bf16.mxu0 0
  %879 = vmatpush1.bf16.msra.mxu0 0
  %880 = vmatprep.subr.bf16.mxu0 0
  %881 = vmatpush1.bf16.msra.mxu0 0
  %882 = vmatprep.subr.bf16.mxu0 0
  %883 = vmatpush1.bf16.msra.mxu0 0
  %884 = vmatprep.subr.bf16.mxu0 0
  %885 = vmatpush1.bf16.msra.mxu0 0
  %886 = vmatprep.subr.bf16.mxu0 0
  %887 = vmatpush1.bf16.msra.mxu0 0
  %888 = vmatprep.subr.bf16.mxu0 0
  %889 = vmatpush1.bf16.msra.mxu0 0
  %890 = vmatprep.subr.bf16.mxu0 0
  %891 = vmatpush1.bf16.msra.mxu0 0
  %892 = vmatprep.subr.bf16.mxu0 0
  %893 = vmatpush1.bf16.msra.mxu0 0
  %894 = vmatprep.subr.bf16.mxu0 0
  %895 = vmatpush1.bf16.msra.mxu0 0
  %896 = vmatprep.subr.bf16.mxu0 0
  %897 = vmatpush1.bf16.msra.mxu0 0
  %898 = vmatprep.subr.bf16.mxu0 0
  %899 = vmatpush1.bf16.msra.mxu0 0
  %900 = vmatprep.subr.bf16.mxu0 0
  %901 = vmatpush1.bf16.msra.mxu0 0
  %902 = vmatprep.mubr.bf16.mxu0 0
  %903 = vmatmul.mubr.bf16.gmra.mrb[0].mxu0 %v868
  %v904 = vpop.f32.mrb[0].mxu0
  %v905 = vadd.f32 0.0, %v904
  %v906 = vpop.f32.mrb[0].mxu0
  %v907 = vadd.f32 0.0, %v906
  %v908 = vpop.f32.mrb[0].mxu0
  %v909 = vpop.f32.mrb[0].mxu0
  %910 = vdwg.mxu0
  %v911 = vadd.f32 %v857, %v905
  %v912 = vadd.f32 %v859, %v907
  %v913 = vtanh.pop %v911
  %v914 = vtanh.pop %v912
  %v915 = vxor.u32 %v911, 2147483648
  %v916 = vxor.u32 %v912, 2147483648
  %v917 = vmul.f32 %v915, 1.442695
  %v918 = vpow.pop %v917
  %v919 = vmul.f32 %v916, 1.442695
  %v920 = vpow.pop %v919
  %v921 = vadd.f32 %v918, 1.0
  %v922 = vadd.f32 %v920, 1.0
  %v923 = vrcp.pop %v921
  %v924 = vmul.f32 1.0, %v923
  %v925 = vrcp.pop %v922
  %v926 = vmul.f32 1.0, %v925
  %v927 = vsel %vm209, %v913, %v924
  %v928 = vsel %vm210, %v914, %v926
  %v929 = vmul.f32 %v927, %v627
  %v930 = vmul.f32 %v927, %v928
  %932 = vrot.lane.b32.xlu0 %v930, 64
  %v933 = vpop.permute.xlu0 %932
  %v935 = vadd.f32 %v929, %v933
  %v936 = vtanh.pop %v935
  %v937 = vmul.f32 %v928, %v936
  %938 = vmatprep.subr.bf16.mxu0 0
  %939 = vmatpush1.bf16.msra.mxu0 %v219
  %940 = vmatprep.subr.bf16.mxu0 0
  %941 = vmatpush1.bf16.msra.mxu0 %v220
  %942 = vmatprep.subr.bf16.mxu0 0
  %943 = vmatpush1.bf16.msra.mxu0 0
  %944 = vmatprep.subr.bf16.mxu0 0
  %945 = vmatpush1.bf16.msra.mxu0 0
  %946 = vmatprep.subr.bf16.mxu0 0
  %947 = vmatpush1.bf16.msra.mxu0 0
  %948 = vmatprep.subr.bf16.mxu0 0
  %949 = vmatpush1.bf16.msra.mxu0 0
  %950 = vmatprep.subr.bf16.mxu0 0
  %951 = vmatpush1.bf16.msra.mxu0 0
  %952 = vmatprep.subr.bf16.mxu0 0
  %953 = vmatpush1.bf16.msra.mxu0 0
  %954 = vmatprep.subr.bf16.mxu0 0
  %955 = vmatpush1.bf16.msra.mxu0 0
  %956 = vmatprep.subr.bf16.mxu0 0
  %957 = vmatpush1.bf16.msra.mxu0 0
  %958 = vmatprep.subr.bf16.mxu0 0
  %959 = vmatpush1.bf16.msra.mxu0 0
  %960 = vmatprep.subr.bf16.mxu0 0
  %961 = vmatpush1.bf16.msra.mxu0 0
  %962 = vmatprep.subr.bf16.mxu0 0
  %963 = vmatpush1.bf16.msra.mxu0 0
  %964 = vmatprep.subr.bf16.mxu0 0
  %965 = vmatpush1.bf16.msra.mxu0 0
  %966 = vmatprep.subr.bf16.mxu0 0
  %967 = vmatpush1.bf16.msra.mxu0 0
  %968 = vmatprep.subr.bf16.mxu0 0
  %969 = vmatpush1.bf16.msra.mxu0 0
  %970 = vmatprep.mubr.bf16.mxu0 0
  %971 = vmatmul.mubr.bf16.gmra.mrb[0].mxu0 %v701
  %v972 = vpop.f32.mrb[0].mxu0
  %v973 = vadd.f32 0.0, %v972
  %v974 = vpop.f32.mrb[0].mxu0
  %v975 = vpop.f32.mrb[0].mxu0
  %v976 = vpop.f32.mrb[0].mxu0
  %977 = vdwg.mxu0
  %v978 = vadd.f32 %v177, %v973
  %v979 = vtanh.pop %v978
  %v980 = vxor.u32 %v978, 2147483648
  %v981 = vmul.f32 %v980, 1.442695
  %v982 = vpow.pop %v981
  %v983 = vadd.f32 %v982, 1.0
  %v984 = vrcp.pop %v983
  %v985 = vmul.f32 1.0, %v984
  %v986 = vsel %vm203, %v979, %v985
  %v987 = vmul.f32 %v986, %v689
  %989 = vrot.lane.b32.xlu0 %v986, 64
  %v990 = vpop.permute.xlu0 %989
  %v992 = vmul.f32 %v986, %v990
  %994 = vrot.lane.b32.xlu0 %v992, 32
  %v995 = vpop.permute.xlu0 %994
  %v997 = vadd.f32 %v987, %v995
  %v998 = vtanh.pop %v997
  %1000 = vrot.lane.b32.xlu0 %v998, 64
  %v1001 = vpop.permute.xlu0 %1000
  %v1003 = vmul.f32 %v986, %v1001
  %v1004 = vpack.c.bf16 %v1003, %v1003
  %1006 = vrot.lane.b32.xlu0 %v1004, 32
  %v1007 = vpop.permute.xlu0 %1006
  %v1009 = vsel %vm121, %v1007, 0
  %1011 = vmatprep.subr.bf16.mxu0 0
  %1012 = vmatpush1.bf16.msra.mxu0 %v310
  %1013 = vmatprep.subr.bf16.mxu0 0
  %1014 = vmatpush1.bf16.msra.mxu0 %v311
  %1015 = vmatprep.subr.bf16.mxu0 0
  %1016 = vmatpush1.bf16.msra.mxu0 0
  %1017 = vmatprep.subr.bf16.mxu0 0
  %1018 = vmatpush1.bf16.msra.mxu0 0
  %1019 = vmatprep.subr.bf16.mxu0 0
  %1020 = vmatpush1.bf16.msra.mxu0 0
  %1021 = vmatprep.subr.bf16.mxu0 0
  %1022 = vmatpush1.bf16.msra.mxu0 0
  %1023 = vmatprep.subr.bf16.mxu0 0
  %1024 = vmatpush1.bf16.msra.mxu0 0
  %1025 = vmatprep.subr.bf16.mxu0 0
  %1026 = vmatpush1.bf16.msra.mxu0 0
  %1027 = vmatprep.subr.bf16.mxu0 0
  %1028 = vmatpush1.bf16.msra.mxu0 0
  %1029 = vmatprep.subr.bf16.mxu0 0
  %1030 = vmatpush1.bf16.msra.mxu0 0
  %1031 = vmatprep.subr.bf16.mxu0 0
  %1032 = vmatpush1.bf16.msra.mxu0 0
  %1033 = vmatprep.subr.bf16.mxu0 0
  %1034 = vmatpush1.bf16.msra.mxu0 0
  %1035 = vmatprep.subr.bf16.mxu0 0
  %1036 = vmatpush1.bf16.msra.mxu0 0
  %1037 = vmatprep.subr.bf16.mxu0 0
  %1038 = vmatpush1.bf16.msra.mxu0 0
  %1039 = vmatprep.subr.bf16.mxu0 0
  %1040 = vmatpush1.bf16.msra.mxu0 0
  %1041 = vmatprep.subr.bf16.mxu0 0
  %1042 = vmatpush1.bf16.msra.mxu0 0
  %1043 = vmatprep.mubr.bf16.mxu0 0
  %1044 = vmatmul.mubr.bf16.gmra.mrb[0].mxu0 %v1009
  %v1045 = vpop.f32.mrb[0].mxu0
  %v1046 = vadd.f32 %v297, %v1045
  %v1047 = vpop.f32.mrb[0].mxu0
  %v1048 = vpop.f32.mrb[0].mxu0
  %v1049 = vpop.f32.mrb[0].mxu0
  %1050 = vdwg.mxu0
  %1051 = vmatprep.subr.bf16.mxu0 0
  %1052 = vmatpush1.bf16.msra.mxu0 %v365
  %1053 = vmatprep.subr.bf16.mxu0 0
  %1054 = vmatpush1.bf16.msra.mxu0 %v366
  %1055 = vmatprep.subr.bf16.mxu0 0
  %1056 = vmatpush1.bf16.msra.mxu0 0
  %1057 = vmatprep.subr.bf16.mxu0 0
  %1058 = vmatpush1.bf16.msra.mxu0 0
  %1059 = vmatprep.subr.bf16.mxu0 0
  %1060 = vmatpush1.bf16.msra.mxu0 0
  %1061 = vmatprep.subr.bf16.mxu0 0
  %1062 = vmatpush1.bf16.msra.mxu0 0
  %1063 = vmatprep.subr.bf16.mxu0 0
  %1064 = vmatpush1.bf16.msra.mxu0 0
  %1065 = vmatprep.subr.bf16.mxu0 0
  %1066 = vmatpush1.bf16.msra.mxu0 0
  %1067 = vmatprep.subr.bf16.mxu0 0
  %1068 = vmatpush1.bf16.msra.mxu0 0
  %1069 = vmatprep.subr.bf16.mxu0 0
  %1070 = vmatpush1.bf16.msra.mxu0 0
  %1071 = vmatprep.subr.bf16.mxu0 0
  %1072 = vmatpush1.bf16.msra.mxu0 0
  %1073 = vmatprep.subr.bf16.mxu0 0
  %1074 = vmatpush1.bf16.msra.mxu0 0
  %1075 = vmatprep.subr.bf16.mxu0 0
  %1076 = vmatpush1.bf16.msra.mxu0 0
  %1077 = vmatprep.subr.bf16.mxu0 0
  %1078 = vmatpush1.bf16.msra.mxu0 0
  %1079 = vmatprep.subr.bf16.mxu0 0
  %1080 = vmatpush1.bf16.msra.mxu0 0
  %1081 = vmatprep.subr.bf16.mxu0 0
  %1082 = vmatpush1.bf16.msra.mxu0 0
  %1083 = vmatprep.mubr.bf16.mxu0 0
  %1084 = vmatmul.mubr.bf16.gmra.mrb[0].mxu0 %v820
  %v1085 = vpop.f32.mrb[0].mxu0
  %v1086 = vadd.f32 0.0, %v1085
  %v1087 = vpop.f32.mrb[0].mxu0
  %v1088 = vpop.f32.mrb[0].mxu0
  %v1089 = vpop.f32.mrb[0].mxu0
  %1090 = vdwg.mxu0
  %v1091 = vadd.f32 %v1046, %v1086
  %v1092 = vtanh.pop %v1091
  %v1093 = vxor.u32 %v1091, 2147483648
  %v1094 = vmul.f32 %v1093, 1.442695
  %v1095 = vpow.pop %v1094
  %v1096 = vadd.f32 %v1095, 1.0
  %v1097 = vrcp.pop %v1096
  %v1098 = vmul.f32 1.0, %v1097
  %v1099 = vsel %vm203, %v1092, %v1098
  %v1100 = vmul.f32 %v1099, %v802
  %1102 = vrot.lane.b32.xlu0 %v1099, 64
  %v1103 = vpop.permute.xlu0 %1102
  %v1105 = vmul.f32 %v1099, %v1103
  %1107 = vrot.lane.b32.xlu0 %v1105, 32
  %v1108 = vpop.permute.xlu0 %1107
  %v1110 = vadd.f32 %v1100, %v1108
  %v1111 = vtanh.pop %v1110
  %1113 = vrot.lane.b32.xlu0 %v1111, 64
  %v1114 = vpop.permute.xlu0 %1113
  %v1116 = vmul.f32 %v1099, %v1114
  %1118 = vrot.lane.b32.xlu0 %v1116, 32
  %v1119 = vpop.permute.xlu0 %1118
  %s1121 = scalar_lea.vmem %s12, 16
  %1122 = vst.msk [vmem:[%s1121] sm:$0xff] %vm121, %v1119
  %v1123 = vpack.c.bf16 %v1116, %v1116
  %1125 = vrot.lane.b32.xlu0 %v1123, 32
  %v1126 = vpop.permute.xlu0 %1125
  %v1128 = vsel %vm121, %v1126, 0
  %1130 = vmatprep.subr.bf16.mxu0 %v468
  %1131 = vmatpush1.bf16.msra.mxu0 %v467
  %1132 = vmatprep.subr.bf16.mxu0 %v470
  %1133 = vmatpush1.bf16.msra.mxu0 %v469
  %1134 = vmatprep.subr.bf16.mxu0 0
  %1135 = vmatpush1.bf16.msra.mxu0 0
  %1136 = vmatprep.subr.bf16.mxu0 0
  %1137 = vmatpush1.bf16.msra.mxu0 0
  %1138 = vmatprep.subr.bf16.mxu0 0
  %1139 = vmatpush1.bf16.msra.mxu0 0
  %1140 = vmatprep.subr.bf16.mxu0 0
  %1141 = vmatpush1.bf16.msra.mxu0 0
  %1142 = vmatprep.subr.bf16.mxu0 0
  %1143 = vmatpush1.bf16.msra.mxu0 0
  %1144 = vmatprep.subr.bf16.mxu0 0
  %1145 = vmatpush1.bf16.msra.mxu0 0
  %1146 = vmatprep.subr.bf16.mxu0 0
  %1147 = vmatpush1.bf16.msra.mxu0 0
  %1148 = vmatprep.subr.bf16.mxu0 0
  %1149 = vmatpush1.bf16.msra.mxu0 0
  %1150 = vmatprep.subr.bf16.mxu0 0
  %1151 = vmatpush1.bf16.msra.mxu0 0
  %1152 = vmatprep.subr.bf16.mxu0 0
  %1153 = vmatpush1.bf16.msra.mxu0 0
  %1154 = vmatprep.subr.bf16.mxu0 0
  %1155 = vmatpush1.bf16.msra.mxu0 0
  %1156 = vmatprep.subr.bf16.mxu0 0
  %1157 = vmatpush1.bf16.msra.mxu0 0
  %1158 = vmatprep.subr.bf16.mxu0 0
  %1159 = vmatpush1.bf16.msra.mxu0 0
  %1160 = vmatprep.subr.bf16.mxu0 0
  %1161 = vmatpush1.bf16.msra.mxu0 0
  %1162 = vmatprep.mubr.bf16.mxu0 0
  %1163 = vmatmul.mubr.bf16.gmra.mrb[0].mxu0 %v1128
  %v1164 = vpop.f32.mrb[0].mxu0
  %v1165 = vadd.f32 %v445, %v1164
  %v1166 = vpop.f32.mrb[0].mxu0
  %v1167 = vadd.f32 %v449, %v1166
  %v1168 = vpop.f32.mrb[0].mxu0
  %v1169 = vpop.f32.mrb[0].mxu0
  %1170 = vdwg.mxu0
  %v1171 = vpack.c.bf16 %v937, %v937
  %1173 = vrot.lane.b32.xlu0 %v1171, 64
  %v1174 = vpop.permute.xlu0 %1173
  %v1176 = vsel %vm559, %v1174, 0
  %1178 = vmatprep.subr.bf16.mxu0 %v544
  %1179 = vmatpush1.bf16.msra.mxu0 %v543
  %1180 = vmatprep.subr.bf16.mxu0 %v546
  %1181 = vmatpush1.bf16.msra.mxu0 %v545
  %1182 = vmatprep.subr.bf16.mxu0 %v548
  %1183 = vmatpush1.bf16.msra.mxu0 %v547
  %1184 = vmatprep.subr.bf16.mxu0 %v550
  %1185 = vmatpush1.bf16.msra.mxu0 %v549
  %1186 = vmatprep.subr.bf16.mxu0 0
  %1187 = vmatpush1.bf16.msra.mxu0 0
  %1188 = vmatprep.subr.bf16.mxu0 0
  %1189 = vmatpush1.bf16.msra.mxu0 0
  %1190 = vmatprep.subr.bf16.mxu0 0
  %1191 = vmatpush1.bf16.msra.mxu0 0
  %1192 = vmatprep.subr.bf16.mxu0 0
  %1193 = vmatpush1.bf16.msra.mxu0 0
  %1194 = vmatprep.subr.bf16.mxu0 0
  %1195 = vmatpush1.bf16.msra.mxu0 0
  %1196 = vmatprep.subr.bf16.mxu0 0
  %1197 = vmatpush1.bf16.msra.mxu0 0
  %1198 = vmatprep.subr.bf16.mxu0 0
  %1199 = vmatpush1.bf16.msra.mxu0 0
  %1200 = vmatprep.subr.bf16.mxu0 0
  %1201 = vmatpush1.bf16.msra.mxu0 0
  %1202 = vmatprep.subr.bf16.mxu0 0
  %1203 = vmatpush1.bf16.msra.mxu0 0
  %1204 = vmatprep.subr.bf16.mxu0 0
  %1205 = vmatpush1.bf16.msra.mxu0 0
  %1206 = vmatprep.subr.bf16.mxu0 0
  %1207 = vmatpush1.bf16.msra.mxu0 0
  %1208 = vmatprep.subr.bf16.mxu0 0
  %1209 = vmatpush1.bf16.msra.mxu0 0
  %1210 = vmatprep.mubr.bf16.mxu0 0
  %1211 = vmatmul.mubr.bf16.gmra.mrb[0].mxu0 %v1176
  %v1212 = vpop.f32.mrb[0].mxu0
  %v1213 = vadd.f32 0.0, %v1212
  %v1214 = vpop.f32.mrb[0].mxu0
  %v1215 = vadd.f32 0.0, %v1214
  %v1216 = vpop.f32.mrb[0].mxu0
  %v1217 = vpop.f32.mrb[0].mxu0
  %1218 = vdwg.mxu0
  %v1219 = vadd.f32 %v1165, %v1213
  %v1220 = vadd.f32 %v1167, %v1215
  %v1221 = vtanh.pop %v1219
  %v1222 = vtanh.pop %v1220
  %v1223 = vxor.u32 %v1219, 2147483648
  %v1224 = vxor.u32 %v1220, 2147483648
  %v1225 = vmul.f32 %v1223, 1.442695
  %v1226 = vpow.pop %v1225
  %v1227 = vmul.f32 %v1224, 1.442695
  %v1228 = vpow.pop %v1227
  %v1229 = vadd.f32 %v1226, 1.0
  %v1230 = vadd.f32 %v1228, 1.0
  %v1231 = vrcp.pop %v1229
  %v1232 = vmul.f32 1.0, %v1231
  %v1233 = vrcp.pop %v1230
  %v1234 = vmul.f32 1.0, %v1233
  %v1235 = vsel %vm209, %v1221, %v1232
  %v1236 = vsel %vm210, %v1222, %v1234
  %v1237 = vmul.f32 %v1235, %v935
  %v1238 = vmul.f32 %v1235, %v1236
  %1240 = vrot.lane.b32.xlu0 %v1238, 64
  %v1241 = vpop.permute.xlu0 %1240
  %v1243 = vadd.f32 %v1237, %v1241
  %v1244 = vtanh.pop %v1243
  %v1245 = vmul.f32 %v1236, %v1244
  %1246 = vmatprep.subr.bf16.mxu0 0
  %1247 = vmatpush1.bf16.msra.mxu0 %v219
  %1248 = vmatprep.subr.bf16.mxu0 0
  %1249 = vmatpush1.bf16.msra.mxu0 %v220
  %1250 = vmatprep.subr.bf16.mxu0 0
  %1251 = vmatpush1.bf16.msra.mxu0 0
  %1252 = vmatprep.subr.bf16.mxu0 0
  %1253 = vmatpush1.bf16.msra.mxu0 0
  %1254 = vmatprep.subr.bf16.mxu0 0
  %1255 = vmatpush1.bf16.msra.mxu0 0
  %1256 = vmatprep.subr.bf16.mxu0 0
  %1257 = vmatpush1.bf16.msra.mxu0 0
  %1258 = vmatprep.subr.bf16.mxu0 0
  %1259 = vmatpush1.bf16.msra.mxu0 0
  %1260 = vmatprep.subr.bf16.mxu0 0
  %1261 = vmatpush1.bf16.msra.mxu0 0
  %1262 = vmatprep.subr.bf16.mxu0 0
  %1263 = vmatpush1.bf16.msra.mxu0 0
  %1264 = vmatprep.subr.bf16.mxu0 0
  %1265 = vmatpush1.bf16.msra.mxu0 0
  %1266 = vmatprep.subr.bf16.mxu0 0
  %1267 = vmatpush1.bf16.msra.mxu0 0
  %1268 = vmatprep.subr.bf16.mxu0 0
  %1269 = vmatpush1.bf16.msra.mxu0 0
  %1270 = vmatprep.subr.bf16.mxu0 0
  %1271 = vmatpush1.bf16.msra.mxu0 0
  %1272 = vmatprep.subr.bf16.mxu0 0
  %1273 = vmatpush1.bf16.msra.mxu0 0
  %1274 = vmatprep.subr.bf16.mxu0 0
  %1275 = vmatpush1.bf16.msra.mxu0 0
  %1276 = vmatprep.subr.bf16.mxu0 0
  %1277 = vmatpush1.bf16.msra.mxu0 0
  %1278 = vmatprep.mubr.bf16.mxu0 0
  %1279 = vmatmul.mubr.bf16.gmra.mrb[0].mxu0 %v1009
  %v1280 = vpop.f32.mrb[0].mxu0
  %v1281 = vadd.f32 0.0, %v1280
  %v1282 = vpop.f32.mrb[0].mxu0
  %v1283 = vpop.f32.mrb[0].mxu0
  %v1284 = vpop.f32.mrb[0].mxu0
  %1285 = vdwg.mxu0
  %v1286 = vadd.f32 %v180, %v1281
  %v1287 = vtanh.pop %v1286
  %v1288 = vxor.u32 %v1286, 2147483648
  %v1289 = vmul.f32 %v1288, 1.442695
  %v1290 = vpow.pop %v1289
  %v1291 = vadd.f32 %v1290, 1.0
  %v1292 = vrcp.pop %v1291
  %v1293 = vmul.f32 1.0, %v1292
  %v1294 = vsel %vm203, %v1287, %v1293
  %v1295 = vmul.f32 %v1294, %v997
  %1297 = vrot.lane.b32.xlu0 %v1294, 64
  %v1298 = vpop.permute.xlu0 %1297
  %v1300 = vmul.f32 %v1294, %v1298
  %1302 = vrot.lane.b32.xlu0 %v1300, 32
  %v1303 = vpop.permute.xlu0 %1302
  %v1305 = vadd.f32 %v1295, %v1303
  %v1306 = vtanh.pop %v1305
  %1308 = vrot.lane.b32.xlu0 %v1306, 64
  %v1309 = vpop.permute.xlu0 %1308
  %v1311 = vmul.f32 %v1294, %v1309
  %v1312 = vpack.c.bf16 %v1311, %v1311
  %1314 = vrot.lane.b32.xlu0 %v1312, 32
  %v1315 = vpop.permute.xlu0 %1314
  %v1317 = vsel %vm121, %v1315, 0
  %1319 = vmatprep.subr.bf16.mxu0 0
  %1320 = vmatpush1.bf16.msra.mxu0 %v310
  %1321 = vmatprep.subr.bf16.mxu0 0
  %1322 = vmatpush1.bf16.msra.mxu0 %v311
  %1323 = vmatprep.subr.bf16.mxu0 0
  %1324 = vmatpush1.bf16.msra.mxu0 0
  %1325 = vmatprep.subr.bf16.mxu0 0
  %1326 = vmatpush1.bf16.msra.mxu0 0
  %1327 = vmatprep.subr.bf16.mxu0 0
  %1328 = vmatpush1.bf16.msra.mxu0 0
  %1329 = vmatprep.subr.bf16.mxu0 0
  %1330 = vmatpush1.bf16.msra.mxu0 0
  %1331 = vmatprep.subr.bf16.mxu0 0
  %1332 = vmatpush1.bf16.msra.mxu0 0
  %1333 = vmatprep.subr.bf16.mxu0 0
  %1334 = vmatpush1.bf16.msra.mxu0 0
  %1335 = vmatprep.subr.bf16.mxu0 0
  %1336 = vmatpush1.bf16.msra.mxu0 0
  %1337 = vmatprep.subr.bf16.mxu0 0
  %1338 = vmatpush1.bf16.msra.mxu0 0
  %1339 = vmatprep.subr.bf16.mxu0 0
  %1340 = vmatpush1.bf16.msra.mxu0 0
  %1341 = vmatprep.subr.bf16.mxu0 0
  %1342 = vmatpush1.bf16.msra.mxu0 0
  %1343 = vmatprep.subr.bf16.mxu0 0
  %1344 = vmatpush1.bf16.msra.mxu0 0
  %1345 = vmatprep.subr.bf16.mxu0 0
  %1346 = vmatpush1.bf16.msra.mxu0 0
  %1347 = vmatprep.subr.bf16.mxu0 0
  %1348 = vmatpush1.bf16.msra.mxu0 0
  %1349 = vmatprep.subr.bf16.mxu0 0
  %1350 = vmatpush1.bf16.msra.mxu0 0
  %1351 = vmatprep.mubr.bf16.mxu0 0
  %1352 = vmatmul.mubr.bf16.gmra.mrb[0].mxu0 %v1317
  %v1353 = vpop.f32.mrb[0].mxu0
  %v1354 = vadd.f32 %v297, %v1353
  %v1355 = vpop.f32.mrb[0].mxu0
  %v1356 = vpop.f32.mrb[0].mxu0
  %v1357 = vpop.f32.mrb[0].mxu0
  %1358 = vdwg.mxu0
  %1359 = vmatprep.subr.bf16.mxu0 0
  %1360 = vmatpush1.bf16.msra.mxu0 %v365
  %1361 = vmatprep.subr.bf16.mxu0 0
  %1362 = vmatpush1.bf16.msra.mxu0 %v366
  %1363 = vmatprep.subr.bf16.mxu0 0
  %1364 = vmatpush1.bf16.msra.mxu0 0
  %1365 = vmatprep.subr.bf16.mxu0 0
  %1366 = vmatpush1.bf16.msra.mxu0 0
  %1367 = vmatprep.subr.bf16.mxu0 0
  %1368 = vmatpush1.bf16.msra.mxu0 0
  %1369 = vmatprep.subr.bf16.mxu0 0
  %1370 = vmatpush1.bf16.msra.mxu0 0
  %1371 = vmatprep.subr.bf16.mxu0 0
  %1372 = vmatpush1.bf16.msra.mxu0 0
  %1373 = vmatprep.subr.bf16.mxu0 0
  %1374 = vmatpush1.bf16.msra.mxu0 0
  %1375 = vmatprep.subr.bf16.mxu0 0
  %1376 = vmatpush1.bf16.msra.mxu0 0
  %1377 = vmatprep.subr.bf16.mxu0 0
  %1378 = vmatpush1.bf16.msra.mxu0 0
  %1379 = vmatprep.subr.bf16.mxu0 0
  %1380 = vmatpush1.bf16.msra.mxu0 0
  %1381 = vmatprep.subr.bf16.mxu0 0
  %1382 = vmatpush1.bf16.msra.mxu0 0
  %1383 = vmatprep.subr.bf16.mxu0 0
  %1384 = vmatpush1.bf16.msra.mxu0 0
  %1385 = vmatprep.subr.bf16.mxu0 0
  %1386 = vmatpush1.bf16.msra.mxu0 0
  %1387 = vmatprep.subr.bf16.mxu0 0
  %1388 = vmatpush1.bf16.msra.mxu0 0
  %1389 = vmatprep.subr.bf16.mxu0 0
  %1390 = vmatpush1.bf16.msra.mxu0 0
  %1391 = vmatprep.mubr.bf16.mxu0 0
  %1392 = vmatmul.mubr.bf16.gmra.mrb[0].mxu0 %v1128
  %v1393 = vpop.f32.mrb[0].mxu0
  %v1394 = vadd.f32 0.0, %v1393
  %v1395 = vpop.f32.mrb[0].mxu0
  %v1396 = vpop.f32.mrb[0].mxu0
  %v1397 = vpop.f32.mrb[0].mxu0
  %1398 = vdwg.mxu0
  %v1399 = vadd.f32 %v1354, %v1394
  %v1400 = vtanh.pop %v1399
  %v1401 = vxor.u32 %v1399, 2147483648
  %v1402 = vmul.f32 %v1401, 1.442695
  %v1403 = vpow.pop %v1402
  %v1404 = vadd.f32 %v1403, 1.0
  %v1405 = vrcp.pop %v1404
  %v1406 = vmul.f32 1.0, %v1405
  %v1407 = vsel %vm203, %v1400, %v1406
  %v1408 = vmul.f32 %v1407, %v1110
  %1410 = vrot.lane.b32.xlu0 %v1407, 64
  %v1411 = vpop.permute.xlu0 %1410
  %v1413 = vmul.f32 %v1407, %v1411
  %1415 = vrot.lane.b32.xlu0 %v1413, 32
  %v1416 = vpop.permute.xlu0 %1415
  %v1418 = vadd.f32 %v1408, %v1416
  %v1419 = vtanh.pop %v1418
  %1421 = vrot.lane.b32.xlu0 %v1419, 64
  %v1422 = vpop.permute.xlu0 %1421
  %v1424 = vmul.f32 %v1407, %v1422
  %1426 = vrot.lane.b32.xlu0 %v1424, 32
  %v1427 = vpop.permute.xlu0 %1426
  %s1429 = scalar_lea.vmem %s12, 24
  %1430 = vst.msk [vmem:[%s1429] sm:$0xff] %vm121, %v1427
  %v1431 = vpack.c.bf16 %v1424, %v1424
  %1433 = vrot.lane.b32.xlu0 %v1431, 32
  %v1434 = vpop.permute.xlu0 %1433
  %v1436 = vsel %vm121, %v1434, 0
  %1438 = vmatprep.subr.bf16.mxu0 %v468
  %1439 = vmatpush1.bf16.msra.mxu0 %v467
  %1440 = vmatprep.subr.bf16.mxu0 %v470
  %1441 = vmatpush1.bf16.msra.mxu0 %v469
  %1442 = vmatprep.subr.bf16.mxu0 0
  %1443 = vmatpush1.bf16.msra.mxu0 0
  %1444 = vmatprep.subr.bf16.mxu0 0
  %1445 = vmatpush1.bf16.msra.mxu0 0
  %1446 = vmatprep.subr.bf16.mxu0 0
  %1447 = vmatpush1.bf16.msra.mxu0 0
  %1448 = vmatprep.subr.bf16.mxu0 0
  %1449 = vmatpush1.bf16.msra.mxu0 0
  %1450 = vmatprep.subr.bf16.mxu0 0
  %1451 = vmatpush1.bf16.msra.mxu0 0
  %1452 = vmatprep.subr.bf16.mxu0 0
  %1453 = vmatpush1.bf16.msra.mxu0 0
  %1454 = vmatprep.subr.bf16.mxu0 0
  %1455 = vmatpush1.bf16.msra.mxu0 0
  %1456 = vmatprep.subr.bf16.mxu0 0
  %1457 = vmatpush1.bf16.msra.mxu0 0
  %1458 = vmatprep.subr.bf16.mxu0 0
  %1459 = vmatpush1.bf16.msra.mxu0 0
  %1460 = vmatprep.subr.bf16.mxu0 0
  %1461 = vmatpush1.bf16.msra.mxu0 0
  %1462 = vmatprep.subr.bf16.mxu0 0
  %1463 = vmatpush1.bf16.msra.mxu0 0
  %1464 = vmatprep.subr.bf16.mxu0 0
  %1465 = vmatpush1.bf16.msra.mxu0 0
  %1466 = vmatprep.subr.bf16.mxu0 0
  %1467 = vmatpush1.bf16.msra.mxu0 0
  %1468 = vmatprep.subr.bf16.mxu0 0
  %1469 = vmatpush1.bf16.msra.mxu0 0
  %1470 = vmatprep.mubr.bf16.mxu0 0
  %1471 = vmatmul.mubr.bf16.gmra.mrb[0].mxu0 %v1436
  %v1472 = vpop.f32.mrb[0].mxu0
  %v1473 = vadd.f32 %v445, %v1472
  %v1474 = vpop.f32.mrb[0].mxu0
  %v1475 = vadd.f32 %v449, %v1474
  %v1476 = vpop.f32.mrb[0].mxu0
  %v1477 = vpop.f32.mrb[0].mxu0
  %1478 = vdwg.mxu0
  %v1479 = vpack.c.bf16 %v1245, %v1245
  %1481 = vrot.lane.b32.xlu0 %v1479, 64
  %v1482 = vpop.permute.xlu0 %1481
  %v1484 = vsel %vm559, %v1482, 0
  %1486 = vmatprep.subr.bf16.mxu0 %v544
  %1487 = vmatpush1.bf16.msra.mxu0 %v543
  %1488 = vmatprep.subr.bf16.mxu0 %v546
  %1489 = vmatpush1.bf16.msra.mxu0 %v545
  %1490 = vmatprep.subr.bf16.mxu0 %v548
  %1491 = vmatpush1.bf16.msra.mxu0 %v547
  %1492 = vmatprep.subr.bf16.mxu0 %v550
  %1493 = vmatpush1.bf16.msra.mxu0 %v549
  %1494 = vmatprep.subr.bf16.mxu0 0
  %1495 = vmatpush1.bf16.msra.mxu0 0
  %1496 = vmatprep.subr.bf16.mxu0 0
  %1497 = vmatpush1.bf16.msra.mxu0 0
  %1498 = vmatprep.subr.bf16.mxu0 0
  %1499 = vmatpush1.bf16.msra.mxu0 0
  %1500 = vmatprep.subr.bf16.mxu0 0
  %1501 = vmatpush1.bf16.msra.mxu0 0
  %1502 = vmatprep.subr.bf16.mxu0 0
  %1503 = vmatpush1.bf16.msra.mxu0 0
  %1504 = vmatprep.subr.bf16.mxu0 0
  %1505 = vmatpush1.bf16.msra.mxu0 0
  %1506 = vmatprep.subr.bf16.mxu0 0
  %1507 = vmatpush1.bf16.msra.mxu0 0
  %1508 = vmatprep.subr.bf16.mxu0 0
  %1509 = vmatpush1.bf16.msra.mxu0 0
  %1510 = vmatprep.subr.bf16.mxu0 0
  %1511 = vmatpush1.bf16.msra.mxu0 0
  %1512 = vmatprep.subr.bf16.mxu0 0
  %1513 = vmatpush1.bf16.msra.mxu0 0
  %1514 = vmatprep.subr.bf16.mxu0 0
  %1515 = vmatpush1.bf16.msra.mxu0 0
  %1516 = vmatprep.subr.bf16.mxu0 0
  %1517 = vmatpush1.bf16.msra.mxu0 0
  %1518 = vmatprep.mubr.bf16.mxu0 0
  %1519 = vmatmul.mubr.bf16.gmra.mrb[0].mxu0 %v1484
  %v1520 = vpop.f32.mrb[0].mxu0
  %v1521 = vadd.f32 0.0, %v1520
  %v1522 = vpop.f32.mrb[0].mxu0
  %v1523 = vadd.f32 0.0, %v1522
  %v1524 = vpop.f32.mrb[0].mxu0
  %v1525 = vpop.f32.mrb[0].mxu0
  %1526 = vdwg.mxu0
  %v1527 = vadd.f32 %v1473, %v1521
  %v1528 = vadd.f32 %v1475, %v1523
  %v1529 = vtanh.pop %v1527
  %v1530 = vtanh.pop %v1528
  %v1531 = vxor.u32 %v1527, 2147483648
  %v1532 = vxor.u32 %v1528, 2147483648
  %v1533 = vmul.f32 %v1531, 1.442695
  %v1534 = vpow.pop %v1533
  %v1535 = vmul.f32 %v1532, 1.442695
  %v1536 = vpow.pop %v1535
  %v1537 = vadd.f32 %v1534, 1.0
  %v1538 = vadd.f32 %v1536, 1.0
  %v1539 = vrcp.pop %v1537
  %v1540 = vmul.f32 1.0, %v1539
  %v1541 = vrcp.pop %v1538
  %v1542 = vmul.f32 1.0, %v1541
  %v1543 = vsel %vm209, %v1529, %v1540
  %v1544 = vsel %vm210, %v1530, %v1542
  %v1545 = vmul.f32 %v1543, %v1243
  %v1546 = vmul.f32 %v1543, %v1544
  %1548 = vrot.lane.b32.xlu0 %v1546, 64
  %v1549 = vpop.permute.xlu0 %1548
  %v1551 = vadd.f32 %v1545, %v1549
  %v1552 = vtanh.pop %v1551
  %v1553 = vmul.f32 %v1544, %v1552
  %1554 = vmatprep.subr.bf16.mxu0 0
  %1555 = vmatpush1.bf16.msra.mxu0 %v219
  %1556 = vmatprep.subr.bf16.mxu0 0
  %1557 = vmatpush1.bf16.msra.mxu0 %v220
  %1558 = vmatprep.subr.bf16.mxu0 0
  %1559 = vmatpush1.bf16.msra.mxu0 0
  %1560 = vmatprep.subr.bf16.mxu0 0
  %1561 = vmatpush1.bf16.msra.mxu0 0
  %1562 = vmatprep.subr.bf16.mxu0 0
  %1563 = vmatpush1.bf16.msra.mxu0 0
  %1564 = vmatprep.subr.bf16.mxu0 0
  %1565 = vmatpush1.bf16.msra.mxu0 0
  %1566 = vmatprep.subr.bf16.mxu0 0
  %1567 = vmatpush1.bf16.msra.mxu0 0
  %1568 = vmatprep.subr.bf16.mxu0 0
  %1569 = vmatpush1.bf16.msra.mxu0 0
  %1570 = vmatprep.subr.bf16.mxu0 0
  %1571 = vmatpush1.bf16.msra.mxu0 0
  %1572 = vmatprep.subr.bf16.mxu0 0
  %1573 = vmatpush1.bf16.msra.mxu0 0
  %1574 = vmatprep.subr.bf16.mxu0 0
  %1575 = vmatpush1.bf16.msra.mxu0 0
  %1576 = vmatprep.subr.bf16.mxu0 0
  %1577 = vmatpush1.bf16.msra.mxu0 0
  %1578 = vmatprep.subr.bf16.mxu0 0
  %1579 = vmatpush1.bf16.msra.mxu0 0
  %1580 = vmatprep.subr.bf16.mxu0 0
  %1581 = vmatpush1.bf16.msra.mxu0 0
  %1582 = vmatprep.subr.bf16.mxu0 0
  %1583 = vmatpush1.bf16.msra.mxu0 0
  %1584 = vmatprep.subr.bf16.mxu0 0
  %1585 = vmatpush1.bf16.msra.mxu0 0
  %1586 = vmatprep.mubr.bf16.mxu0 0
  %1587 = vmatmul.mubr.bf16.gmra.mrb[0].mxu0 %v1317
  %v1588 = vpop.f32.mrb[0].mxu0
  %v1589 = vadd.f32 0.0, %v1588
  %v1590 = vpop.f32.mrb[0].mxu0
  %v1591 = vpop.f32.mrb[0].mxu0
  %v1592 = vpop.f32.mrb[0].mxu0
  %1593 = vdwg.mxu0
  %v1594 = vadd.f32 %v185, %v1589
  %v1595 = vtanh.pop %v1594
  %v1596 = vxor.u32 %v1594, 2147483648
  %v1597 = vmul.f32 %v1596, 1.442695
  %v1598 = vpow.pop %v1597
  %v1599 = vadd.f32 %v1598, 1.0
  %v1600 = vrcp.pop %v1599
  %v1601 = vmul.f32 1.0, %v1600
  %v1602 = vsel %vm203, %v1595, %v1601
  %v1603 = vmul.f32 %v1602, %v1305
  %1605 = vrot.lane.b32.xlu0 %v1602, 64
  %v1606 = vpop.permute.xlu0 %1605
  %v1608 = vmul.f32 %v1602, %v1606
  %1610 = vrot.lane.b32.xlu0 %v1608, 32
  %v1611 = vpop.permute.xlu0 %1610
  %v1613 = vadd.f32 %v1603, %v1611
  %v1614 = vtanh.pop %v1613
  %1616 = vrot.lane.b32.xlu0 %v1614, 64
  %v1617 = vpop.permute.xlu0 %1616
  %v1619 = vmul.f32 %v1602, %v1617
  %v1620 = vpack.c.bf16 %v1619, %v1619
  %1622 = vrot.lane.b32.xlu0 %v1620, 32
  %v1623 = vpop.permute.xlu0 %1622
  %v1625 = vsel %vm121, %v1623, 0
  %1627 = vmatprep.subr.bf16.mxu0 0
  %1628 = vmatpush1.bf16.msra.mxu0 %v310
  %1629 = vmatprep.subr.bf16.mxu0 0
  %1630 = vmatpush1.bf16.msra.mxu0 %v311
  %1631 = vmatprep.subr.bf16.mxu0 0
  %1632 = vmatpush1.bf16.msra.mxu0 0
  %1633 = vmatprep.subr.bf16.mxu0 0
  %1634 = vmatpush1.bf16.msra.mxu0 0
  %1635 = vmatprep.subr.bf16.mxu0 0
  %1636 = vmatpush1.bf16.msra.mxu0 0
  %1637 = vmatprep.subr.bf16.mxu0 0
  %1638 = vmatpush1.bf16.msra.mxu0 0
  %1639 = vmatprep.subr.bf16.mxu0 0
  %1640 = vmatpush1.bf16.msra.mxu0 0
  %1641 = vmatprep.subr.bf16.mxu0 0
  %1642 = vmatpush1.bf16.msra.mxu0 0
  %1643 = vmatprep.subr.bf16.mxu0 0
  %1644 = vmatpush1.bf16.msra.mxu0 0
  %1645 = vmatprep.subr.bf16.mxu0 0
  %1646 = vmatpush1.bf16.msra.mxu0 0
  %1647 = vmatprep.subr.bf16.mxu0 0
  %1648 = vmatpush1.bf16.msra.mxu0 0
  %1649 = vmatprep.subr.bf16.mxu0 0
  %1650 = vmatpush1.bf16.msra.mxu0 0
  %1651 = vmatprep.subr.bf16.mxu0 0
  %1652 = vmatpush1.bf16.msra.mxu0 0
  %1653 = vmatprep.subr.bf16.mxu0 0
  %1654 = vmatpush1.bf16.msra.mxu0 0
  %1655 = vmatprep.subr.bf16.mxu0 0
  %1656 = vmatpush1.bf16.msra.mxu0 0
  %1657 = vmatprep.subr.bf16.mxu0 0
  %1658 = vmatpush1.bf16.msra.mxu0 0
  %1659 = vmatprep.mubr.bf16.mxu0 0
  %1660 = vmatmul.mubr.bf16.gmra.mrb[0].mxu0 %v1625
  %v1661 = vpop.f32.mrb[0].mxu0
  %v1662 = vadd.f32 %v297, %v1661
  %v1663 = vpop.f32.mrb[0].mxu0
  %v1664 = vpop.f32.mrb[0].mxu0
  %v1665 = vpop.f32.mrb[0].mxu0
  %1666 = vdwg.mxu0
  %1667 = vmatprep.subr.bf16.mxu0 0
  %1668 = vmatpush1.bf16.msra.mxu0 %v365
  %1669 = vmatprep.subr.bf16.mxu0 0
  %1670 = vmatpush1.bf16.msra.mxu0 %v366
  %1671 = vmatprep.subr.bf16.mxu0 0
  %1672 = vmatpush1.bf16.msra.mxu0 0
  %1673 = vmatprep.subr.bf16.mxu0 0
  %1674 = vmatpush1.bf16.msra.mxu0 0
  %1675 = vmatprep.subr.bf16.mxu0 0
  %1676 = vmatpush1.bf16.msra.mxu0 0
  %1677 = vmatprep.subr.bf16.mxu0 0
  %1678 = vmatpush1.bf16.msra.mxu0 0
  %1679 = vmatprep.subr.bf16.mxu0 0
  %1680 = vmatpush1.bf16.msra.mxu0 0
  %1681 = vmatprep.subr.bf16.mxu0 0
  %1682 = vmatpush1.bf16.msra.mxu0 0
  %1683 = vmatprep.subr.bf16.mxu0 0
  %1684 = vmatpush1.bf16.msra.mxu0 0
  %1685 = vmatprep.subr.bf16.mxu0 0
  %1686 = vmatpush1.bf16.msra.mxu0 0
  %1687 = vmatprep.subr.bf16.mxu0 0
  %1688 = vmatpush1.bf16.msra.mxu0 0
  %1689 = vmatprep.subr.bf16.mxu0 0
  %1690 = vmatpush1.bf16.msra.mxu0 0
  %1691 = vmatprep.subr.bf16.mxu0 0
  %1692 = vmatpush1.bf16.msra.mxu0 0
  %1693 = vmatprep.subr.bf16.mxu0 0
  %1694 = vmatpush1.bf16.msra.mxu0 0
  %1695 = vmatprep.subr.bf16.mxu0 0
  %1696 = vmatpush1.bf16.msra.mxu0 0
  %1697 = vmatprep.subr.bf16.mxu0 0
  %1698 = vmatpush1.bf16.msra.mxu0 0
  %1699 = vmatprep.mubr.bf16.mxu0 0
  %1700 = vmatmul.mubr.bf16.gmra.mrb[0].mxu0 %v1436
  %v1701 = vpop.f32.mrb[0].mxu0
  %v1702 = vadd.f32 0.0, %v1701
  %v1703 = vpop.f32.mrb[0].mxu0
  %v1704 = vpop.f32.mrb[0].mxu0
  %v1705 = vpop.f32.mrb[0].mxu0
  %1706 = vdwg.mxu0
  %v1707 = vadd.f32 %v1662, %v1702
  %v1708 = vtanh.pop %v1707
  %v1709 = vxor.u32 %v1707, 2147483648
  %v1710 = vmul.f32 %v1709, 1.442695
  %v1711 = vpow.pop %v1710
  %v1712 = vadd.f32 %v1711, 1.0
  %v1713 = vrcp.pop %v1712
  %v1714 = vmul.f32 1.0, %v1713
  %v1715 = vsel %vm203, %v1708, %v1714
  %v1716 = vmul.f32 %v1715, %v1418
  %1718 = vrot.lane.b32.xlu0 %v1715, 64
  %v1719 = vpop.permute.xlu0 %1718
  %v1721 = vmul.f32 %v1715, %v1719
  %1723 = vrot.lane.b32.xlu0 %v1721, 32
  %v1724 = vpop.permute.xlu0 %1723
  %v1726 = vadd.f32 %v1716, %v1724
  %v1727 = vtanh.pop %v1726
  %1729 = vrot.lane.b32.xlu0 %v1727, 64
  %v1730 = vpop.permute.xlu0 %1729
  %v1732 = vmul.f32 %v1715, %v1730
  %1734 = vrot.lane.b32.xlu0 %v1732, 32
  %v1735 = vpop.permute.xlu0 %1734
  %s1737 = scalar_lea.vmem %s12, 32
  %1738 = vst.msk [vmem:[%s1737] sm:$0xff] %vm121, %v1735
  %v1739 = vpack.c.bf16 %v1732, %v1732
  %1741 = vrot.lane.b32.xlu0 %v1739, 32
  %v1742 = vpop.permute.xlu0 %1741
  %v1744 = vsel %vm121, %v1742, 0
  %1746 = vmatprep.subr.bf16.mxu0 %v468
  %1747 = vmatpush1.bf16.msra.mxu0 %v467
  %1748 = vmatprep.subr.bf16.mxu0 %v470
  %1749 = vmatpush1.bf16.msra.mxu0 %v469
  %1750 = vmatprep.subr.bf16.mxu0 0
  %1751 = vmatpush1.bf16.msra.mxu0 0
  %1752 = vmatprep.subr.bf16.mxu0 0
  %1753 = vmatpush1.bf16.msra.mxu0 0
  %1754 = vmatprep.subr.bf16.mxu0 0
  %1755 = vmatpush1.bf16.msra.mxu0 0
  %1756 = vmatprep.subr.bf16.mxu0 0
  %1757 = vmatpush1.bf16.msra.mxu0 0
  %1758 = vmatprep.subr.bf16.mxu0 0
  %1759 = vmatpush1.bf16.msra.mxu0 0
  %1760 = vmatprep.subr.bf16.mxu0 0
  %1761 = vmatpush1.bf16.msra.mxu0 0
  %1762 = vmatprep.subr.bf16.mxu0 0
  %1763 = vmatpush1.bf16.msra.mxu0 0
  %1764 = vmatprep.subr.bf16.mxu0 0
  %1765 = vmatpush1.bf16.msra.mxu0 0
  %1766 = vmatprep.subr.bf16.mxu0 0
  %1767 = vmatpush1.bf16.msra.mxu0 0
  %1768 = vmatprep.subr.bf16.mxu0 0
  %1769 = vmatpush1.bf16.msra.mxu0 0
  %1770 = vmatprep.subr.bf16.mxu0 0
  %1771 = vmatpush1.bf16.msra.mxu0 0
  %1772 = vmatprep.subr.bf16.mxu0 0
  %1773 = vmatpush1.bf16.msra.mxu0 0
  %1774 = vmatprep.subr.bf16.mxu0 0
  %1775 = vmatpush1.bf16.msra.mxu0 0
  %1776 = vmatprep.subr.bf16.mxu0 0
  %1777 = vmatpush1.bf16.msra.mxu0 0
  %1778 = vmatprep.mubr.bf16.mxu0 0
  %1779 = vmatmul.mubr.bf16.gmra.mrb[0].mxu0 %v1744
  %v1780 = vpop.f32.mrb[0].mxu0
  %v1781 = vadd.f32 %v445, %v1780
  %v1782 = vpop.f32.mrb[0].mxu0
  %v1783 = vadd.f32 %v449, %v1782
  %v1784 = vpop.f32.mrb[0].mxu0
  %v1785 = vpop.f32.mrb[0].mxu0
  %1786 = vdwg.mxu0
  %v1787 = vpack.c.bf16 %v1553, %v1553
  %1789 = vrot.lane.b32.xlu0 %v1787, 64
  %v1790 = vpop.permute.xlu0 %1789
  %v1792 = vsel %vm559, %v1790, 0
  %1794 = vmatprep.subr.bf16.mxu0 %v544
  %1795 = vmatpush1.bf16.msra.mxu0 %v543
  %1796 = vmatprep.subr.bf16.mxu0 %v546
  %1797 = vmatpush1.bf16.msra.mxu0 %v545
  %1798 = vmatprep.subr.bf16.mxu0 %v548
  %1799 = vmatpush1.bf16.msra.mxu0 %v547
  %1800 = vmatprep.subr.bf16.mxu0 %v550
  %1801 = vmatpush1.bf16.msra.mxu0 %v549
  %1802 = vmatprep.subr.bf16.mxu0 0
  %1803 = vmatpush1.bf16.msra.mxu0 0
  %1804 = vmatprep.subr.bf16.mxu0 0
  %1805 = vmatpush1.bf16.msra.mxu0 0
  %1806 = vmatprep.subr.bf16.mxu0 0
  %1807 = vmatpush1.bf16.msra.mxu0 0
  %1808 = vmatprep.subr.bf16.mxu0 0
  %1809 = vmatpush1.bf16.msra.mxu0 0
  %1810 = vmatprep.subr.bf16.mxu0 0
  %1811 = vmatpush1.bf16.msra.mxu0 0
  %1812 = vmatprep.subr.bf16.mxu0 0
  %1813 = vmatpush1.bf16.msra.mxu0 0
  %1814 = vmatprep.subr.bf16.mxu0 0
  %1815 = vmatpush1.bf16.msra.mxu0 0
  %1816 = vmatprep.subr.bf16.mxu0 0
  %1817 = vmatpush1.bf16.msra.mxu0 0
  %1818 = vmatprep.subr.bf16.mxu0 0
  %1819 = vmatpush1.bf16.msra.mxu0 0
  %1820 = vmatprep.subr.bf16.mxu0 0
  %1821 = vmatpush1.bf16.msra.mxu0 0
  %1822 = vmatprep.subr.bf16.mxu0 0
  %1823 = vmatpush1.bf16.msra.mxu0 0
  %1824 = vmatprep.subr.bf16.mxu0 0
  %1825 = vmatpush1.bf16.msra.mxu0 0
  %1826 = vmatprep.mubr.bf16.mxu0 0
  %1827 = vmatmul.mubr.bf16.gmra.mrb[0].mxu0 %v1792
  %v1828 = vpop.f32.mrb[0].mxu0
  %v1829 = vadd.f32 0.0, %v1828
  %v1830 = vpop.f32.mrb[0].mxu0
  %v1831 = vadd.f32 0.0, %v1830
  %v1832 = vpop.f32.mrb[0].mxu0
  %v1833 = vpop.f32.mrb[0].mxu0
  %1834 = vdwg.mxu0
  %v1835 = vadd.f32 %v1781, %v1829
  %v1836 = vadd.f32 %v1783, %v1831
  %v1837 = vtanh.pop %v1835
  %v1838 = vtanh.pop %v1836
  %v1839 = vxor.u32 %v1835, 2147483648
  %v1840 = vxor.u32 %v1836, 2147483648
  %v1841 = vmul.f32 %v1839, 1.442695
  %v1842 = vpow.pop %v1841
  %v1843 = vmul.f32 %v1840, 1.442695
  %v1844 = vpow.pop %v1843
  %v1845 = vadd.f32 %v1842, 1.0
  %v1846 = vadd.f32 %v1844, 1.0
  %v1847 = vrcp.pop %v1845
  %v1848 = vmul.f32 1.0, %v1847
  %v1849 = vrcp.pop %v1846
  %v1850 = vmul.f32 1.0, %v1849
  %v1851 = vsel %vm209, %v1837, %v1848
  %v1852 = vsel %vm210, %v1838, %v1850
  %v1853 = vmul.f32 %v1851, %v1551
  %v1854 = vmul.f32 %v1851, %v1852
  %1856 = vrot.lane.b32.xlu0 %v1854, 64
  %v1857 = vpop.permute.xlu0 %1856
  %v1859 = vadd.f32 %v1853, %v1857
  %v1860 = vtanh.pop %v1859
  %v1861 = vmul.f32 %v1852, %v1860
  %1862 = vmatprep.subr.bf16.mxu0 0
  %1863 = vmatpush1.bf16.msra.mxu0 %v219
  %1864 = vmatprep.subr.bf16.mxu0 0
  %1865 = vmatpush1.bf16.msra.mxu0 %v220
  %1866 = vmatprep.subr.bf16.mxu0 0
  %1867 = vmatpush1.bf16.msra.mxu0 0
  %1868 = vmatprep.subr.bf16.mxu0 0
  %1869 = vmatpush1.bf16.msra.mxu0 0
  %1870 = vmatprep.subr.bf16.mxu0 0
  %1871 = vmatpush1.bf16.msra.mxu0 0
  %1872 = vmatprep.subr.bf16.mxu0 0
  %1873 = vmatpush1.bf16.msra.mxu0 0
  %1874 = vmatprep.subr.bf16.mxu0 0
  %1875 = vmatpush1.bf16.msra.mxu0 0
  %1876 = vmatprep.subr.bf16.mxu0 0
  %1877 = vmatpush1.bf16.msra.mxu0 0
  %1878 = vmatprep.subr.bf16.mxu0 0
  %1879 = vmatpush1.bf16.msra.mxu0 0
  %1880 = vmatprep.subr.bf16.mxu0 0
  %1881 = vmatpush1.bf16.msra.mxu0 0
  %1882 = vmatprep.subr.bf16.mxu0 0
  %1883 = vmatpush1.bf16.msra.mxu0 0
  %1884 = vmatprep.subr.bf16.mxu0 0
  %1885 = vmatpush1.bf16.msra.mxu0 0
  %1886 = vmatprep.subr.bf16.mxu0 0
  %1887 = vmatpush1.bf16.msra.mxu0 0
  %1888 = vmatprep.subr.bf16.mxu0 0
  %1889 = vmatpush1.bf16.msra.mxu0 0
  %1890 = vmatprep.subr.bf16.mxu0 0
  %1891 = vmatpush1.bf16.msra.mxu0 0
  %1892 = vmatprep.subr.bf16.mxu0 0
  %1893 = vmatpush1.bf16.msra.mxu0 0
  %1894 = vmatprep.mubr.bf16.mxu0 0
  %1895 = vmatmul.mubr.bf16.gmra.mrb[0].mxu0 %v1625
  %v1896 = vpop.f32.mrb[0].mxu0
  %v1897 = vadd.f32 0.0, %v1896
  %v1898 = vpop.f32.mrb[0].mxu0
  %v1899 = vpop.f32.mrb[0].mxu0
  %v1900 = vpop.f32.mrb[0].mxu0
  %1901 = vdwg.mxu0
  %v1902 = vadd.f32 %v188, %v1897
  %v1903 = vtanh.pop %v1902
  %v1904 = vxor.u32 %v1902, 2147483648
  %v1905 = vmul.f32 %v1904, 1.442695
  %v1906 = vpow.pop %v1905
  %v1907 = vadd.f32 %v1906, 1.0
  %v1908 = vrcp.pop %v1907
  %v1909 = vmul.f32 1.0, %v1908
  %v1910 = vsel %vm203, %v1903, %v1909
  %v1911 = vmul.f32 %v1910, %v1613
  %1913 = vrot.lane.b32.xlu0 %v1910, 64
  %v1914 = vpop.permute.xlu0 %1913
  %v1916 = vmul.f32 %v1910, %v1914
  %1918 = vrot.lane.b32.xlu0 %v1916, 32
  %v1919 = vpop.permute.xlu0 %1918
  %v1921 = vadd.f32 %v1911, %v1919
  %v1922 = vtanh.pop %v1921
  %1924 = vrot.lane.b32.xlu0 %v1922, 64
  %v1925 = vpop.permute.xlu0 %1924
  %v1927 = vmul.f32 %v1910, %v1925
  %v1928 = vpack.c.bf16 %v1927, %v1927
  %1930 = vrot.lane.b32.xlu0 %v1928, 32
  %v1931 = vpop.permute.xlu0 %1930
  %v1933 = vsel %vm121, %v1931, 0
  %1935 = vmatprep.subr.bf16.mxu0 0
  %1936 = vmatpush1.bf16.msra.mxu0 %v310
  %1937 = vmatprep.subr.bf16.mxu0 0
  %1938 = vmatpush1.bf16.msra.mxu0 %v311
  %1939 = vmatprep.subr.bf16.mxu0 0
  %1940 = vmatpush1.bf16.msra.mxu0 0
  %1941 = vmatprep.subr.bf16.mxu0 0
  %1942 = vmatpush1.bf16.msra.mxu0 0
  %1943 = vmatprep.subr.bf16.mxu0 0
  %1944 = vmatpush1.bf16.msra.mxu0 0
  %1945 = vmatprep.subr.bf16.mxu0 0
  %1946 = vmatpush1.bf16.msra.mxu0 0
  %1947 = vmatprep.subr.bf16.mxu0 0
  %1948 = vmatpush1.bf16.msra.mxu0 0
  %1949 = vmatprep.subr.bf16.mxu0 0
  %1950 = vmatpush1.bf16.msra.mxu0 0
  %1951 = vmatprep.subr.bf16.mxu0 0
  %1952 = vmatpush1.bf16.msra.mxu0 0
  %1953 = vmatprep.subr.bf16.mxu0 0
  %1954 = vmatpush1.bf16.msra.mxu0 0
  %1955 = vmatprep.subr.bf16.mxu0 0
  %1956 = vmatpush1.bf16.msra.mxu0 0
  %1957 = vmatprep.subr.bf16.mxu0 0
  %1958 = vmatpush1.bf16.msra.mxu0 0
  %1959 = vmatprep.subr.bf16.mxu0 0
  %1960 = vmatpush1.bf16.msra.mxu0 0
  %1961 = vmatprep.subr.bf16.mxu0 0
  %1962 = vmatpush1.bf16.msra.mxu0 0
  %1963 = vmatprep.subr.bf16.mxu0 0
  %1964 = vmatpush1.bf16.msra.mxu0 0
  %1965 = vmatprep.subr.bf16.mxu0 0
  %1966 = vmatpush1.bf16.msra.mxu0 0
  %1967 = vmatprep.mubr.bf16.mxu0 0
  %1968 = vmatmul.mubr.bf16.gmra.mrb[0].mxu0 %v1933
  %v1969 = vpop.f32.mrb[0].mxu0
  %v1970 = vadd.f32 %v297, %v1969
  %v1971 = vpop.f32.mrb[0].mxu0
  %v1972 = vpop.f32.mrb[0].mxu0
  %v1973 = vpop.f32.mrb[0].mxu0
  %1974 = vdwg.mxu0
  %1975 = vmatprep.subr.bf16.mxu0 0
  %1976 = vmatpush1.bf16.msra.mxu0 %v365
  %1977 = vmatprep.subr.bf16.mxu0 0
  %1978 = vmatpush1.bf16.msra.mxu0 %v366
  %1979 = vmatprep.subr.bf16.mxu0 0
  %1980 = vmatpush1.bf16.msra.mxu0 0
  %1981 = vmatprep.subr.bf16.mxu0 0
  %1982 = vmatpush1.bf16.msra.mxu0 0
  %1983 = vmatprep.subr.bf16.mxu0 0
  %1984 = vmatpush1.bf16.msra.mxu0 0
  %1985 = vmatprep.subr.bf16.mxu0 0
  %1986 = vmatpush1.bf16.msra.mxu0 0
  %1987 = vmatprep.subr.bf16.mxu0 0
  %1988 = vmatpush1.bf16.msra.mxu0 0
  %1989 = vmatprep.subr.bf16.mxu0 0
  %1990 = vmatpush1.bf16.msra.mxu0 0
  %1991 = vmatprep.subr.bf16.mxu0 0
  %1992 = vmatpush1.bf16.msra.mxu0 0
  %1993 = vmatprep.subr.bf16.mxu0 0
  %1994 = vmatpush1.bf16.msra.mxu0 0
  %1995 = vmatprep.subr.bf16.mxu0 0
  %1996 = vmatpush1.bf16.msra.mxu0 0
  %1997 = vmatprep.subr.bf16.mxu0 0
  %1998 = vmatpush1.bf16.msra.mxu0 0
  %1999 = vmatprep.subr.bf16.mxu0 0
  %2000 = vmatpush1.bf16.msra.mxu0 0
  %2001 = vmatprep.subr.bf16.mxu0 0
  %2002 = vmatpush1.bf16.msra.mxu0 0
  %2003 = vmatprep.subr.bf16.mxu0 0
  %2004 = vmatpush1.bf16.msra.mxu0 0
  %2005 = vmatprep.subr.bf16.mxu0 0
  %2006 = vmatpush1.bf16.msra.mxu0 0
  %2007 = vmatprep.mubr.bf16.mxu0 0
  %2008 = vmatmul.mubr.bf16.gmra.mrb[0].mxu0 %v1744
  %v2009 = vpop.f32.mrb[0].mxu0
  %v2010 = vadd.f32 0.0, %v2009
  %v2011 = vpop.f32.mrb[0].mxu0
  %v2012 = vpop.f32.mrb[0].mxu0
  %v2013 = vpop.f32.mrb[0].mxu0
  %2014 = vdwg.mxu0
  %v2015 = vadd.f32 %v1970, %v2010
  %v2016 = vtanh.pop %v2015
  %v2017 = vxor.u32 %v2015, 2147483648
  %v2018 = vmul.f32 %v2017, 1.442695
  %v2019 = vpow.pop %v2018
  %v2020 = vadd.f32 %v2019, 1.0
  %v2021 = vrcp.pop %v2020
  %v2022 = vmul.f32 1.0, %v2021
  %v2023 = vsel %vm203, %v2016, %v2022
  %v2024 = vmul.f32 %v2023, %v1726
  %2026 = vrot.lane.b32.xlu0 %v2023, 64
  %v2027 = vpop.permute.xlu0 %2026
  %v2029 = vmul.f32 %v2023, %v2027
  %2031 = vrot.lane.b32.xlu0 %v2029, 32
  %v2032 = vpop.permute.xlu0 %2031
  %v2034 = vadd.f32 %v2024, %v2032
  %v2035 = vtanh.pop %v2034
  %2037 = vrot.lane.b32.xlu0 %v2035, 64
  %v2038 = vpop.permute.xlu0 %2037
  %v2040 = vmul.f32 %v2023, %v2038
  %2042 = vrot.lane.b32.xlu0 %v2040, 32
  %v2043 = vpop.permute.xlu0 %2042
  %s2045 = scalar_lea.vmem %s12, 40
  %2046 = vst.msk [vmem:[%s2045] sm:$0xff] %vm121, %v2043
  %v2047 = vpack.c.bf16 %v2040, %v2040
  %2049 = vrot.lane.b32.xlu0 %v2047, 32
  %v2050 = vpop.permute.xlu0 %2049
  %v2052 = vsel %vm121, %v2050, 0
  %2054 = vmatprep.subr.bf16.mxu0 %v468
  %2055 = vmatpush1.bf16.msra.mxu0 %v467
  %2056 = vmatprep.subr.bf16.mxu0 %v470
  %2057 = vmatpush1.bf16.msra.mxu0 %v469
  %2058 = vmatprep.subr.bf16.mxu0 0
  %2059 = vmatpush1.bf16.msra.mxu0 0
  %2060 = vmatprep.subr.bf16.mxu0 0
  %2061 = vmatpush1.bf16.msra.mxu0 0
  %2062 = vmatprep.subr.bf16.mxu0 0
  %2063 = vmatpush1.bf16.msra.mxu0 0
  %2064 = vmatprep.subr.bf16.mxu0 0
  %2065 = vmatpush1.bf16.msra.mxu0 0
  %2066 = vmatprep.subr.bf16.mxu0 0
  %2067 = vmatpush1.bf16.msra.mxu0 0
  %2068 = vmatprep.subr.bf16.mxu0 0
  %2069 = vmatpush1.bf16.msra.mxu0 0
  %2070 = vmatprep.subr.bf16.mxu0 0
  %2071 = vmatpush1.bf16.msra.mxu0 0
  %2072 = vmatprep.subr.bf16.mxu0 0
  %2073 = vmatpush1.bf16.msra.mxu0 0
  %2074 = vmatprep.subr.bf16.mxu0 0
  %2075 = vmatpush1.bf16.msra.mxu0 0
  %2076 = vmatprep.subr.bf16.mxu0 0
  %2077 = vmatpush1.bf16.msra.mxu0 0
  %2078 = vmatprep.subr.bf16.mxu0 0
  %2079 = vmatpush1.bf16.msra.mxu0 0
  %2080 = vmatprep.subr.bf16.mxu0 0
  %2081 = vmatpush1.bf16.msra.mxu0 0
  %2082 = vmatprep.subr.bf16.mxu0 0
  %2083 = vmatpush1.bf16.msra.mxu0 0
  %2084 = vmatprep.subr.bf16.mxu0 0
  %2085 = vmatpush1.bf16.msra.mxu0 0
  %2086 = vmatprep.mubr.bf16.mxu0 0
  %2087 = vmatmul.mubr.bf16.gmra.mrb[0].mxu0 %v2052
  %v2088 = vpop.f32.mrb[0].mxu0
  %v2089 = vadd.f32 %v445, %v2088
  %v2090 = vpop.f32.mrb[0].mxu0
  %v2091 = vadd.f32 %v449, %v2090
  %v2092 = vpop.f32.mrb[0].mxu0
  %v2093 = vpop.f32.mrb[0].mxu0
  %2094 = vdwg.mxu0
  %v2095 = vpack.c.bf16 %v1861, %v1861
  %2097 = vrot.lane.b32.xlu0 %v2095, 64
  %v2098 = vpop.permute.xlu0 %2097
  %v2100 = vsel %vm559, %v2098, 0
  %2102 = vmatprep.subr.bf16.mxu0 %v544
  %2103 = vmatpush1.bf16.msra.mxu0 %v543
  %2104 = vmatprep.subr.bf16.mxu0 %v546
  %2105 = vmatpush1.bf16.msra.mxu0 %v545
  %2106 = vmatprep.subr.bf16.mxu0 %v548
  %2107 = vmatpush1.bf16.msra.mxu0 %v547
  %2108 = vmatprep.subr.bf16.mxu0 %v550
  %2109 = vmatpush1.bf16.msra.mxu0 %v549
  %2110 = vmatprep.subr.bf16.mxu0 0
  %2111 = vmatpush1.bf16.msra.mxu0 0
  %2112 = vmatprep.subr.bf16.mxu0 0
  %2113 = vmatpush1.bf16.msra.mxu0 0
  %2114 = vmatprep.subr.bf16.mxu0 0
  %2115 = vmatpush1.bf16.msra.mxu0 0
  %2116 = vmatprep.subr.bf16.mxu0 0
  %2117 = vmatpush1.bf16.msra.mxu0 0
  %2118 = vmatprep.subr.bf16.mxu0 0
  %2119 = vmatpush1.bf16.msra.mxu0 0
  %2120 = vmatprep.subr.bf16.mxu0 0
  %2121 = vmatpush1.bf16.msra.mxu0 0
  %2122 = vmatprep.subr.bf16.mxu0 0
  %2123 = vmatpush1.bf16.msra.mxu0 0
  %2124 = vmatprep.subr.bf16.mxu0 0
  %2125 = vmatpush1.bf16.msra.mxu0 0
  %2126 = vmatprep.subr.bf16.mxu0 0
  %2127 = vmatpush1.bf16.msra.mxu0 0
  %2128 = vmatprep.subr.bf16.mxu0 0
  %2129 = vmatpush1.bf16.msra.mxu0 0
  %2130 = vmatprep.subr.bf16.mxu0 0
  %2131 = vmatpush1.bf16.msra.mxu0 0
  %2132 = vmatprep.subr.bf16.mxu0 0
  %2133 = vmatpush1.bf16.msra.mxu0 0
  %2134 = vmatprep.mubr.bf16.mxu0 0
  %2135 = vmatmul.mubr.bf16.gmra.mrb[0].mxu0 %v2100
  %v2136 = vpop.f32.mrb[0].mxu0
  %v2137 = vadd.f32 0.0, %v2136
  %v2138 = vpop.f32.mrb[0].mxu0
  %v2139 = vadd.f32 0.0, %v2138
  %v2140 = vpop.f32.mrb[0].mxu0
  %v2141 = vpop.f32.mrb[0].mxu0
  %2142 = vdwg.mxu0
  %v2143 = vadd.f32 %v2089, %v2137
  %v2144 = vadd.f32 %v2091, %v2139
  %v2145 = vtanh.pop %v2143
  %v2146 = vtanh.pop %v2144
  %v2147 = vxor.u32 %v2143, 2147483648
  %v2148 = vxor.u32 %v2144, 2147483648
  %v2149 = vmul.f32 %v2147, 1.442695
  %v2150 = vpow.pop %v2149
  %v2151 = vmul.f32 %v2148, 1.442695
  %v2152 = vpow.pop %v2151
  %v2153 = vadd.f32 %v2150, 1.0
  %v2154 = vadd.f32 %v2152, 1.0
  %v2155 = vrcp.pop %v2153
  %v2156 = vmul.f32 1.0, %v2155
  %v2157 = vrcp.pop %v2154
  %v2158 = vmul.f32 1.0, %v2157
  %v2159 = vsel %vm209, %v2145, %v2156
  %v2160 = vsel %vm210, %v2146, %v2158
  %v2161 = vmul.f32 %v2159, %v1859
  %v2162 = vmul.f32 %v2159, %v2160
  %2164 = vrot.lane.b32.xlu0 %v2162, 64
  %v2165 = vpop.permute.xlu0 %2164
  %v2167 = vadd.f32 %v2161, %v2165
  %v2168 = vtanh.pop %v2167
  %v2169 = vmul.f32 %v2160, %v2168
  %2170 = vmatprep.subr.bf16.mxu0 0
  %2171 = vmatpush1.bf16.msra.mxu0 %v219
  %2172 = vmatprep.subr.bf16.mxu0 0
  %2173 = vmatpush1.bf16.msra.mxu0 %v220
  %2174 = vmatprep.subr.bf16.mxu0 0
  %2175 = vmatpush1.bf16.msra.mxu0 0
  %2176 = vmatprep.subr.bf16.mxu0 0
  %2177 = vmatpush1.bf16.msra.mxu0 0
  %2178 = vmatprep.subr.bf16.mxu0 0
  %2179 = vmatpush1.bf16.msra.mxu0 0
  %2180 = vmatprep.subr.bf16.mxu0 0
  %2181 = vmatpush1.bf16.msra.mxu0 0
  %2182 = vmatprep.subr.bf16.mxu0 0
  %2183 = vmatpush1.bf16.msra.mxu0 0
  %2184 = vmatprep.subr.bf16.mxu0 0
  %2185 = vmatpush1.bf16.msra.mxu0 0
  %2186 = vmatprep.subr.bf16.mxu0 0
  %2187 = vmatpush1.bf16.msra.mxu0 0
  %2188 = vmatprep.subr.bf16.mxu0 0
  %2189 = vmatpush1.bf16.msra.mxu0 0
  %2190 = vmatprep.subr.bf16.mxu0 0
  %2191 = vmatpush1.bf16.msra.mxu0 0
  %2192 = vmatprep.subr.bf16.mxu0 0
  %2193 = vmatpush1.bf16.msra.mxu0 0
  %2194 = vmatprep.subr.bf16.mxu0 0
  %2195 = vmatpush1.bf16.msra.mxu0 0
  %2196 = vmatprep.subr.bf16.mxu0 0
  %2197 = vmatpush1.bf16.msra.mxu0 0
  %2198 = vmatprep.subr.bf16.mxu0 0
  %2199 = vmatpush1.bf16.msra.mxu0 0
  %2200 = vmatprep.subr.bf16.mxu0 0
  %2201 = vmatpush1.bf16.msra.mxu0 0
  %2202 = vmatprep.mubr.bf16.mxu0 0
  %2203 = vmatmul.mubr.bf16.gmra.mrb[0].mxu0 %v1933
  %v2204 = vpop.f32.mrb[0].mxu0
  %v2205 = vadd.f32 0.0, %v2204
  %v2206 = vpop.f32.mrb[0].mxu0
  %v2207 = vpop.f32.mrb[0].mxu0
  %v2208 = vpop.f32.mrb[0].mxu0
  %2209 = vdwg.mxu0
  %v2210 = vadd.f32 %v193, %v2205
  %v2211 = vtanh.pop %v2210
  %v2212 = vxor.u32 %v2210, 2147483648
  %v2213 = vmul.f32 %v2212, 1.442695
  %v2214 = vpow.pop %v2213
  %v2215 = vadd.f32 %v2214, 1.0
  %v2216 = vrcp.pop %v2215
  %v2217 = vmul.f32 1.0, %v2216
  %v2218 = vsel %vm203, %v2211, %v2217
  %v2219 = vmul.f32 %v2218, %v1921
  %2221 = vrot.lane.b32.xlu0 %v2218, 64
  %v2222 = vpop.permute.xlu0 %2221
  %v2224 = vmul.f32 %v2218, %v2222
  %2226 = vrot.lane.b32.xlu0 %v2224, 32
  %v2227 = vpop.permute.xlu0 %2226
  %v2229 = vadd.f32 %v2219, %v2227
  %v2230 = vtanh.pop %v2229
  %2232 = vrot.lane.b32.xlu0 %v2230, 64
  %v2233 = vpop.permute.xlu0 %2232
  %v2235 = vmul.f32 %v2218, %v2233
  %v2236 = vpack.c.bf16 %v2235, %v2235
  %2238 = vrot.lane.b32.xlu0 %v2236, 32
  %v2239 = vpop.permute.xlu0 %2238
  %v2241 = vsel %vm121, %v2239, 0
  %2243 = vmatprep.subr.bf16.mxu0 0
  %2244 = vmatpush1.bf16.msra.mxu0 %v310
  %2245 = vmatprep.subr.bf16.mxu0 0
  %2246 = vmatpush1.bf16.msra.mxu0 %v311
  %2247 = vmatprep.subr.bf16.mxu0 0
  %2248 = vmatpush1.bf16.msra.mxu0 0
  %2249 = vmatprep.subr.bf16.mxu0 0
  %2250 = vmatpush1.bf16.msra.mxu0 0
  %2251 = vmatprep.subr.bf16.mxu0 0
  %2252 = vmatpush1.bf16.msra.mxu0 0
  %2253 = vmatprep.subr.bf16.mxu0 0
  %2254 = vmatpush1.bf16.msra.mxu0 0
  %2255 = vmatprep.subr.bf16.mxu0 0
  %2256 = vmatpush1.bf16.msra.mxu0 0
  %2257 = vmatprep.subr.bf16.mxu0 0
  %2258 = vmatpush1.bf16.msra.mxu0 0
  %2259 = vmatprep.subr.bf16.mxu0 0
  %2260 = vmatpush1.bf16.msra.mxu0 0
  %2261 = vmatprep.subr.bf16.mxu0 0
  %2262 = vmatpush1.bf16.msra.mxu0 0
  %2263 = vmatprep.subr.bf16.mxu0 0
  %2264 = vmatpush1.bf16.msra.mxu0 0
  %2265 = vmatprep.subr.bf16.mxu0 0
  %2266 = vmatpush1.bf16.msra.mxu0 0
  %2267 = vmatprep.subr.bf16.mxu0 0
  %2268 = vmatpush1.bf16.msra.mxu0 0
  %2269 = vmatprep.subr.bf16.mxu0 0
  %2270 = vmatpush1.bf16.msra.mxu0 0
  %2271 = vmatprep.subr.bf16.mxu0 0
  %2272 = vmatpush1.bf16.msra.mxu0 0
  %2273 = vmatprep.subr.bf16.mxu0 0
  %2274 = vmatpush1.bf16.msra.mxu0 0
  %2275 = vmatprep.mubr.bf16.mxu0 0
  %2276 = vmatmul.mubr.bf16.gmra.mrb[0].mxu0 %v2241
  %v2277 = vpop.f32.mrb[0].mxu0
  %v2278 = vadd.f32 %v297, %v2277
  %v2279 = vpop.f32.mrb[0].mxu0
  %v2280 = vpop.f32.mrb[0].mxu0
  %v2281 = vpop.f32.mrb[0].mxu0
  %2282 = vdwg.mxu0
  %2283 = vmatprep.subr.bf16.mxu0 0
  %2284 = vmatpush1.bf16.msra.mxu0 %v365
  %2285 = vmatprep.subr.bf16.mxu0 0
  %2286 = vmatpush1.bf16.msra.mxu0 %v366
  %2287 = vmatprep.subr.bf16.mxu0 0
  %2288 = vmatpush1.bf16.msra.mxu0 0
  %2289 = vmatprep.subr.bf16.mxu0 0
  %2290 = vmatpush1.bf16.msra.mxu0 0
  %2291 = vmatprep.subr.bf16.mxu0 0
  %2292 = vmatpush1.bf16.msra.mxu0 0
  %2293 = vmatprep.subr.bf16.mxu0 0
  %2294 = vmatpush1.bf16.msra.mxu0 0
  %2295 = vmatprep.subr.bf16.mxu0 0
  %2296 = vmatpush1.bf16.msra.mxu0 0
  %2297 = vmatprep.subr.bf16.mxu0 0
  %2298 = vmatpush1.bf16.msra.mxu0 0
  %2299 = vmatprep.subr.bf16.mxu0 0
  %2300 = vmatpush1.bf16.msra.mxu0 0
  %2301 = vmatprep.subr.bf16.mxu0 0
  %2302 = vmatpush1.bf16.msra.mxu0 0
  %2303 = vmatprep.subr.bf16.mxu0 0
  %2304 = vmatpush1.bf16.msra.mxu0 0
  %2305 = vmatprep.subr.bf16.mxu0 0
  %2306 = vmatpush1.bf16.msra.mxu0 0
  %2307 = vmatprep.subr.bf16.mxu0 0
  %2308 = vmatpush1.bf16.msra.mxu0 0
  %2309 = vmatprep.subr.bf16.mxu0 0
  %2310 = vmatpush1.bf16.msra.mxu0 0
  %2311 = vmatprep.subr.bf16.mxu0 0
  %2312 = vmatpush1.bf16.msra.mxu0 0
  %2313 = vmatprep.subr.bf16.mxu0 0
  %2314 = vmatpush1.bf16.msra.mxu0 0
  %2315 = vmatprep.mubr.bf16.mxu0 0
  %2316 = vmatmul.mubr.bf16.gmra.mrb[0].mxu0 %v2052
  %v2317 = vpop.f32.mrb[0].mxu0
  %v2318 = vadd.f32 0.0, %v2317
  %v2319 = vpop.f32.mrb[0].mxu0
  %v2320 = vpop.f32.mrb[0].mxu0
  %v2321 = vpop.f32.mrb[0].mxu0
  %2322 = vdwg.mxu0
  %v2323 = vadd.f32 %v2278, %v2318
  %v2324 = vtanh.pop %v2323
  %v2325 = vxor.u32 %v2323, 2147483648
  %v2326 = vmul.f32 %v2325, 1.442695
  %v2327 = vpow.pop %v2326
  %v2328 = vadd.f32 %v2327, 1.0
  %v2329 = vrcp.pop %v2328
  %v2330 = vmul.f32 1.0, %v2329
  %v2331 = vsel %vm203, %v2324, %v2330
  %v2332 = vmul.f32 %v2331, %v2034
  %2334 = vrot.lane.b32.xlu0 %v2331, 64
  %v2335 = vpop.permute.xlu0 %2334
  %v2337 = vmul.f32 %v2331, %v2335
  %2339 = vrot.lane.b32.xlu0 %v2337, 32
  %v2340 = vpop.permute.xlu0 %2339
  %v2342 = vadd.f32 %v2332, %v2340
  %v2343 = vtanh.pop %v2342
  %2345 = vrot.lane.b32.xlu0 %v2343, 64
  %v2346 = vpop.permute.xlu0 %2345
  %v2348 = vmul.f32 %v2331, %v2346
  %2350 = vrot.lane.b32.xlu0 %v2348, 32
  %v2351 = vpop.permute.xlu0 %2350
  %s2353 = scalar_lea.vmem %s12, 48
  %2354 = vst.msk [vmem:[%s2353] sm:$0xff] %vm121, %v2351
  %v2355 = vpack.c.bf16 %v2348, %v2348
  %2357 = vrot.lane.b32.xlu0 %v2355, 32
  %v2358 = vpop.permute.xlu0 %2357
  %v2360 = vsel %vm121, %v2358, 0
  %2362 = vmatprep.subr.bf16.mxu0 %v468
  %2363 = vmatpush1.bf16.msra.mxu0 %v467
  %2364 = vmatprep.subr.bf16.mxu0 %v470
  %2365 = vmatpush1.bf16.msra.mxu0 %v469
  %2366 = vmatprep.subr.bf16.mxu0 0
  %2367 = vmatpush1.bf16.msra.mxu0 0
  %2368 = vmatprep.subr.bf16.mxu0 0
  %2369 = vmatpush1.bf16.msra.mxu0 0
  %2370 = vmatprep.subr.bf16.mxu0 0
  %2371 = vmatpush1.bf16.msra.mxu0 0
  %2372 = vmatprep.subr.bf16.mxu0 0
  %2373 = vmatpush1.bf16.msra.mxu0 0
  %2374 = vmatprep.subr.bf16.mxu0 0
  %2375 = vmatpush1.bf16.msra.mxu0 0
  %2376 = vmatprep.subr.bf16.mxu0 0
  %2377 = vmatpush1.bf16.msra.mxu0 0
  %2378 = vmatprep.subr.bf16.mxu0 0
  %2379 = vmatpush1.bf16.msra.mxu0 0
  %2380 = vmatprep.subr.bf16.mxu0 0
  %2381 = vmatpush1.bf16.msra.mxu0 0
  %2382 = vmatprep.subr.bf16.mxu0 0
  %2383 = vmatpush1.bf16.msra.mxu0 0
  %2384 = vmatprep.subr.bf16.mxu0 0
  %2385 = vmatpush1.bf16.msra.mxu0 0
  %2386 = vmatprep.subr.bf16.mxu0 0
  %2387 = vmatpush1.bf16.msra.mxu0 0
  %2388 = vmatprep.subr.bf16.mxu0 0
  %2389 = vmatpush1.bf16.msra.mxu0 0
  %2390 = vmatprep.subr.bf16.mxu0 0
  %2391 = vmatpush1.bf16.msra.mxu0 0
  %2392 = vmatprep.subr.bf16.mxu0 0
  %2393 = vmatpush1.bf16.msra.mxu0 0
  %2394 = vmatprep.mubr.bf16.mxu0 0
  %2395 = vmatmul.mubr.bf16.gmra.mrb[0].mxu0 %v2360
  %v2396 = vpop.f32.mrb[0].mxu0
  %v2397 = vadd.f32 %v445, %v2396
  %v2398 = vpop.f32.mrb[0].mxu0
  %v2399 = vadd.f32 %v449, %v2398
  %v2400 = vpop.f32.mrb[0].mxu0
  %v2401 = vpop.f32.mrb[0].mxu0
  %2402 = vdwg.mxu0
  %v2403 = vpack.c.bf16 %v2169, %v2169
  %2405 = vrot.lane.b32.xlu0 %v2403, 64
  %v2406 = vpop.permute.xlu0 %2405
  %v2408 = vsel %vm559, %v2406, 0
  %2410 = vmatprep.subr.bf16.mxu0 %v544
  %2411 = vmatpush1.bf16.msra.mxu0 %v543
  %2412 = vmatprep.subr.bf16.mxu0 %v546
  %2413 = vmatpush1.bf16.msra.mxu0 %v545
  %2414 = vmatprep.subr.bf16.mxu0 %v548
  %2415 = vmatpush1.bf16.msra.mxu0 %v547
  %2416 = vmatprep.subr.bf16.mxu0 %v550
  %2417 = vmatpush1.bf16.msra.mxu0 %v549
  %2418 = vmatprep.subr.bf16.mxu0 0
  %2419 = vmatpush1.bf16.msra.mxu0 0
  %2420 = vmatprep.subr.bf16.mxu0 0
  %2421 = vmatpush1.bf16.msra.mxu0 0
  %2422 = vmatprep.subr.bf16.mxu0 0
  %2423 = vmatpush1.bf16.msra.mxu0 0
  %2424 = vmatprep.subr.bf16.mxu0 0
  %2425 = vmatpush1.bf16.msra.mxu0 0
  %2426 = vmatprep.subr.bf16.mxu0 0
  %2427 = vmatpush1.bf16.msra.mxu0 0
  %2428 = vmatprep.subr.bf16.mxu0 0
  %2429 = vmatpush1.bf16.msra.mxu0 0
  %2430 = vmatprep.subr.bf16.mxu0 0
  %2431 = vmatpush1.bf16.msra.mxu0 0
  %2432 = vmatprep.subr.bf16.mxu0 0
  %2433 = vmatpush1.bf16.msra.mxu0 0
  %2434 = vmatprep.subr.bf16.mxu0 0
  %2435 = vmatpush1.bf16.msra.mxu0 0
  %2436 = vmatprep.subr.bf16.mxu0 0
  %2437 = vmatpush1.bf16.msra.mxu0 0
  %2438 = vmatprep.subr.bf16.mxu0 0
  %2439 = vmatpush1.bf16.msra.mxu0 0
  %2440 = vmatprep.subr.bf16.mxu0 0
  %2441 = vmatpush1.bf16.msra.mxu0 0
  %2442 = vmatprep.mubr.bf16.mxu0 0
  %2443 = vmatmul.mubr.bf16.gmra.mrb[0].mxu0 %v2408
  %v2444 = vpop.f32.mrb[0].mxu0
  %v2445 = vadd.f32 0.0, %v2444
  %v2446 = vpop.f32.mrb[0].mxu0
  %v2447 = vadd.f32 0.0, %v2446
  %v2448 = vpop.f32.mrb[0].mxu0
  %v2449 = vpop.f32.mrb[0].mxu0
  %2450 = vdwg.mxu0
  %v2451 = vadd.f32 %v2397, %v2445
  %v2452 = vadd.f32 %v2399, %v2447
  %v2453 = vtanh.pop %v2451
  %v2454 = vtanh.pop %v2452
  %v2455 = vxor.u32 %v2451, 2147483648
  %v2456 = vxor.u32 %v2452, 2147483648
  %v2457 = vmul.f32 %v2455, 1.442695
  %v2458 = vpow.pop %v2457
  %v2459 = vmul.f32 %v2456, 1.442695
  %v2460 = vpow.pop %v2459
  %v2461 = vadd.f32 %v2458, 1.0
  %v2462 = vadd.f32 %v2460, 1.0
  %v2463 = vrcp.pop %v2461
  %v2464 = vmul.f32 1.0, %v2463
  %v2465 = vrcp.pop %v2462
  %v2466 = vmul.f32 1.0, %v2465
  %v2467 = vsel %vm209, %v2453, %v2464
  %v2468 = vsel %vm210, %v2454, %v2466
  %v2469 = vmul.f32 %v2467, %v2167
  %v2470 = vmul.f32 %v2467, %v2468
  %2472 = vrot.lane.b32.xlu0 %v2470, 64
  %v2473 = vpop.permute.xlu0 %2472
  %v2475 = vadd.f32 %v2469, %v2473
  %v2476 = vtanh.pop %v2475
  %v2477 = vmul.f32 %v2468, %v2476
  %2478 = vmatprep.subr.bf16.mxu0 0
  %2479 = vmatpush1.bf16.msra.mxu0 %v219
  %2480 = vmatprep.subr.bf16.mxu0 0
  %2481 = vmatpush1.bf16.msra.mxu0 %v220
  %2482 = vmatprep.subr.bf16.mxu0 0
  %2483 = vmatpush1.bf16.msra.mxu0 0
  %2484 = vmatprep.subr.bf16.mxu0 0
  %2485 = vmatpush1.bf16.msra.mxu0 0
  %2486 = vmatprep.subr.bf16.mxu0 0
  %2487 = vmatpush1.bf16.msra.mxu0 0
  %2488 = vmatprep.subr.bf16.mxu0 0
  %2489 = vmatpush1.bf16.msra.mxu0 0
  %2490 = vmatprep.subr.bf16.mxu0 0
  %2491 = vmatpush1.bf16.msra.mxu0 0
  %2492 = vmatprep.subr.bf16.mxu0 0
  %2493 = vmatpush1.bf16.msra.mxu0 0
  %2494 = vmatprep.subr.bf16.mxu0 0
  %2495 = vmatpush1.bf16.msra.mxu0 0
  %2496 = vmatprep.subr.bf16.mxu0 0
  %2497 = vmatpush1.bf16.msra.mxu0 0
  %2498 = vmatprep.subr.bf16.mxu0 0
  %2499 = vmatpush1.bf16.msra.mxu0 0
  %2500 = vmatprep.subr.bf16.mxu0 0
  %2501 = vmatpush1.bf16.msra.mxu0 0
  %2502 = vmatprep.subr.bf16.mxu0 0
  %2503 = vmatpush1.bf16.msra.mxu0 0
  %2504 = vmatprep.subr.bf16.mxu0 0
  %2505 = vmatpush1.bf16.msra.mxu0 0
  %2506 = vmatprep.subr.bf16.mxu0 0
  %2507 = vmatpush1.bf16.msra.mxu0 0
  %2508 = vmatprep.subr.bf16.mxu0 0
  %2509 = vmatpush1.bf16.msra.mxu0 0
  %2510 = vmatprep.mubr.bf16.mxu0 0
  %2511 = vmatmul.mubr.bf16.gmra.mrb[0].mxu0 %v2241
  %v2512 = vpop.f32.mrb[0].mxu0
  %v2513 = vadd.f32 0.0, %v2512
  %v2514 = vpop.f32.mrb[0].mxu0
  %v2515 = vpop.f32.mrb[0].mxu0
  %v2516 = vpop.f32.mrb[0].mxu0
  %2517 = vdwg.mxu0
  %v2518 = vadd.f32 %v196, %v2513
  %v2519 = vtanh.pop %v2518
  %v2520 = vxor.u32 %v2518, 2147483648
  %v2521 = vmul.f32 %v2520, 1.442695
  %v2522 = vpow.pop %v2521
  %v2523 = vadd.f32 %v2522, 1.0
  %v2524 = vrcp.pop %v2523
  %v2525 = vmul.f32 1.0, %v2524
  %v2526 = vsel %vm203, %v2519, %v2525
  %v2527 = vmul.f32 %v2526, %v2229
  %2529 = vrot.lane.b32.xlu0 %v2526, 64
  %v2530 = vpop.permute.xlu0 %2529
  %v2532 = vmul.f32 %v2526, %v2530
  %2534 = vrot.lane.b32.xlu0 %v2532, 32
  %v2535 = vpop.permute.xlu0 %2534
  %v2537 = vadd.f32 %v2527, %v2535
  %v2538 = vtanh.pop %v2537
  %2540 = vrot.lane.b32.xlu0 %v2538, 64
  %v2541 = vpop.permute.xlu0 %2540
  %v2543 = vmul.f32 %v2526, %v2541
  %v2544 = vpack.c.bf16 %v2543, %v2543
  %2546 = vrot.lane.b32.xlu0 %v2544, 32
  %v2547 = vpop.permute.xlu0 %2546
  %v2549 = vsel %vm121, %v2547, 0
  %2551 = vmatprep.subr.bf16.mxu0 0
  %2552 = vmatpush1.bf16.msra.mxu0 %v310
  %2553 = vmatprep.subr.bf16.mxu0 0
  %2554 = vmatpush1.bf16.msra.mxu0 %v311
  %2555 = vmatprep.subr.bf16.mxu0 0
  %2556 = vmatpush1.bf16.msra.mxu0 0
  %2557 = vmatprep.subr.bf16.mxu0 0
  %2558 = vmatpush1.bf16.msra.mxu0 0
  %2559 = vmatprep.subr.bf16.mxu0 0
  %2560 = vmatpush1.bf16.msra.mxu0 0
  %2561 = vmatprep.subr.bf16.mxu0 0
  %2562 = vmatpush1.bf16.msra.mxu0 0
  %2563 = vmatprep.subr.bf16.mxu0 0
  %2564 = vmatpush1.bf16.msra.mxu0 0
  %2565 = vmatprep.subr.bf16.mxu0 0
  %2566 = vmatpush1.bf16.msra.mxu0 0
  %2567 = vmatprep.subr.bf16.mxu0 0
  %2568 = vmatpush1.bf16.msra.mxu0 0
  %2569 = vmatprep.subr.bf16.mxu0 0
  %2570 = vmatpush1.bf16.msra.mxu0 0
  %2571 = vmatprep.subr.bf16.mxu0 0
  %2572 = vmatpush1.bf16.msra.mxu0 0
  %2573 = vmatprep.subr.bf16.mxu0 0
  %2574 = vmatpush1.bf16.msra.mxu0 0
  %2575 = vmatprep.subr.bf16.mxu0 0
  %2576 = vmatpush1.bf16.msra.mxu0 0
  %2577 = vmatprep.subr.bf16.mxu0 0
  %2578 = vmatpush1.bf16.msra.mxu0 0
  %2579 = vmatprep.subr.bf16.mxu0 0
  %2580 = vmatpush1.bf16.msra.mxu0 0
  %2581 = vmatprep.subr.bf16.mxu0 0
  %2582 = vmatpush1.bf16.msra.mxu0 0
  %2583 = vmatprep.mubr.bf16.mxu0 0
  %2584 = vmatmul.mubr.bf16.gmra.mrb[0].mxu0 %v2549
  %v2585 = vpop.f32.mrb[0].mxu0
  %v2586 = vadd.f32 %v297, %v2585
  %v2587 = vpop.f32.mrb[0].mxu0
  %v2588 = vpop.f32.mrb[0].mxu0
  %v2589 = vpop.f32.mrb[0].mxu0
  %2590 = vdwg.mxu0
  %2591 = vmatprep.subr.bf16.mxu0 0
  %2592 = vmatpush1.bf16.msra.mxu0 %v365
  %2593 = vmatprep.subr.bf16.mxu0 0
  %2594 = vmatpush1.bf16.msra.mxu0 %v366
  %2595 = vmatprep.subr.bf16.mxu0 0
  %2596 = vmatpush1.bf16.msra.mxu0 0
  %2597 = vmatprep.subr.bf16.mxu0 0
  %2598 = vmatpush1.bf16.msra.mxu0 0
  %2599 = vmatprep.subr.bf16.mxu0 0
  %2600 = vmatpush1.bf16.msra.mxu0 0
  %2601 = vmatprep.subr.bf16.mxu0 0
  %2602 = vmatpush1.bf16.msra.mxu0 0
  %2603 = vmatprep.subr.bf16.mxu0 0
  %2604 = vmatpush1.bf16.msra.mxu0 0
  %2605 = vmatprep.subr.bf16.mxu0 0
  %2606 = vmatpush1.bf16.msra.mxu0 0
  %2607 = vmatprep.subr.bf16.mxu0 0
  %2608 = vmatpush1.bf16.msra.mxu0 0
  %2609 = vmatprep.subr.bf16.mxu0 0
  %2610 = vmatpush1.bf16.msra.mxu0 0
  %2611 = vmatprep.subr.bf16.mxu0 0
  %2612 = vmatpush1.bf16.msra.mxu0 0
  %2613 = vmatprep.subr.bf16.mxu0 0
  %2614 = vmatpush1.bf16.msra.mxu0 0
  %2615 = vmatprep.subr.bf16.mxu0 0
  %2616 = vmatpush1.bf16.msra.mxu0 0
  %2617 = vmatprep.subr.bf16.mxu0 0
  %2618 = vmatpush1.bf16.msra.mxu0 0
  %2619 = vmatprep.subr.bf16.mxu0 0
  %2620 = vmatpush1.bf16.msra.mxu0 0
  %2621 = vmatprep.subr.bf16.mxu0 0
  %2622 = vmatpush1.bf16.msra.mxu0 0
  %2623 = vmatprep.mubr.bf16.mxu0 0
  %2624 = vmatmul.mubr.bf16.gmra.mrb[0].mxu0 %v2360
  %v2625 = vpop.f32.mrb[0].mxu0
  %v2626 = vadd.f32 0.0, %v2625
  %v2627 = vpop.f32.mrb[0].mxu0
  %v2628 = vpop.f32.mrb[0].mxu0
  %v2629 = vpop.f32.mrb[0].mxu0
  %2630 = vdwg.mxu0
  %v2631 = vadd.f32 %v2586, %v2626
  %v2632 = vtanh.pop %v2631
  %v2633 = vxor.u32 %v2631, 2147483648
  %v2634 = vmul.f32 %v2633, 1.442695
  %v2635 = vpow.pop %v2634
  %v2636 = vadd.f32 %v2635, 1.0
  %v2637 = vrcp.pop %v2636
  %v2638 = vmul.f32 1.0, %v2637
  %v2639 = vsel %vm203, %v2632, %v2638
  %v2640 = vmul.f32 %v2639, %v2342
  %2642 = vrot.lane.b32.xlu0 %v2639, 64
  %v2643 = vpop.permute.xlu0 %2642
  %v2645 = vmul.f32 %v2639, %v2643
  %2647 = vrot.lane.b32.xlu0 %v2645, 32
  %v2648 = vpop.permute.xlu0 %2647
  %v2650 = vadd.f32 %v2640, %v2648
  %v2651 = vtanh.pop %v2650
  %2653 = vrot.lane.b32.xlu0 %v2651, 64
  %v2654 = vpop.permute.xlu0 %2653
  %v2656 = vmul.f32 %v2639, %v2654
  %2658 = vrot.lane.b32.xlu0 %v2656, 32
  %v2659 = vpop.permute.xlu0 %2658
  %s2661 = scalar_lea.vmem %s12, 56
  %2662 = vst.msk [vmem:[%s2661] sm:$0xff] %vm121, %v2659
  %v2663 = vpack.c.bf16 %v2656, %v2656
  %2665 = vrot.lane.b32.xlu0 %v2663, 32
  %v2666 = vpop.permute.xlu0 %2665
  %v2668 = vsel %vm121, %v2666, 0
  %2670 = vmatprep.subr.bf16.mxu0 %v468
  %2671 = vmatpush1.bf16.msra.mxu0 %v467
  %2672 = vmatprep.subr.bf16.mxu0 %v470
  %2673 = vmatpush1.bf16.msra.mxu0 %v469
  %2674 = vmatprep.subr.bf16.mxu0 0
  %2675 = vmatpush1.bf16.msra.mxu0 0
  %2676 = vmatprep.subr.bf16.mxu0 0
  %2677 = vmatpush1.bf16.msra.mxu0 0
  %2678 = vmatprep.subr.bf16.mxu0 0
  %2679 = vmatpush1.bf16.msra.mxu0 0
  %2680 = vmatprep.subr.bf16.mxu0 0
  %2681 = vmatpush1.bf16.msra.mxu0 0
  %2682 = vmatprep.subr.bf16.mxu0 0
  %2683 = vmatpush1.bf16.msra.mxu0 0
  %2684 = vmatprep.subr.bf16.mxu0 0
  %2685 = vmatpush1.bf16.msra.mxu0 0
  %2686 = vmatprep.subr.bf16.mxu0 0
  %2687 = vmatpush1.bf16.msra.mxu0 0
  %2688 = vmatprep.subr.bf16.mxu0 0
  %2689 = vmatpush1.bf16.msra.mxu0 0
  %2690 = vmatprep.subr.bf16.mxu0 0
  %2691 = vmatpush1.bf16.msra.mxu0 0
  %2692 = vmatprep.subr.bf16.mxu0 0
  %2693 = vmatpush1.bf16.msra.mxu0 0
  %2694 = vmatprep.subr.bf16.mxu0 0
  %2695 = vmatpush1.bf16.msra.mxu0 0
  %2696 = vmatprep.subr.bf16.mxu0 0
  %2697 = vmatpush1.bf16.msra.mxu0 0
  %2698 = vmatprep.subr.bf16.mxu0 0
  %2699 = vmatpush1.bf16.msra.mxu0 0
  %2700 = vmatprep.subr.bf16.mxu0 0
  %2701 = vmatpush1.bf16.msra.mxu0 0
  %2702 = vmatprep.mubr.bf16.mxu0 0
  %2703 = vmatmul.mubr.bf16.gmra.mrb[0].mxu0 %v2668
  %v2704 = vpop.f32.mrb[0].mxu0
  %v2705 = vadd.f32 %v445, %v2704
  %v2706 = vpop.f32.mrb[0].mxu0
  %v2707 = vadd.f32 %v449, %v2706
  %v2708 = vpop.f32.mrb[0].mxu0
  %v2709 = vpop.f32.mrb[0].mxu0
  %2710 = vdwg.mxu0
  %v2711 = vpack.c.bf16 %v2477, %v2477
  %2713 = vrot.lane.b32.xlu0 %v2711, 64
  %v2714 = vpop.permute.xlu0 %2713
  %v2716 = vsel %vm559, %v2714, 0
  %2718 = vmatprep.subr.bf16.mxu0 %v544
  %2719 = vmatpush1.bf16.msra.mxu0 %v543
  %2720 = vmatprep.subr.bf16.mxu0 %v546
  %2721 = vmatpush1.bf16.msra.mxu0 %v545
  %2722 = vmatprep.subr.bf16.mxu0 %v548
  %2723 = vmatpush1.bf16.msra.mxu0 %v547
  %2724 = vmatprep.subr.bf16.mxu0 %v550
  %2725 = vmatpush1.bf16.msra.mxu0 %v549
  %2726 = vmatprep.subr.bf16.mxu0 0
  %2727 = vmatpush1.bf16.msra.mxu0 0
  %2728 = vmatprep.subr.bf16.mxu0 0
  %2729 = vmatpush1.bf16.msra.mxu0 0
  %2730 = vmatprep.subr.bf16.mxu0 0
  %2731 = vmatpush1.bf16.msra.mxu0 0
  %2732 = vmatprep.subr.bf16.mxu0 0
  %2733 = vmatpush1.bf16.msra.mxu0 0
  %2734 = vmatprep.subr.bf16.mxu0 0
  %2735 = vmatpush1.bf16.msra.mxu0 0
  %2736 = vmatprep.subr.bf16.mxu0 0
  %2737 = vmatpush1.bf16.msra.mxu0 0
  %2738 = vmatprep.subr.bf16.mxu0 0
  %2739 = vmatpush1.bf16.msra.mxu0 0
  %2740 = vmatprep.subr.bf16.mxu0 0
  %2741 = vmatpush1.bf16.msra.mxu0 0
  %2742 = vmatprep.subr.bf16.mxu0 0
  %2743 = vmatpush1.bf16.msra.mxu0 0
  %2744 = vmatprep.subr.bf16.mxu0 0
  %2745 = vmatpush1.bf16.msra.mxu0 0
  %2746 = vmatprep.subr.bf16.mxu0 0
  %2747 = vmatpush1.bf16.msra.mxu0 0
  %2748 = vmatprep.subr.bf16.mxu0 0
  %2749 = vmatpush1.bf16.msra.mxu0 0
  %2750 = vmatprep.mubr.bf16.mxu0 0
  %2751 = vmatmul.mubr.bf16.gmra.mrb[0].mxu0 %v2716
  %v2752 = vpop.f32.mrb[0].mxu0
  %v2753 = vadd.f32 0.0, %v2752
  %v2754 = vpop.f32.mrb[0].mxu0
  %v2755 = vadd.f32 0.0, %v2754
  %v2756 = vpop.f32.mrb[0].mxu0
  %v2757 = vpop.f32.mrb[0].mxu0
  %2758 = vdwg.mxu0
  %v2759 = vadd.f32 %v2705, %v2753
  %v2760 = vadd.f32 %v2707, %v2755
  %v2761 = vtanh.pop %v2759
  %v2762 = vtanh.pop %v2760
  %v2763 = vxor.u32 %v2759, 2147483648
  %v2764 = vxor.u32 %v2760, 2147483648
  %v2765 = vmul.f32 %v2763, 1.442695
  %v2766 = vpow.pop %v2765
  %v2767 = vmul.f32 %v2764, 1.442695
  %v2768 = vpow.pop %v2767
  %v2769 = vadd.f32 %v2766, 1.0
  %v2770 = vadd.f32 %v2768, 1.0
  %v2771 = vrcp.pop %v2769
  %v2772 = vmul.f32 1.0, %v2771
  %v2773 = vrcp.pop %v2770
  %v2774 = vmul.f32 1.0, %v2773
  %v2775 = vsel %vm209, %v2761, %v2772
  %v2776 = vsel %vm210, %v2762, %v2774
  %v2777 = vmul.f32 %v2775, %v2475
  %v2778 = vmul.f32 %v2775, %v2776
  %2780 = vrot.lane.b32.xlu0 %v2778, 64
  %v2781 = vpop.permute.xlu0 %2780
  %v2783 = vadd.f32 %v2777, %v2781
  %v2784 = vtanh.pop %v2783
  %v2785 = vmul.f32 %v2776, %v2784
  %v2786 = vld [vmem:[%s10] sm:$0xff]
  %v2787 = vld [vmem:[%s10 + $0x8] sm:$0xff]
  %v2788 = vld [vmem:[%s10 + $0x10] sm:$0xff]
  %v2789 = vld [vmem:[%s10 + $0x18] sm:$0xff]
  %v2790 = vld [vmem:[%s10 + $0x20] sm:$0xff]
  %v2791 = vld [vmem:[%s10 + $0x28] sm:$0xff]
  %v2792 = vld [vmem:[%s10 + $0x30] sm:$0xff]
  %v2793 = vld [vmem:[%s10 + $0x38] sm:$0xff]
  %v2794 = vld [vmem:[%s11] sm:$0x1]
  %v2796 = vlaneseq
  %v2797 = vshrl.u32 %v2796, 7
  %v2798 = vsub.s32 0, %v2797
  %v2799 = vrot.slane %v2794, %v2798
  %2802 = vrot.lane.b32.xlu0 %v2785, 64
  %v2803 = vpop.permute.xlu0 %2802
  %v2804 = vsel %vm559, %v2803, 0
  %2806 = vmatprep.subr.mxu0 0.0
  %2807 = vmatpush1.msra.mxu0 %v2786
  %2808 = vmatprep.subr.mxu0 0.0
  %2809 = vmatpush1.msra.mxu0 %v2787
  %2810 = vmatprep.subr.mxu0 0.0
  %2811 = vmatpush1.msra.mxu0 %v2788
  %2812 = vmatprep.subr.mxu0 0.0
  %2813 = vmatpush1.msra.mxu0 %v2789
  %2814 = vmatprep.subr.mxu0 0.0
  %2815 = vmatpush1.msra.mxu0 %v2790
  %2816 = vmatprep.subr.mxu0 0.0
  %2817 = vmatpush1.msra.mxu0 %v2791
  %2818 = vmatprep.subr.mxu0 0.0
  %2819 = vmatpush1.msra.mxu0 %v2792
  %2820 = vmatprep.subr.mxu0 0.0
  %2821 = vmatpush1.msra.mxu0 %v2793
  %2822 = vmatprep.subr.mxu0 0.0
  %2823 = vmatpush1.msra.mxu0 0.0
  %2824 = vmatprep.subr.mxu0 0.0
  %2825 = vmatpush1.msra.mxu0 0.0
  %2826 = vmatprep.subr.mxu0 0.0
  %2827 = vmatpush1.msra.mxu0 0.0
  %2828 = vmatprep.subr.mxu0 0.0
  %2829 = vmatpush1.msra.mxu0 0.0
  %2830 = vmatprep.subr.mxu0 0.0
  %2831 = vmatpush1.msra.mxu0 0.0
  %2832 = vmatprep.subr.mxu0 0.0
  %2833 = vmatpush1.msra.mxu0 0.0
  %2834 = vmatprep.subr.mxu0 0.0
  %2835 = vmatpush1.msra.mxu0 0.0
  %2836 = vmatprep.subr.mxu0 0.0
  %2837 = vmatpush1.msra.mxu0 0.0
  %2838 = vmatprep.subr.mxu0 0.0
  %2839 = vmatpush1.msra.mxu0 0.0
  %2840 = vmatprep.subr.mxu0 0.0
  %2841 = vmatpush1.msra.mxu0 0.0
  %2842 = vmatprep.subr.mxu0 0.0
  %2843 = vmatpush1.msra.mxu0 0.0
  %2844 = vmatprep.subr.mxu0 0.0
  %2845 = vmatpush1.msra.mxu0 0.0
  %2846 = vmatprep.subr.mxu0 0.0
  %2847 = vmatpush1.msra.mxu0 0.0
  %2848 = vmatprep.subr.mxu0 0.0
  %2849 = vmatpush1.msra.mxu0 0.0
  %2850 = vmatprep.subr.mxu0 0.0
  %2851 = vmatpush1.msra.mxu0 0.0
  %2852 = vmatprep.subr.mxu0 0.0
  %2853 = vmatpush1.msra.mxu0 0.0
  %2854 = vmatprep.subr.mxu0 0.0
  %2855 = vmatpush1.msra.mxu0 0.0
  %2856 = vmatprep.subr.mxu0 0.0
  %2857 = vmatpush1.msra.mxu0 0.0
  %2858 = vmatprep.subr.mxu0 0.0
  %2859 = vmatpush1.msra.mxu0 0.0
  %2860 = vmatprep.subr.mxu0 0.0
  %2861 = vmatpush1.msra.mxu0 0.0
  %2862 = vmatprep.subr.mxu0 0.0
  %2863 = vmatpush1.msra.mxu0 0.0
  %2864 = vmatprep.subr.mxu0 0.0
  %2865 = vmatpush1.msra.mxu0 0.0
  %2866 = vmatprep.subr.mxu0 0.0
  %2867 = vmatpush1.msra.mxu0 0.0
  %2868 = vmatprep.subr.mxu0 0.0
  %2869 = vmatpush1.msra.mxu0 0.0
  %2870 = vmatprep.mubr.f32.mxu0 0.0
  %2871 = vmatmul.mubr.f32.gmra.mrb[0].mxu0 %v2804
  %v2872 = vpop.f32.mrb[0].mxu0
  %v2873 = vadd.f32 %v2799, %v2872
  %v2874 = vpop.f32.mrb[0].mxu0
  %2875 = vdwg.mxu0
  %vm2876 = vcmask 15360
  %v2877 = vsel %vm2876, %v2873, -inf
  %2878 = vmax.xlane.f32.xlu0 %v2877
  %v2879 = vpop.xlane.xlu0 %2878
  %v2880 = vsub.f32 %v2873, %v2879
  %v2881 = vmul.f32 %v2880, 1.442695
  %v2882 = vpow.pop %v2881
  %v2883 = vsel %vm2876, %v2882, 0.0
  %2884 = vadd.xlane.f32.xlu0 %v2883
  %v2885 = vpop.xlane.xlu0 %2884
  %v2886 = vlog2.pop %v2885
  %v2887 = vmul.f32 %v2886, 0.6931472
  %v2888 = vsub.f32 %v2880, %v2887
  %2889 = vst.msk [vmem:[%s13] sm:$0xff] %vm2876, %v2888
  // Predicated region
  $region50: #{lstm_encoder_forward.1} parent=0 // pred_check
    _
  $region51: #{lstm_encoder_forward.1} parent=0 // pred_check_branch
    %2891 = sbr.rel (0) target = $region53
  $region52: #{lstm_encoder_forward.1} parent=0 // pred_region
    _
  $region53: #{lstm_encoder_forward.1} parent=0 // pred_fallthru
    _
  // Predicated region
  $region54: #{lstm_encoder_forward.1} parent=0 // pred_check
    _
  $region55: #{lstm_encoder_forward.1} parent=0 // pred_check_branch
    %2893 = sbr.rel (0) target = $region57
  $region56: #{lstm_encoder_forward.1} parent=0 // pred_region
    _
  $region57: #{lstm_encoder_forward.1} parent=0 // pred_fallthru
    _
  // Predicated region
  $region58: #{lstm_encoder_forward.1} parent=0 // pred_check
    _
  $region59: #{lstm_encoder_forward.1} parent=0 // pred_check_branch
    %2895 = sbr.rel (0) target = $region61
  $region60: #{lstm_encoder_forward.1} parent=0 // pred_region
    _
  $region61: #{lstm_encoder_forward.1} parent=0 // pred_fallthru
    _
  // Predicated region
  $region62: #{lstm_encoder_forward.1} parent=0 // pred_check
    _
  $region63: #{lstm_encoder_forward.1} parent=0 // pred_check_branch
    %2897 = sbr.rel (0) target = $region65
  $region64: #{lstm_encoder_forward.1} parent=0 // pred_region
    _
  $region65: #{lstm_encoder_forward.1} parent=0 // pred_fallthru
    _

</llo_original>
